<compile_context>
chip_gen: v5e
topology: v5e:2x2
jax: 0.10.0
libtpu: 0.0.40
codegen_flags: <defaults>
</compile_context>

<pallas_src>
import jax
import jax.numpy as jnp
from jax import lax
from jax.experimental import pallas as pl
from jax.experimental.pallas import tpu as pltpu

IMG_SHAPE = (1, 28, 28)
OUT_DIM = IMG_SHAPE[0] * IMG_SHAPE[1] * IMG_SHAPE[2]      # 784
OUT_PAD = ((OUT_DIM + 127) // 128) * 128                   # 896, lane-dense
BN_EPS = 0.8                                               # BatchNorm1d(n, 0.8)


def generator_kernel(x_ref, w1_ref, b1_ref,
                     w2_ref, b2_ref, g2_ref, be2_ref,
                     w3_ref, b3_ref, g3_ref, be3_ref,
                     w4_ref, b4_ref, g4_ref, be4_ref,
                     w5_ref, b5_ref, o_ref):
    """Fused 5-layer MLP generator: matmuls on the MXU (bf16 in, f32 acc),
    BatchNorm (training mode, batch stats) + LeakyReLU(0.2) on the VPU,
    tanh on the EUP.  Everything resident in VMEM."""

    def leaky(h):
        return jnp.where(h > 0, h, 0.2 * h)

    def batchnorm(h, gamma, beta):
        # Training-mode BatchNorm1d: batch statistics, biased variance, eps=0.8.
        mean = jnp.mean(h, axis=0, keepdims=True)
        var = jnp.mean(jnp.square(h - mean), axis=0, keepdims=True)
        inv = lax.rsqrt(var + BN_EPS)
        return (h - mean) * inv * gamma + beta

    def matmul(h, w_ref):
        # bf16 x bf16 -> f32 accumulation on the MXU.
        return jnp.dot(h.astype(jnp.bfloat16), w_ref[...],
                       preferred_element_type=jnp.float32)

    x = x_ref[...]                                               # (B, noise) bf16

    h = leaky(jnp.dot(x, w1_ref[...],
                      preferred_element_type=jnp.float32) + b1_ref[...])
    h = leaky(batchnorm(matmul(h, w2_ref) + b2_ref[...],
                        g2_ref[...], be2_ref[...]))
    h = leaky(batchnorm(matmul(h, w3_ref) + b3_ref[...],
                        g3_ref[...], be3_ref[...]))
    h = leaky(batchnorm(matmul(h, w4_ref) + b4_ref[...],
                        g4_ref[...], be4_ref[...]))
    o_ref[...] = jnp.tanh(matmul(h, w5_ref) + b5_ref[...])       # (B, OUT_PAD) f32


def generator_forward(z, params):
    """z: (B, noise_dim) float32.  Returns (B, 1, 28, 28) float32."""
    (w1, b1), (w2, b2, g2, be2), (w3, b3, g3, be3), (w4, b4, g4, be4), (w5, b5) = params
    B, noise_dim = z.shape

    # Pad the last layer to a lane-dense (multiple-of-128) output width.
    pad_n = OUT_PAD - w5.shape[1]
    w5p = jnp.pad(w5, ((0, 0), (0, pad_n)))
    b5p = jnp.pad(b5, ((0, 0), (0, pad_n)))

    bf16 = jnp.bfloat16
    inputs = (
        z.astype(bf16),
        w1.astype(bf16), b1,
        w2.astype(bf16), b2, g2, be2,
        w3.astype(bf16), b3, g3, be3,
        w4.astype(bf16), b4, g4, be4,
        w5p.astype(bf16), b5p,
    )

    def nbytes(a):
        return a.size * a.dtype.itemsize

    in_bytes = sum(nbytes(a) for a in inputs)
    out_bytes = B * OUT_PAD * 4
    # Actual buffers (~few MB) x3 for compiler scratch/temps + 4 MiB headroom,
    # floored at 16 MiB, capped at 48 MiB (fits v7x's 64 MiB physical VMEM).
    vmem_limit = int(min(max(3 * (in_bytes + out_bytes) + (4 << 20), 16 << 20),
                         48 << 20))

    flops = 2 * B * (noise_dim * 128 + 128 * 256 + 256 * 512
                     + 512 * 1024 + 1024 * OUT_PAD)
    transcendentals = B * OUT_PAD + (256 + 512 + 1024)   # tanh + BN rsqrt
    cost = pl.CostEstimate(flops=flops, transcendentals=transcendentals,
                           bytes_accessed=in_bytes + out_bytes)

    vmem = pl.BlockSpec(memory_space=pltpu.MemorySpace.VMEM)
    out = pl.pallas_call(
        generator_kernel,
        out_shape=jax.ShapeDtypeStruct((B, OUT_PAD), jnp.float32),
        in_specs=[vmem] * len(inputs),
        out_specs=vmem,
        compiler_params=pltpu.CompilerParams(vmem_limit_bytes=vmem_limit),
        cost_estimate=cost,
    )(*inputs)

    return out[:, :OUT_DIM].reshape(B, *IMG_SHAPE)


def init_params(key, noise_dim):
    """Shapes mirror the torch module.  Linear weights stored as (in, out)."""
    dims = [noise_dim, 128, 256, 512, 1024, OUT_DIM]
    ks = jax.random.split(key, 10)

    def linear(kw, kb, fan_in, fan_out):
        bound = 1.0 / (fan_in ** 0.5)
        w = jax.random.uniform(kw, (fan_in, fan_out), jnp.float32, -bound, bound)
        b = jax.random.uniform(kb, (1, fan_out), jnp.float32, -bound, bound)
        return w, b

    def bn(n):  # BatchNorm1d affine params at init: gamma=1, beta=0
        return jnp.ones((1, n), jnp.float32), jnp.zeros((1, n), jnp.float32)

    w1, b1 = linear(ks[0], ks[1], dims[0], dims[1])
    w2, b2 = linear(ks[2], ks[3], dims[1], dims[2])
    w3, b3 = linear(ks[4], ks[5], dims[2], dims[3])
    w4, b4 = linear(ks[6], ks[7], dims[3], dims[4])
    w5, b5 = linear(ks[8], ks[9], dims[4], dims[5])
    g2, be2 = bn(dims[2])
    g3, be3 = bn(dims[3])
    g4, be4 = bn(dims[4])
    return ((w1, b1), (w2, b2, g2, be2), (w3, b3, g3, be3),
            (w4, b4, g4, be4), (w5, b5))


def reference_forward(z, params, *, bf16_matmuls):
    """Pure-JAX reference.  bf16_matmuls=True mirrors the kernel's MXU dtype,
    False is the exact f32 torch semantics."""
    (w1, b1), (w2, b2, g2, be2), (w3, b3, g3, be3), (w4, b4, g4, be4), (w5, b5) = params

    def leaky(h):
        return jnp.where(h > 0, h, 0.2 * h)

    def bn(h, gamma, beta):
        mean = jnp.mean(h, axis=0, keepdims=True)
        var = jnp.mean(jnp.square(h - mean), axis=0, keepdims=True)
        return (h - mean) / jnp.sqrt(var + BN_EPS) * gamma + beta

    def mm(h, w):
        if bf16_matmuls:
            return jnp.dot(h.astype(jnp.bfloat16), w.astype(jnp.bfloat16),
                           preferred_element_type=jnp.float32)
        return jnp.dot(h, w)

    h = leaky(mm(z, w1) + b1)
    h = leaky(bn(mm(h, w2) + b2, g2, be2))
    h = leaky(bn(mm(h, w3) + b3, g3, be3))
    h = leaky(bn(mm(h, w4) + b4, g4, be4))
    out = jnp.tanh(mm(h, w5) + b5)
    return out.reshape(z.shape[0], *IMG_SHAPE)


if __name__ == "__main__":
    key = jax.random.PRNGKey(0)
    k_z, k_p = jax.random.split(key)

    # Small shapes consistent with the module: latent noise_dim=100,
    # output fixed at 1x28x28 by the forward's view().
    B, noise_dim = 2, 100
    z = jax.random.normal(k_z, (B, noise_dim), dtype=jnp.float32)
    params = init_params(k_p, noise_dim)

    out = generator_forward(z, params)
    jax.block_until_ready(out)
    assert out.shape == (B, *IMG_SHAPE), out.shape

    # Tight check against a reference that mirrors the kernel's bf16 MXU inputs.
    ref_bf16 = reference_forward(z, params, bf16_matmuls=True)
    assert jnp.allclose(out, ref_bf16, atol=5e-3, rtol=5e-3)
    # Loose check against the exact f32 torch semantics (bf16 rounding slack).
    ref_f32 = reference_forward(z, params, bf16_matmuls=False)
    assert jnp.allclose(out, ref_f32, atol=1e-1)

    print("KERNEL_OK")
</pallas_src>

<mosaic_0001>
module attributes {stable_mosaic.version = 11 : i64} {
  func.func @generator_kernel(%arg0: memref<2x100xbf16, #tpu.memory_space<vmem>>, %arg1: memref<100x128xbf16, #tpu.memory_space<vmem>>, %arg2: memref<1x128xf32, #tpu.memory_space<vmem>>, %arg3: memref<128x256xbf16, #tpu.memory_space<vmem>>, %arg4: memref<1x256xf32, #tpu.memory_space<vmem>>, %arg5: memref<1x256xf32, #tpu.memory_space<vmem>>, %arg6: memref<1x256xf32, #tpu.memory_space<vmem>>, %arg7: memref<256x512xbf16, #tpu.memory_space<vmem>>, %arg8: memref<1x512xf32, #tpu.memory_space<vmem>>, %arg9: memref<1x512xf32, #tpu.memory_space<vmem>>, %arg10: memref<1x512xf32, #tpu.memory_space<vmem>>, %arg11: memref<512x1024xbf16, #tpu.memory_space<vmem>>, %arg12: memref<1x1024xf32, #tpu.memory_space<vmem>>, %arg13: memref<1x1024xf32, #tpu.memory_space<vmem>>, %arg14: memref<1x1024xf32, #tpu.memory_space<vmem>>, %arg15: memref<1024x896xbf16, #tpu.memory_space<vmem>>, %arg16: memref<1x896xf32, #tpu.memory_space<vmem>>, %arg17: memref<2x896xf32, #tpu.memory_space<vmem>>) attributes {dimension_semantics = [], scalar_prefetch = 0 : i64, scratch_operands = 0 : i64, tpu.core_type = #tpu.core_type<tc>} {
    %c0 = arith.constant 0 : index
    %c0_0 = arith.constant 0 : index
    %0 = vector.load %arg0[%c0, %c0_0] : memref<2x100xbf16, #tpu.memory_space<vmem>>, vector<2x100xbf16>
    %c0_1 = arith.constant 0 : index
    %c0_2 = arith.constant 0 : index
    %1 = vector.load %arg1[%c0_1, %c0_2] : memref<100x128xbf16, #tpu.memory_space<vmem>>, vector<100x128xbf16>
    %cst = arith.constant dense<0.000000e+00> : vector<2x128xf32>
    %2 = tpu.matmul %0, %1, %cst {dimension_numbers = #tpu.dot_dimension_numbers<[1], [0], [0], [1], [0, 0, 1, 1], [], []>} : vector<2x100xbf16>, vector<100x128xbf16>, vector<2x128xf32> -> vector<2x128xf32>
    %c0_3 = arith.constant 0 : index
    %c0_4 = arith.constant 0 : index
    %3 = vector.load %arg2[%c0_3, %c0_4] : memref<1x128xf32, #tpu.memory_space<vmem>>, vector<1x128xf32>
    %4 = vector.broadcast %3 : vector<1x128xf32> to vector<2x128xf32>
    %5 = arith.addf %2, %4 : vector<2x128xf32>
    %cst_5 = arith.constant 0.000000e+00 : f32
    %6 = vector.broadcast %cst_5 : f32 to vector<2x128xf32>
    %7 = arith.cmpf ogt, %5, %6 : vector<2x128xf32>
    %cst_6 = arith.constant 2.000000e-01 : f32
    %8 = vector.broadcast %cst_6 : f32 to vector<2x128xf32>
    %9 = arith.mulf %8, %5 : vector<2x128xf32>
    %10 = arith.select %7, %5, %9 : vector<2x128xi1>, vector<2x128xf32>
    %11 = arith.truncf %10 : vector<2x128xf32> to vector<2x128xbf16>
    %c0_7 = arith.constant 0 : index
    %c0_8 = arith.constant 0 : index
    %12 = vector.load %arg3[%c0_7, %c0_8] : memref<128x256xbf16, #tpu.memory_space<vmem>>, vector<128x256xbf16>
    %cst_9 = arith.constant dense<0.000000e+00> : vector<2x256xf32>
    %13 = tpu.matmul %11, %12, %cst_9 {dimension_numbers = #tpu.dot_dimension_numbers<[1], [0], [0], [1], [0, 0, 1, 1], [], []>} : vector<2x128xbf16>, vector<128x256xbf16>, vector<2x256xf32> -> vector<2x256xf32>
    %c0_10 = arith.constant 0 : index
    %c0_11 = arith.constant 0 : index
    %14 = vector.load %arg4[%c0_10, %c0_11] : memref<1x256xf32, #tpu.memory_space<vmem>>, vector<1x256xf32>
    %15 = vector.broadcast %14 : vector<1x256xf32> to vector<2x256xf32>
    %16 = arith.addf %13, %15 : vector<2x256xf32>
    %c0_12 = arith.constant 0 : index
    %c0_13 = arith.constant 0 : index
    %17 = vector.load %arg5[%c0_12, %c0_13] : memref<1x256xf32, #tpu.memory_space<vmem>>, vector<1x256xf32>
    %c0_14 = arith.constant 0 : index
    %c0_15 = arith.constant 0 : index
    %18 = vector.load %arg6[%c0_14, %c0_15] : memref<1x256xf32, #tpu.memory_space<vmem>>, vector<1x256xf32>
    %cst_16 = arith.constant dense<0.000000e+00> : vector<256xf32>
    %19 = vector.multi_reduction <add>, %16, %cst_16 [0] : vector<2x256xf32> to vector<256xf32>
    %20 = vector.shape_cast %19 : vector<256xf32> to vector<1x256xf32>
    %cst_17 = arith.constant 2.000000e+00 : f32
    %21 = vector.broadcast %cst_17 : f32 to vector<1x256xf32>
    %22 = arith.divf %20, %21 : vector<1x256xf32>
    %23 = vector.broadcast %22 : vector<1x256xf32> to vector<2x256xf32>
    %24 = arith.subf %16, %23 : vector<2x256xf32>
    %25 = arith.mulf %24, %24 : vector<2x256xf32>
    %cst_18 = arith.constant dense<0.000000e+00> : vector<256xf32>
    %26 = vector.multi_reduction <add>, %25, %cst_18 [0] : vector<2x256xf32> to vector<256xf32>
    %27 = vector.shape_cast %26 : vector<256xf32> to vector<1x256xf32>
    %cst_19 = arith.constant 2.000000e+00 : f32
    %28 = vector.broadcast %cst_19 : f32 to vector<1x256xf32>
    %29 = arith.divf %27, %28 : vector<1x256xf32>
    %cst_20 = arith.constant 8.000000e-01 : f32
    %30 = vector.broadcast %cst_20 : f32 to vector<1x256xf32>
    %31 = arith.addf %29, %30 : vector<1x256xf32>
    %32 = math.rsqrt %31 : vector<1x256xf32>
    %33 = vector.broadcast %22 : vector<1x256xf32> to vector<2x256xf32>
    %34 = arith.subf %16, %33 : vector<2x256xf32>
    %35 = vector.broadcast %32 : vector<1x256xf32> to vector<2x256xf32>
    %36 = arith.mulf %34, %35 : vector<2x256xf32>
    %37 = vector.broadcast %17 : vector<1x256xf32> to vector<2x256xf32>
    %38 = arith.mulf %36, %37 : vector<2x256xf32>
    %39 = vector.broadcast %18 : vector<1x256xf32> to vector<2x256xf32>
    %40 = arith.addf %38, %39 : vector<2x256xf32>
    %cst_21 = arith.constant 0.000000e+00 : f32
    %41 = vector.broadcast %cst_21 : f32 to vector<2x256xf32>
    %42 = arith.cmpf ogt, %40, %41 : vector<2x256xf32>
    %cst_22 = arith.constant 2.000000e-01 : f32
    %43 = vector.broadcast %cst_22 : f32 to vector<2x256xf32>
    %44 = arith.mulf %43, %40 : vector<2x256xf32>
    %45 = arith.select %42, %40, %44 : vector<2x256xi1>, vector<2x256xf32>
    %46 = arith.truncf %45 : vector<2x256xf32> to vector<2x256xbf16>
    %c0_23 = arith.constant 0 : index
    %c0_24 = arith.constant 0 : index
    %47 = vector.load %arg7[%c0_23, %c0_24] : memref<256x512xbf16, #tpu.memory_space<vmem>>, vector<256x512xbf16>
    %cst_25 = arith.constant dense<0.000000e+00> : vector<2x512xf32>
    %48 = tpu.matmul %46, %47, %cst_25 {dimension_numbers = #tpu.dot_dimension_numbers<[1], [0], [0], [1], [0, 0, 1, 1], [], []>} : vector<2x256xbf16>, vector<256x512xbf16>, vector<2x512xf32> -> vector<2x512xf32>
    %c0_26 = arith.constant 0 : index
    %c0_27 = arith.constant 0 : index
    %49 = vector.load %arg8[%c0_26, %c0_27] : memref<1x512xf32, #tpu.memory_space<vmem>>, vector<1x512xf32>
    %50 = vector.broadcast %49 : vector<1x512xf32> to vector<2x512xf32>
    %51 = arith.addf %48, %50 : vector<2x512xf32>
    %c0_28 = arith.constant 0 : index
    %c0_29 = arith.constant 0 : index
    %52 = vector.load %arg9[%c0_28, %c0_29] : memref<1x512xf32, #tpu.memory_space<vmem>>, vector<1x512xf32>
    %c0_30 = arith.constant 0 : index
    %c0_31 = arith.constant 0 : index
    %53 = vector.load %arg10[%c0_30, %c0_31] : memref<1x512xf32, #tpu.memory_space<vmem>>, vector<1x512xf32>
    %cst_32 = arith.constant dense<0.000000e+00> : vector<512xf32>
    %54 = vector.multi_reduction <add>, %51, %cst_32 [0] : vector<2x512xf32> to vector<512xf32>
    %55 = vector.shape_cast %54 : vector<512xf32> to vector<1x512xf32>
    %cst_33 = arith.constant 2.000000e+00 : f32
    %56 = vector.broadcast %cst_33 : f32 to vector<1x512xf32>
    %57 = arith.divf %55, %56 : vector<1x512xf32>
    %58 = vector.broadcast %57 : vector<1x512xf32> to vector<2x512xf32>
    %59 = arith.subf %51, %58 : vector<2x512xf32>
    %60 = arith.mulf %59, %59 : vector<2x512xf32>
    %cst_34 = arith.constant dense<0.000000e+00> : vector<512xf32>
    %61 = vector.multi_reduction <add>, %60, %cst_34 [0] : vector<2x512xf32> to vector<512xf32>
    %62 = vector.shape_cast %61 : vector<512xf32> to vector<1x512xf32>
    %cst_35 = arith.constant 2.000000e+00 : f32
    %63 = vector.broadcast %cst_35 : f32 to vector<1x512xf32>
    %64 = arith.divf %62, %63 : vector<1x512xf32>
    %cst_36 = arith.constant 8.000000e-01 : f32
    %65 = vector.broadcast %cst_36 : f32 to vector<1x512xf32>
    %66 = arith.addf %64, %65 : vector<1x512xf32>
    %67 = math.rsqrt %66 : vector<1x512xf32>
    %68 = vector.broadcast %57 : vector<1x512xf32> to vector<2x512xf32>
    %69 = arith.subf %51, %68 : vector<2x512xf32>
    %70 = vector.broadcast %67 : vector<1x512xf32> to vector<2x512xf32>
    %71 = arith.mulf %69, %70 : vector<2x512xf32>
    %72 = vector.broadcast %52 : vector<1x512xf32> to vector<2x512xf32>
    %73 = arith.mulf %71, %72 : vector<2x512xf32>
    %74 = vector.broadcast %53 : vector<1x512xf32> to vector<2x512xf32>
    %75 = arith.addf %73, %74 : vector<2x512xf32>
    %cst_37 = arith.constant 0.000000e+00 : f32
    %76 = vector.broadcast %cst_37 : f32 to vector<2x512xf32>
    %77 = arith.cmpf ogt, %75, %76 : vector<2x512xf32>
    %cst_38 = arith.constant 2.000000e-01 : f32
    %78 = vector.broadcast %cst_38 : f32 to vector<2x512xf32>
    %79 = arith.mulf %78, %75 : vector<2x512xf32>
    %80 = arith.select %77, %75, %79 : vector<2x512xi1>, vector<2x512xf32>
    %81 = arith.truncf %80 : vector<2x512xf32> to vector<2x512xbf16>
    %c0_39 = arith.constant 0 : index
    %c0_40 = arith.constant 0 : index
    %82 = vector.load %arg11[%c0_39, %c0_40] : memref<512x1024xbf16, #tpu.memory_space<vmem>>, vector<512x1024xbf16>
    %cst_41 = arith.constant dense<0.000000e+00> : vector<2x1024xf32>
    %83 = tpu.matmul %81, %82, %cst_41 {dimension_numbers = #tpu.dot_dimension_numbers<[1], [0], [0], [1], [0, 0, 1, 1], [], []>} : vector<2x512xbf16>, vector<512x1024xbf16>, vector<2x1024xf32> -> vector<2x1024xf32>
    %c0_42 = arith.constant 0 : index
    %c0_43 = arith.constant 0 : index
    %84 = vector.load %arg12[%c0_42, %c0_43] : memref<1x1024xf32, #tpu.memory_space<vmem>>, vector<1x1024xf32>
    %85 = vector.broadcast %84 : vector<1x1024xf32> to vector<2x1024xf32>
    %86 = arith.addf %83, %85 : vector<2x1024xf32>
    %c0_44 = arith.constant 0 : index
    %c0_45 = arith.constant 0 : index
    %87 = vector.load %arg13[%c0_44, %c0_45] : memref<1x1024xf32, #tpu.memory_space<vmem>>, vector<1x1024xf32>
    %c0_46 = arith.constant 0 : index
    %c0_47 = arith.constant 0 : index
    %88 = vector.load %arg14[%c0_46, %c0_47] : memref<1x1024xf32, #tpu.memory_space<vmem>>, vector<1x1024xf32>
    %cst_48 = arith.constant dense<0.000000e+00> : vector<1024xf32>
    %89 = vector.multi_reduction <add>, %86, %cst_48 [0] : vector<2x1024xf32> to vector<1024xf32>
    %90 = vector.shape_cast %89 : vector<1024xf32> to vector<1x1024xf32>
    %cst_49 = arith.constant 2.000000e+00 : f32
    %91 = vector.broadcast %cst_49 : f32 to vector<1x1024xf32>
    %92 = arith.divf %90, %91 : vector<1x1024xf32>
    %93 = vector.broadcast %92 : vector<1x1024xf32> to vector<2x1024xf32>
    %94 = arith.subf %86, %93 : vector<2x1024xf32>
    %95 = arith.mulf %94, %94 : vector<2x1024xf32>
    %cst_50 = arith.constant dense<0.000000e+00> : vector<1024xf32>
    %96 = vector.multi_reduction <add>, %95, %cst_50 [0] : vector<2x1024xf32> to vector<1024xf32>
    %97 = vector.shape_cast %96 : vector<1024xf32> to vector<1x1024xf32>
    %cst_51 = arith.constant 2.000000e+00 : f32
    %98 = vector.broadcast %cst_51 : f32 to vector<1x1024xf32>
    %99 = arith.divf %97, %98 : vector<1x1024xf32>
    %cst_52 = arith.constant 8.000000e-01 : f32
    %100 = vector.broadcast %cst_52 : f32 to vector<1x1024xf32>
    %101 = arith.addf %99, %100 : vector<1x1024xf32>
    %102 = math.rsqrt %101 : vector<1x1024xf32>
    %103 = vector.broadcast %92 : vector<1x1024xf32> to vector<2x1024xf32>
    %104 = arith.subf %86, %103 : vector<2x1024xf32>
    %105 = vector.broadcast %102 : vector<1x1024xf32> to vector<2x1024xf32>
    %106 = arith.mulf %104, %105 : vector<2x1024xf32>
    %107 = vector.broadcast %87 : vector<1x1024xf32> to vector<2x1024xf32>
    %108 = arith.mulf %106, %107 : vector<2x1024xf32>
    %109 = vector.broadcast %88 : vector<1x1024xf32> to vector<2x1024xf32>
    %110 = arith.addf %108, %109 : vector<2x1024xf32>
    %cst_53 = arith.constant 0.000000e+00 : f32
    %111 = vector.broadcast %cst_53 : f32 to vector<2x1024xf32>
    %112 = arith.cmpf ogt, %110, %111 : vector<2x1024xf32>
    %cst_54 = arith.constant 2.000000e-01 : f32
    %113 = vector.broadcast %cst_54 : f32 to vector<2x1024xf32>
    %114 = arith.mulf %113, %110 : vector<2x1024xf32>
    %115 = arith.select %112, %110, %114 : vector<2x1024xi1>, vector<2x1024xf32>
    %116 = arith.truncf %115 : vector<2x1024xf32> to vector<2x1024xbf16>
    %c0_55 = arith.constant 0 : index
    %c0_56 = arith.constant 0 : index
    %117 = vector.load %arg15[%c0_55, %c0_56] : memref<1024x896xbf16, #tpu.memory_space<vmem>>, vector<1024x896xbf16>
    %cst_57 = arith.constant dense<0.000000e+00> : vector<2x896xf32>
    %118 = tpu.matmul %116, %117, %cst_57 {dimension_numbers = #tpu.dot_dimension_numbers<[1], [0], [0], [1], [0, 0, 1, 1], [], []>} : vector<2x1024xbf16>, vector<1024x896xbf16>, vector<2x896xf32> -> vector<2x896xf32>
    %c0_58 = arith.constant 0 : index
    %c0_59 = arith.constant 0 : index
    %119 = vector.load %arg16[%c0_58, %c0_59] : memref<1x896xf32, #tpu.memory_space<vmem>>, vector<1x896xf32>
    %120 = vector.broadcast %119 : vector<1x896xf32> to vector<2x896xf32>
    %121 = arith.addf %118, %120 : vector<2x896xf32>
    %122 = math.tanh %121 : vector<2x896xf32>
    %c0_60 = arith.constant 0 : index
    %c0_61 = arith.constant 0 : index
    %123 = vector.load %arg17[%c0_60, %c0_61] : memref<2x896xf32, #tpu.memory_space<vmem>>, vector<2x896xf32>
    tpu.vector_store %arg17[%c0_60, %c0_61], %122 {strides = array<i32>} : memref<2x896xf32, #tpu.memory_space<vmem>>, vector<2x896xf32>,
    return
  }
}

</mosaic_0001>

<llo_original>
// kernel: tpu_custom_call.1
$region0: #{tpu_custom_call.1}
  #allocation0 [shape = 'u32[]', space=smem, size = 0x4, offset = 0x4, fixed_abs, tag = 'smem constant byte address 0x4 - core index']
  #allocation1 [shape = 'u32[72,128]{1,0:T(1,128)}', space=vmem, size = 0x9000, scoped, tag = 'internal scratch']
  %s0 = inlined_call_operand.hbm [shape: bf16[2,100], index: 0, kind: input, shape index: {}]
  %s1 = inlined_call_operand.hbm [shape: bf16[100,128], index: 1, kind: input, shape index: {}]
  %s2 = inlined_call_operand.hbm [shape: f32[1,128], index: 2, kind: input, shape index: {}]
  %s3 = inlined_call_operand.hbm [shape: bf16[128,256], index: 3, kind: input, shape index: {}]
  %s4 = inlined_call_operand.hbm [shape: f32[1,256], index: 4, kind: input, shape index: {}]
  %s5 = inlined_call_operand.hbm [shape: f32[1,256], index: 5, kind: input, shape index: {}]
  %s6 = inlined_call_operand.hbm [shape: f32[1,256], index: 6, kind: input, shape index: {}]
  %s7 = inlined_call_operand.hbm [shape: bf16[256,512], index: 7, kind: input, shape index: {}]
  %s8 = inlined_call_operand.hbm [shape: f32[1,512], index: 8, kind: input, shape index: {}]
  %s9 = inlined_call_operand.hbm [shape: f32[1,512], index: 9, kind: input, shape index: {}]
  %s10 = inlined_call_operand.hbm [shape: f32[1,512], index: 10, kind: input, shape index: {}]
  %s11 = inlined_call_operand.hbm [shape: bf16[512,1024], index: 11, kind: input, shape index: {}]
  %s12 = inlined_call_operand.hbm [shape: f32[1,1024], index: 12, kind: input, shape index: {}]
  %s13 = inlined_call_operand.hbm [shape: f32[1,1024], index: 13, kind: input, shape index: {}]
  %s14 = inlined_call_operand.hbm [shape: f32[1,1024], index: 14, kind: input, shape index: {}]
  %s15 = inlined_call_operand.hbm [shape: bf16[1024,896], index: 15, kind: input, shape index: {}]
  %s16 = inlined_call_operand.hbm [shape: f32[1,896], index: 16, kind: input, shape index: {}]
  %s17 = inlined_call_operand.hbm [shape: f32[2,896], index: 17, kind: output, shape index: {}]
  %s18 = sld [smem:[#allocation0]]
  $region146: #{tpu_custom_call.1} parent=0
    _
  %s20 = ssub.s32 1, %s18
  %s21 = scalar_select 0, %s20, %s18
  $region1: #{tpu_custom_call.1} parent=0
    #allocation2 [shape = 'u8[512]{0}', space=vmem, size = 0x400, scoped, tag = 'input window, operand 0, single buffered']
    #allocation3 [shape = 's32[1]{0}', space=sflag, size = 0x4, scoped, tag = 'scoped memory for tpu_custom_call.1']
    #allocation4 [shape = 's32[1]{0}', space=sflag, size = 0x4, scoped, tag = 'scoped memory for tpu_custom_call.1']
    #allocation5 [shape = 'u8[26624]{0}', space=vmem, size = 0x6800, scoped, tag = 'input window, operand 1, single buffered']
    #allocation6 [shape = 's32[1]{0}', space=sflag, size = 0x4, scoped, tag = 'scoped memory for tpu_custom_call.1']
    #allocation7 [shape = 'u8[512]{0}', space=vmem, size = 0x400, scoped, tag = 'input window, operand 2, single buffered']
    #allocation8 [shape = 'u8[65536]{0}', space=vmem, size = 0x10000, scoped, tag = 'input window, operand 3, single buffered']
    #allocation9 [shape = 's32[1]{0}', space=sflag, size = 0x4, scoped, tag = 'scoped memory for tpu_custom_call.1']
    #allocation10 [shape = 'u8[1024]{0}', space=vmem, size = 0x400, scoped, tag = 'input window, operand 4, single buffered']
    #allocation11 [shape = 'u8[1024]{0}', space=vmem, size = 0x400, scoped, tag = 'input window, operand 5, single buffered']
    #allocation12 [shape = 's32[1]{0}', space=sflag, size = 0x4, scoped, tag = 'scoped memory for tpu_custom_call.1']
    #allocation13 [shape = 'u8[1024]{0}', space=vmem, size = 0x400, scoped, tag = 'input window, operand 6, single buffered']
    #allocation14 [shape = 'u8[262144]{0}', space=vmem, size = 0x40000, scoped, tag = 'input window, operand 7, single buffered']
    #allocation15 [shape = 's32[1]{0}', space=sflag, size = 0x4, scoped, tag = 'scoped memory for tpu_custom_call.1']
    #allocation16 [shape = 'u8[2048]{0}', space=vmem, size = 0x800, scoped, tag = 'input window, operand 8, single buffered']
    #allocation17 [shape = 'u8[2048]{0}', space=vmem, size = 0x800, scoped, tag = 'input window, operand 9, single buffered']
    #allocation18 [shape = 's32[1]{0}', space=sflag, size = 0x4, scoped, tag = 'scoped memory for tpu_custom_call.1']
    #allocation19 [shape = 'u8[2048]{0}', space=vmem, size = 0x800, scoped, tag = 'input window, operand 10, single buffered']
    #allocation20 [shape = 'u8[1048576]{0}', space=vmem, size = 0x100000, scoped, tag = 'input window, operand 11, single buffered']
    #allocation21 [shape = 's32[1]{0}', space=sflag, size = 0x4, scoped, tag = 'scoped memory for tpu_custom_call.1']
    #allocation22 [shape = 'u8[4096]{0}', space=vmem, size = 0x1000, scoped, tag = 'input window, operand 12, single buffered']
    #allocation23 [shape = 'u8[4096]{0}', space=vmem, size = 0x1000, scoped, tag = 'input window, operand 13, single buffered']
    #allocation24 [shape = 's32[1]{0}', space=sflag, size = 0x4, scoped, tag = 'scoped memory for tpu_custom_call.1']
    #allocation25 [shape = 'u8[4096]{0}', space=vmem, size = 0x1000, scoped, tag = 'input window, operand 14, single buffered']
    #allocation26 [shape = 'u8[1835008]{0}', space=vmem, size = 0x1c0000, scoped, tag = 'input window, operand 15, single buffered']
    #allocation27 [shape = 's32[1]{0}', space=sflag, size = 0x4, scoped, tag = 'scoped memory for tpu_custom_call.1']
    #allocation28 [shape = 'u8[3584]{0}', space=vmem, size = 0x1000, scoped, tag = 'input window, operand 16, single buffered']
    #allocation29 [shape = 'u8[7168]{0}', space=vmem, size = 0x1c00, scoped, tag = 'output window, operand 0, single buffered']
    %22 = vsyncpa [#allocation3], 0
    %23 = vsyncpa [#allocation6], 0
    %24 = vsyncpa [#allocation9], 0
    %25 = vsyncpa [#allocation12], 0
    %26 = vsyncpa [#allocation15], 0
    %27 = vsyncpa [#allocation18], 0
    %28 = vsyncpa [#allocation21], 0
    %29 = vsyncpa [#allocation24], 0
    %30 = vsyncpa [#allocation27], 0
    %31 = vsyncpa [#allocation4], 0
    // Predicated region
    $region2: #{tpu_custom_call.1} parent=1 // pred_check
      _
    $region3: #{tpu_custom_call.1} parent=1 // pred_check_branch
      %33 = sbr.rel (0) target = $region5
    $region4: #{tpu_custom_call.1} parent=1 // pred_region
      %35 = vsyncadd [#allocation3], 0
      %s37 = sshll.u32 %s0, 4
      %s38 = int_to_ptr.hbm [resolvable:$true] %s37
      %s39 = sshll.u32 [#allocation2], 4
      %s40 = int_to_ptr.vmem [resolvable:$true] %s39
      %42 = dma.hbm_to_vmem [thread:$0]  %s38, 16, %s40, [#allocation3]
    $region5: #{tpu_custom_call.1} parent=1 // pred_fallthru
      _
    // Predicated region
    $region6: #{tpu_custom_call.1} parent=1 // pred_check
      _
    $region7: #{tpu_custom_call.1} parent=1 // pred_check_branch
      %44 = sbr.rel (0) target = $region9
    $region8: #{tpu_custom_call.1} parent=1 // pred_region
      %46 = vsyncadd [#allocation6], 0
      %s47 = sshll.u32 %s1, 4
      %s48 = int_to_ptr.hbm [resolvable:$true] %s47
      %s49 = sshll.u32 [#allocation5], 4
      %s50 = int_to_ptr.vmem [resolvable:$true] %s49
      %55 = dma.hbm_to_vmem [thread:$0]  %s48, 832, %s50, [#allocation6], 64, 64, 4
    $region9: #{tpu_custom_call.1} parent=1 // pred_fallthru
      _
    // Predicated region
    $region10: #{tpu_custom_call.1} parent=1 // pred_check
      _
    $region11: #{tpu_custom_call.1} parent=1 // pred_check_branch
      %57 = sbr.rel (0) target = $region13
    $region12: #{tpu_custom_call.1} parent=1 // pred_region
      %59 = vsyncadd [#allocation6], 0
      %s61 = sshll.u32 %s2, 4
      %s62 = int_to_ptr.hbm [resolvable:$true] %s61
      %s63 = sshll.u32 [#allocation7], 4
      %s64 = int_to_ptr.vmem [resolvable:$true] %s63
      %66 = dma.hbm_to_vmem [thread:$0]  %s62, 16, %s64, [#allocation6]
    $region13: #{tpu_custom_call.1} parent=1 // pred_fallthru
      _
    // Predicated region
    $region14: #{tpu_custom_call.1} parent=1 // pred_check
      _
    $region15: #{tpu_custom_call.1} parent=1 // pred_check_branch
      %68 = sbr.rel (0) target = $region17
    $region16: #{tpu_custom_call.1} parent=1 // pred_region
      %70 = vsyncadd [#allocation9], 0
      %s71 = sshll.u32 %s3, 4
      %s72 = int_to_ptr.hbm [resolvable:$true] %s71
      %s73 = sshll.u32 [#allocation8], 4
      %s74 = int_to_ptr.vmem [resolvable:$true] %s73
      %79 = dma.hbm_to_vmem [thread:$0]  %s72, 2048, %s74, [#allocation9], 128, 128, 8
    $region17: #{tpu_custom_call.1} parent=1 // pred_fallthru
      _
    // Predicated region
    $region18: #{tpu_custom_call.1} parent=1 // pred_check
      _
    $region19: #{tpu_custom_call.1} parent=1 // pred_check_branch
      %81 = sbr.rel (0) target = $region21
    $region20: #{tpu_custom_call.1} parent=1 // pred_region
      %83 = vsyncadd [#allocation9], 0
      %s85 = sshll.u32 %s4, 4
      %s86 = int_to_ptr.hbm [resolvable:$true] %s85
      %s87 = sshll.u32 [#allocation10], 4
      %s88 = int_to_ptr.vmem [resolvable:$true] %s87
      %90 = dma.hbm_to_vmem [thread:$0]  %s86, 32, %s88, [#allocation9]
    $region21: #{tpu_custom_call.1} parent=1 // pred_fallthru
      _
    // Predicated region
    $region22: #{tpu_custom_call.1} parent=1 // pred_check
      _
    $region23: #{tpu_custom_call.1} parent=1 // pred_check_branch
      %92 = sbr.rel (0) target = $region25
    $region24: #{tpu_custom_call.1} parent=1 // pred_region
      %94 = vsyncadd [#allocation12], 0
      %s96 = sshll.u32 %s5, 4
      %s97 = int_to_ptr.hbm [resolvable:$true] %s96
      %s98 = sshll.u32 [#allocation11], 4
      %s99 = int_to_ptr.vmem [resolvable:$true] %s98
      %101 = dma.hbm_to_vmem [thread:$0]  %s97, 32, %s99, [#allocation12]
    $region25: #{tpu_custom_call.1} parent=1 // pred_fallthru
      _
    // Predicated region
    $region26: #{tpu_custom_call.1} parent=1 // pred_check
      _
    $region27: #{tpu_custom_call.1} parent=1 // pred_check_branch
      %103 = sbr.rel (0) target = $region29
    $region28: #{tpu_custom_call.1} parent=1 // pred_region
      %105 = vsyncadd [#allocation12], 0
      %s107 = sshll.u32 %s6, 4
      %s108 = int_to_ptr.hbm [resolvable:$true] %s107
      %s109 = sshll.u32 [#allocation13], 4
      %s110 = int_to_ptr.vmem [resolvable:$true] %s109
      %112 = dma.hbm_to_vmem [thread:$0]  %s108, 32, %s110, [#allocation12]
    $region29: #{tpu_custom_call.1} parent=1 // pred_fallthru
      _
    // Predicated region
    $region30: #{tpu_custom_call.1} parent=1 // pred_check
      _
    $region31: #{tpu_custom_call.1} parent=1 // pred_check_branch
      %114 = sbr.rel (0) target = $region33
    $region32: #{tpu_custom_call.1} parent=1 // pred_region
      %116 = vsyncadd [#allocation15], 0
      %s117 = sshll.u32 %s7, 4
      %s118 = int_to_ptr.hbm [resolvable:$true] %s117
      %s119 = sshll.u32 [#allocation14], 4
      %s120 = int_to_ptr.vmem [resolvable:$true] %s119
      %125 = dma.hbm_to_vmem [thread:$0]  %s118, 8192, %s120, [#allocation15], 256, 256, 16
    $region33: #{tpu_custom_call.1} parent=1 // pred_fallthru
      _
    // Predicated region
    $region34: #{tpu_custom_call.1} parent=1 // pred_check
      _
    $region35: #{tpu_custom_call.1} parent=1 // pred_check_branch
      %127 = sbr.rel (0) target = $region37
    $region36: #{tpu_custom_call.1} parent=1 // pred_region
      %129 = vsyncadd [#allocation15], 0
      %s131 = sshll.u32 %s8, 4
      %s132 = int_to_ptr.hbm [resolvable:$true] %s131
      %s133 = sshll.u32 [#allocation16], 4
      %s134 = int_to_ptr.vmem [resolvable:$true] %s133
      %136 = dma.hbm_to_vmem [thread:$0]  %s132, 64, %s134, [#allocation15]
    $region37: #{tpu_custom_call.1} parent=1 // pred_fallthru
      _
    // Predicated region
    $region38: #{tpu_custom_call.1} parent=1 // pred_check
      _
    $region39: #{tpu_custom_call.1} parent=1 // pred_check_branch
      %138 = sbr.rel (0) target = $region41
    $region40: #{tpu_custom_call.1} parent=1 // pred_region
      %140 = vsyncadd [#allocation18], 0
      %s142 = sshll.u32 %s9, 4
      %s143 = int_to_ptr.hbm [resolvable:$true] %s142
      %s144 = sshll.u32 [#allocation17], 4
      %s145 = int_to_ptr.vmem [resolvable:$true] %s144
      %147 = dma.hbm_to_vmem [thread:$0]  %s143, 64, %s145, [#allocation18]
    $region41: #{tpu_custom_call.1} parent=1 // pred_fallthru
      _
    // Predicated region
    $region42: #{tpu_custom_call.1} parent=1 // pred_check
      _
    $region43: #{tpu_custom_call.1} parent=1 // pred_check_branch
      %149 = sbr.rel (0) target = $region45
    $region44: #{tpu_custom_call.1} parent=1 // pred_region
      %151 = vsyncadd [#allocation18], 0
      %s153 = sshll.u32 %s10, 4
      %s154 = int_to_ptr.hbm [resolvable:$true] %s153
      %s155 = sshll.u32 [#allocation19], 4
      %s156 = int_to_ptr.vmem [resolvable:$true] %s155
      %158 = dma.hbm_to_vmem [thread:$0]  %s154, 64, %s156, [#allocation18]
    $region45: #{tpu_custom_call.1} parent=1 // pred_fallthru
      _
    // Predicated region
    $region46: #{tpu_custom_call.1} parent=1 // pred_check
      _
    $region47: #{tpu_custom_call.1} parent=1 // pred_check_branch
      %160 = sbr.rel (0) target = $region49
    $region48: #{tpu_custom_call.1} parent=1 // pred_region
      %162 = vsyncadd [#allocation21], 0
      %s163 = sshll.u32 %s11, 4
      %s164 = int_to_ptr.hbm [resolvable:$true] %s163
      %s165 = sshll.u32 [#allocation20], 4
      %s166 = int_to_ptr.vmem [resolvable:$true] %s165
      %171 = dma.hbm_to_vmem [thread:$0]  %s164, 32768, %s166, [#allocation21], 512, 512, 32
    $region49: #{tpu_custom_call.1} parent=1 // pred_fallthru
      _
    // Predicated region
    $region50: #{tpu_custom_call.1} parent=1 // pred_check
      _
    $region51: #{tpu_custom_call.1} parent=1 // pred_check_branch
      %173 = sbr.rel (0) target = $region53
    $region52: #{tpu_custom_call.1} parent=1 // pred_region
      %175 = vsyncadd [#allocation21], 0
      %s177 = sshll.u32 %s12, 4
      %s178 = int_to_ptr.hbm [resolvable:$true] %s177
      %s179 = sshll.u32 [#allocation22], 4
      %s180 = int_to_ptr.vmem [resolvable:$true] %s179
      %182 = dma.hbm_to_vmem [thread:$0]  %s178, 128, %s180, [#allocation21]
    $region53: #{tpu_custom_call.1} parent=1 // pred_fallthru
      _
    // Predicated region
    $region54: #{tpu_custom_call.1} parent=1 // pred_check
      _
    $region55: #{tpu_custom_call.1} parent=1 // pred_check_branch
      %184 = sbr.rel (0) target = $region57
    $region56: #{tpu_custom_call.1} parent=1 // pred_region
      %186 = vsyncadd [#allocation24], 0
      %s188 = sshll.u32 %s13, 4
      %s189 = int_to_ptr.hbm [resolvable:$true] %s188
      %s190 = sshll.u32 [#allocation23], 4
      %s191 = int_to_ptr.vmem [resolvable:$true] %s190
      %193 = dma.hbm_to_vmem [thread:$0]  %s189, 128, %s191, [#allocation24]
    $region57: #{tpu_custom_call.1} parent=1 // pred_fallthru
      _
    // Predicated region
    $region58: #{tpu_custom_call.1} parent=1 // pred_check
      _
    $region59: #{tpu_custom_call.1} parent=1 // pred_check_branch
      %195 = sbr.rel (0) target = $region61
    $region60: #{tpu_custom_call.1} parent=1 // pred_region
      %197 = vsyncadd [#allocation24], 0
      %s199 = sshll.u32 %s14, 4
      %s200 = int_to_ptr.hbm [resolvable:$true] %s199
      %s201 = sshll.u32 [#allocation25], 4
      %s202 = int_to_ptr.vmem [resolvable:$true] %s201
      %204 = dma.hbm_to_vmem [thread:$0]  %s200, 128, %s202, [#allocation24]
    $region61: #{tpu_custom_call.1} parent=1 // pred_fallthru
      _
    // Predicated region
    $region62: #{tpu_custom_call.1} parent=1 // pred_check
      _
    $region63: #{tpu_custom_call.1} parent=1 // pred_check_branch
      %206 = sbr.rel (0) target = $region65
    $region64: #{tpu_custom_call.1} parent=1 // pred_region
      %208 = vsyncadd [#allocation27], 0
      %s209 = sshll.u32 %s15, 4
      %s210 = int_to_ptr.hbm [resolvable:$true] %s209
      %s211 = sshll.u32 [#allocation26], 4
      %s212 = int_to_ptr.vmem [resolvable:$true] %s211
      %217 = dma.hbm_to_vmem [thread:$0]  %s210, 57344, %s212, [#allocation27], 448, 448, 28
    $region65: #{tpu_custom_call.1} parent=1 // pred_fallthru
      _
    // Predicated region
    $region66: #{tpu_custom_call.1} parent=1 // pred_check
      _
    $region67: #{tpu_custom_call.1} parent=1 // pred_check_branch
      %219 = sbr.rel (0) target = $region69
    $region68: #{tpu_custom_call.1} parent=1 // pred_region
      %221 = vsyncadd [#allocation27], 0
      %s223 = sshll.u32 %s16, 4
      %s224 = int_to_ptr.hbm [resolvable:$true] %s223
      %s225 = sshll.u32 [#allocation28], 4
      %s226 = int_to_ptr.vmem [resolvable:$true] %s225
      %228 = dma.hbm_to_vmem [thread:$0]  %s224, 112, %s226, [#allocation27]
    $region69: #{tpu_custom_call.1} parent=1 // pred_fallthru
      _
    // Predicated region
    $region70: #{tpu_custom_call.1} parent=1 // pred_check
      _
    $region71: #{tpu_custom_call.1} parent=1 // pred_check_branch
      %230 = sbr.rel (0) target = $region73
    $region72: #{tpu_custom_call.1} parent=1 // pred_region
      %232 = dma.done [#allocation3], 16
    $region73: #{tpu_custom_call.1} parent=1 // pred_fallthru
      _
    // Predicated region
    $region74: #{tpu_custom_call.1} parent=1 // pred_check
      _
    $region75: #{tpu_custom_call.1} parent=1 // pred_check_branch
      %234 = sbr.rel (0) target = $region77
    $region76: #{tpu_custom_call.1} parent=1 // pred_region
      %236 = dma.done [#allocation6], 832
    $region77: #{tpu_custom_call.1} parent=1 // pred_fallthru
      _
    // Predicated region
    $region78: #{tpu_custom_call.1} parent=1 // pred_check
      _
    $region79: #{tpu_custom_call.1} parent=1 // pred_check_branch
      %238 = sbr.rel (0) target = $region81
    $region80: #{tpu_custom_call.1} parent=1 // pred_region
      %240 = dma.done [#allocation6], 16
    $region81: #{tpu_custom_call.1} parent=1 // pred_fallthru
      _
    // Predicated region
    $region82: #{tpu_custom_call.1} parent=1 // pred_check
      _
    $region83: #{tpu_custom_call.1} parent=1 // pred_check_branch
      %242 = sbr.rel (0) target = $region85
    $region84: #{tpu_custom_call.1} parent=1 // pred_region
      %244 = dma.done [#allocation9], 2048
    $region85: #{tpu_custom_call.1} parent=1 // pred_fallthru
      _
    // Predicated region
    $region86: #{tpu_custom_call.1} parent=1 // pred_check
      _
    $region87: #{tpu_custom_call.1} parent=1 // pred_check_branch
      %246 = sbr.rel (0) target = $region89
    $region88: #{tpu_custom_call.1} parent=1 // pred_region
      %248 = dma.done [#allocation9], 32
    $region89: #{tpu_custom_call.1} parent=1 // pred_fallthru
      _
    // Predicated region
    $region90: #{tpu_custom_call.1} parent=1 // pred_check
      _
    $region91: #{tpu_custom_call.1} parent=1 // pred_check_branch
      %250 = sbr.rel (0) target = $region93
    $region92: #{tpu_custom_call.1} parent=1 // pred_region
      %252 = dma.done [#allocation12], 32
    $region93: #{tpu_custom_call.1} parent=1 // pred_fallthru
      _
    // Predicated region
    $region94: #{tpu_custom_call.1} parent=1 // pred_check
      _
    $region95: #{tpu_custom_call.1} parent=1 // pred_check_branch
      %254 = sbr.rel (0) target = $region97
    $region96: #{tpu_custom_call.1} parent=1 // pred_region
      %256 = dma.done [#allocation12], 32
    $region97: #{tpu_custom_call.1} parent=1 // pred_fallthru
      _
    // Predicated region
    $region98: #{tpu_custom_call.1} parent=1 // pred_check
      _
    $region99: #{tpu_custom_call.1} parent=1 // pred_check_branch
      %258 = sbr.rel (0) target = $region101
    $region100: #{tpu_custom_call.1} parent=1 // pred_region
      %260 = dma.done [#allocation15], 8192
    $region101: #{tpu_custom_call.1} parent=1 // pred_fallthru
      _
    // Predicated region
    $region102: #{tpu_custom_call.1} parent=1 // pred_check
      _
    $region103: #{tpu_custom_call.1} parent=1 // pred_check_branch
      %262 = sbr.rel (0) target = $region105
    $region104: #{tpu_custom_call.1} parent=1 // pred_region
      %264 = dma.done [#allocation15], 64
    $region105: #{tpu_custom_call.1} parent=1 // pred_fallthru
      _
    // Predicated region
    $region106: #{tpu_custom_call.1} parent=1 // pred_check
      _
    $region107: #{tpu_custom_call.1} parent=1 // pred_check_branch
      %266 = sbr.rel (0) target = $region109
    $region108: #{tpu_custom_call.1} parent=1 // pred_region
      %268 = dma.done [#allocation18], 64
    $region109: #{tpu_custom_call.1} parent=1 // pred_fallthru
      _
    // Predicated region
    $region110: #{tpu_custom_call.1} parent=1 // pred_check
      _
    $region111: #{tpu_custom_call.1} parent=1 // pred_check_branch
      %270 = sbr.rel (0) target = $region113
    $region112: #{tpu_custom_call.1} parent=1 // pred_region
      %272 = dma.done [#allocation18], 64
    $region113: #{tpu_custom_call.1} parent=1 // pred_fallthru
      _
    // Predicated region
    $region114: #{tpu_custom_call.1} parent=1 // pred_check
      _
    $region115: #{tpu_custom_call.1} parent=1 // pred_check_branch
      %274 = sbr.rel (0) target = $region117
    $region116: #{tpu_custom_call.1} parent=1 // pred_region
      %276 = dma.done [#allocation21], 32768
    $region117: #{tpu_custom_call.1} parent=1 // pred_fallthru
      _
    // Predicated region
    $region118: #{tpu_custom_call.1} parent=1 // pred_check
      _
    $region119: #{tpu_custom_call.1} parent=1 // pred_check_branch
      %278 = sbr.rel (0) target = $region121
    $region120: #{tpu_custom_call.1} parent=1 // pred_region
      %280 = dma.done [#allocation21], 128
    $region121: #{tpu_custom_call.1} parent=1 // pred_fallthru
      _
    // Predicated region
    $region122: #{tpu_custom_call.1} parent=1 // pred_check
      _
    $region123: #{tpu_custom_call.1} parent=1 // pred_check_branch
      %282 = sbr.rel (0) target = $region125
    $region124: #{tpu_custom_call.1} parent=1 // pred_region
      %284 = dma.done [#allocation24], 128
    $region125: #{tpu_custom_call.1} parent=1 // pred_fallthru
      _
    // Predicated region
    $region126: #{tpu_custom_call.1} parent=1 // pred_check
      _
    $region127: #{tpu_custom_call.1} parent=1 // pred_check_branch
      %286 = sbr.rel (0) target = $region129
    $region128: #{tpu_custom_call.1} parent=1 // pred_region
      %288 = dma.done [#allocation24], 128
    $region129: #{tpu_custom_call.1} parent=1 // pred_fallthru
      _
    // Predicated region
    $region130: #{tpu_custom_call.1} parent=1 // pred_check
      _
    $region131: #{tpu_custom_call.1} parent=1 // pred_check_branch
      %290 = sbr.rel (0) target = $region133
    $region132: #{tpu_custom_call.1} parent=1 // pred_region
      %292 = dma.done [#allocation27], 57344
    $region133: #{tpu_custom_call.1} parent=1 // pred_fallthru
      _
    // Predicated region
    $region134: #{tpu_custom_call.1} parent=1 // pred_check
      _
    $region135: #{tpu_custom_call.1} parent=1 // pred_check_branch
      %294 = sbr.rel (0) target = $region137
    $region136: #{tpu_custom_call.1} parent=1 // pred_region
      %296 = dma.done [#allocation27], 112
    $region137: #{tpu_custom_call.1} parent=1 // pred_fallthru
      _
    %v298 = vld [vmem:[#allocation2] sm:$0x1]
    %v299 = vld [vmem:[#allocation5] sm:$0xf]
    %v300 = vld [vmem:[#allocation5 + $0x4] sm:$0xf]
    %v301 = vld [vmem:[#allocation5 + $0x8] sm:$0xf]
    %v302 = vld [vmem:[#allocation5 + $0xc] sm:$0xf]
    %v303 = vld [vmem:[#allocation5 + $0x10] sm:$0xf]
    %v304 = vld [vmem:[#allocation5 + $0x14] sm:$0xf]
    %v305 = vld [vmem:[#allocation5 + $0x18] sm:$0xf]
    %v306 = vld [vmem:[#allocation5 + $0x1c] sm:$0xf]
    %v307 = vld [vmem:[#allocation5 + $0x20] sm:$0xf]
    %v308 = vld [vmem:[#allocation5 + $0x24] sm:$0xf]
    %v309 = vld [vmem:[#allocation5 + $0x28] sm:$0xf]
    %v310 = vld [vmem:[#allocation5 + $0x2c] sm:$0xf]
    %v311 = vld [vmem:[#allocation5 + $0x30] sm:$0x3]
    %v312 = vld [vmem:[#allocation7] sm:$0x1]
    %v314 = vperm.slane %v312, 0
    %v329 = vunpack.c.l.b16 %v299
    %v330 = vunpack.c.l.b16 %v300
    %v331 = vunpack.c.l.b16 %v301
    %v332 = vunpack.c.l.b16 %v302
    %v333 = vunpack.c.l.b16 %v303
    %v334 = vunpack.c.l.b16 %v304
    %v335 = vunpack.c.l.b16 %v305
    %v336 = vunpack.c.l.b16 %v306
    %v337 = vunpack.c.l.b16 %v307
    %v338 = vunpack.c.l.b16 %v308
    %v339 = vunpack.c.l.b16 %v309
    %v340 = vunpack.c.l.b16 %v310
    %v341 = vunpack.c.l.b16 %v311
    %v342 = vpack.c.b16 %v330, %v329
    %v343 = vpack.c.b16 %v332, %v331
    %v344 = vpack.c.b16 %v334, %v333
    %v345 = vpack.c.b16 %v336, %v335
    %v346 = vpack.c.b16 %v338, %v337
    %v347 = vpack.c.b16 %v340, %v339
    %v348 = vpack.c.b16 %v341, %v341
    %vm355 = vcmask 818176
    %v357 = vsel %vm355, %v298, 0
    %vm359 = vcmask 1041408
    %v361 = vsel %vm359, %v348, 0
    %363 = vmatpush.bf16.msra.mxu0 0
    %364 = vmatpush.bf16.msra.mxu0 %v361
    %365 = vmatpush.bf16.msra.mxu0 %v347
    %366 = vmatpush.bf16.msra.mxu0 %v346
    %367 = vmatpush.bf16.msra.mxu0 %v345
    %368 = vmatpush.bf16.msra.mxu0 %v344
    %369 = vmatpush.bf16.msra.mxu0 %v343
    %370 = vmatpush.bf16.msra.mxu0 %v342
    %371 = vmatmul.bf16.gmra.mxu0 %v357
    %v372 = vpop.f32.mrf.mxu0
    %v373 = vadd.f32 %v314, %v372
    %v374 = vpop.f32.mrf.mxu0
    %375 = vdwg.mxu0
    %vm376 = vcmp.gt.f32.partialorder %v373, 0.0
    %v377 = vmul.f32 %v373, 0.2
    %v378 = vsel %vm376, %v373, %v377
    %v379 = vpack.c.bf16 %v378, %v378
    %v380 = vld [vmem:[#allocation8] sm:$0xff]
    %v381 = vld [vmem:[#allocation8 + $0x8] sm:$0xff]
    %v382 = vld [vmem:[#allocation8 + $0x10] sm:$0xff]
    %v383 = vld [vmem:[#allocation8 + $0x18] sm:$0xff]
    %v384 = vld [vmem:[#allocation8 + $0x20] sm:$0xff]
    %v385 = vld [vmem:[#allocation8 + $0x28] sm:$0xff]
    %v386 = vld [vmem:[#allocation8 + $0x30] sm:$0xff]
    %v387 = vld [vmem:[#allocation8 + $0x38] sm:$0xff]
    %v388 = vld [vmem:[#allocation8 + $0x40] sm:$0xff]
    %v389 = vld [vmem:[#allocation8 + $0x48] sm:$0xff]
    %v390 = vld [vmem:[#allocation8 + $0x50] sm:$0xff]
    %v391 = vld [vmem:[#allocation8 + $0x58] sm:$0xff]
    %v392 = vld [vmem:[#allocation8 + $0x60] sm:$0xff]
    %v393 = vld [vmem:[#allocation8 + $0x68] sm:$0xff]
    %v394 = vld [vmem:[#allocation8 + $0x70] sm:$0xff]
    %v395 = vld [vmem:[#allocation8 + $0x78] sm:$0xff]
    %v396 = vld [vmem:[#allocation10] sm:$0x3]
    %v398 = vperm.slane %v396, 0
    %v399 = vperm.slane %v396, 1
    %v418 = vunpack.c.l.b16 %v380
    %v419 = vunpack.c.h.b16 %v380
    %v420 = vunpack.c.l.b16 %v381
    %v421 = vunpack.c.h.b16 %v381
    %v422 = vunpack.c.l.b16 %v382
    %v423 = vunpack.c.h.b16 %v382
    %v424 = vunpack.c.l.b16 %v383
    %v425 = vunpack.c.h.b16 %v383
    %v426 = vunpack.c.l.b16 %v384
    %v427 = vunpack.c.h.b16 %v384
    %v428 = vunpack.c.l.b16 %v385
    %v429 = vunpack.c.h.b16 %v385
    %v430 = vunpack.c.l.b16 %v386
    %v431 = vunpack.c.h.b16 %v386
    %v432 = vunpack.c.l.b16 %v387
    %v433 = vunpack.c.h.b16 %v387
    %v434 = vunpack.c.l.b16 %v388
    %v435 = vunpack.c.h.b16 %v388
    %v436 = vunpack.c.l.b16 %v389
    %v437 = vunpack.c.h.b16 %v389
    %v438 = vunpack.c.l.b16 %v390
    %v439 = vunpack.c.h.b16 %v390
    %v440 = vunpack.c.l.b16 %v391
    %v441 = vunpack.c.h.b16 %v391
    %v442 = vunpack.c.l.b16 %v392
    %v443 = vunpack.c.h.b16 %v392
    %v444 = vunpack.c.l.b16 %v393
    %v445 = vunpack.c.h.b16 %v393
    %v446 = vunpack.c.l.b16 %v394
    %v447 = vunpack.c.h.b16 %v394
    %v448 = vunpack.c.l.b16 %v395
    %v449 = vunpack.c.h.b16 %v395
    %v450 = vpack.c.b16 %v420, %v418
    %v451 = vpack.c.b16 %v421, %v419
    %v452 = vpack.c.b16 %v424, %v422
    %v453 = vpack.c.b16 %v425, %v423
    %v454 = vpack.c.b16 %v428, %v426
    %v455 = vpack.c.b16 %v429, %v427
    %v456 = vpack.c.b16 %v432, %v430
    %v457 = vpack.c.b16 %v433, %v431
    %v458 = vpack.c.b16 %v436, %v434
    %v459 = vpack.c.b16 %v437, %v435
    %v460 = vpack.c.b16 %v440, %v438
    %v461 = vpack.c.b16 %v441, %v439
    %v462 = vpack.c.b16 %v444, %v442
    %v463 = vpack.c.b16 %v445, %v443
    %v464 = vpack.c.b16 %v448, %v446
    %v465 = vpack.c.b16 %v449, %v447
    %482 = vmatpush.bf16.msra.mxu0 %v464
    %483 = vmatpush.bf16.msra.mxu0 %v462
    %484 = vmatpush.bf16.msra.mxu0 %v460
    %485 = vmatpush.bf16.msra.mxu0 %v458
    %486 = vmatpush.bf16.msra.mxu0 %v456
    %487 = vmatpush.bf16.msra.mxu0 %v454
    %488 = vmatpush.bf16.msra.mxu0 %v452
    %489 = vmatpush.bf16.msra.mxu0 %v450
    %490 = vmatmul.bf16.gmra.mxu0 %v379
    %v491 = vpop.f32.mrf.mxu0
    %v492 = vadd.f32 %v398, %v491
    %v493 = vpop.f32.mrf.mxu0
    %494 = vdwg.mxu0
    %495 = vmatpush.bf16.msra.mxu0 %v465
    %496 = vmatpush.bf16.msra.mxu0 %v463
    %497 = vmatpush.bf16.msra.mxu0 %v461
    %498 = vmatpush.bf16.msra.mxu0 %v459
    %499 = vmatpush.bf16.msra.mxu0 %v457
    %500 = vmatpush.bf16.msra.mxu0 %v455
    %501 = vmatpush.bf16.msra.mxu0 %v453
    %502 = vmatpush.bf16.msra.mxu0 %v451
    %503 = vmatmul.bf16.gmra.mxu0 %v379
    %v504 = vpop.f32.mrf.mxu0
    %v505 = vadd.f32 %v399, %v504
    %v506 = vpop.f32.mrf.mxu0
    %507 = vdwg.mxu0
    %v508 = vld [vmem:[#allocation11] sm:$0x3]
    %v509 = vld [vmem:[#allocation13] sm:$0x3]
    %v510 = vsel %vm359, %v492, 0.0
    %v511 = vrot.slane %v510, 4
    %v512 = vadd.f32 %v510, %v511
    %v513 = vrot.slane %v512, 2
    %v514 = vadd.f32 %v512, %v513
    %v515 = vrot.slane %v514, 1
    %v516 = vadd.f32 %v514, %v515
    %v517 = vsel %vm359, %v505, 0.0
    %v518 = vrot.slane %v517, 4
    %v519 = vadd.f32 %v517, %v518
    %v520 = vrot.slane %v519, 2
    %v521 = vadd.f32 %v519, %v520
    %v522 = vrot.slane %v521, 1
    %v523 = vadd.f32 %v521, %v522
    %v524 = vrcp.pop 2.0
    %v525 = vmul.f32 2.0, %v524
    %v526 = vsub.f32 1.0, %v525
    %v527 = vmul.f32 %v524, %v526
    %v528 = vadd.f32 %v524, %v527
    %vm529 = vweird.f32 %v524
    %v530 = vsel %vm529, %v524, %v528
    %v531 = vmul.f32 %v516, %v530
    %v532 = vmul.f32 %v523, %v530
    %v533 = vsub.f32 %v492, %v531
    %v534 = vsub.f32 %v505, %v532
    %v535 = vmul.f32 %v533, %v533
    %v536 = vmul.f32 %v534, %v534
    %v537 = vsel %vm359, %v535, 0.0
    %v538 = vrot.slane %v537, 4
    %v539 = vadd.f32 %v537, %v538
    %v540 = vrot.slane %v539, 2
    %v541 = vadd.f32 %v539, %v540
    %v542 = vrot.slane %v541, 1
    %v543 = vadd.f32 %v541, %v542
    %v544 = vsel %vm359, %v536, 0.0
    %v545 = vrot.slane %v544, 4
    %v546 = vadd.f32 %v544, %v545
    %v547 = vrot.slane %v546, 2
    %v548 = vadd.f32 %v546, %v547
    %v549 = vrot.slane %v548, 1
    %v550 = vadd.f32 %v548, %v549
    %v551 = vmul.f32 %v543, %v530
    %v552 = vmul.f32 %v550, %v530
    %v553 = vadd.f32 %v551, 0.8
    %v554 = vadd.f32 %v552, 0.8
    %v555 = vrsqrt.pop %v553
    %v556 = vmul.f32 %v555, %v553
    %v557 = vmul.f32 %v556, %v555
    %v558 = vmul.f32 0.5, %v557
    %v559 = vsub.f32 1.5, %v558
    %v560 = vmul.f32 %v555, %v559
    %vm561 = vweird.f32 %v553
    %vm562 = vweird.f32 %v555
    %vm563 = vmor %vm561, %vm562
    %v564 = vsel %vm563, %v555, %v560
    %v565 = vrsqrt.pop %v554
    %v566 = vmul.f32 %v565, %v554
    %v567 = vmul.f32 %v566, %v565
    %v568 = vmul.f32 0.5, %v567
    %v569 = vsub.f32 1.5, %v568
    %v570 = vmul.f32 %v565, %v569
    %vm571 = vweird.f32 %v554
    %vm572 = vweird.f32 %v565
    %vm573 = vmor %vm571, %vm572
    %v574 = vsel %vm573, %v565, %v570
    %v575 = vmul.f32 %v533, %v564
    %v576 = vmul.f32 %v534, %v574
    %v578 = vperm.slane %v508, 0
    %v579 = vperm.slane %v508, 1
    %v582 = vmul.f32 %v575, %v578
    %v583 = vmul.f32 %v576, %v579
    %v585 = vperm.slane %v509, 0
    %v586 = vperm.slane %v509, 1
    %v589 = vadd.f32 %v582, %v585
    %v590 = vadd.f32 %v583, %v586
    %vm591 = vcmp.gt.f32.partialorder %v589, 0.0
    %vm592 = vcmp.gt.f32.partialorder %v590, 0.0
    %v593 = vmul.f32 %v589, 0.2
    %v594 = vmul.f32 %v590, 0.2
    %v595 = vsel %vm591, %v589, %v593
    %v596 = vsel %vm592, %v590, %v594
    %v597 = vpack.c.bf16 %v595, %v595
    %v598 = vpack.c.bf16 %v596, %v596
    %v599 = vld [vmem:[#allocation14] sm:$0xff]
    %v600 = vld [vmem:[#allocation14 + $0x8] sm:$0xff]
    %v601 = vld [vmem:[#allocation14 + $0x10] sm:$0xff]
    %v602 = vld [vmem:[#allocation14 + $0x18] sm:$0xff]
    %v603 = vld [vmem:[#allocation14 + $0x20] sm:$0xff]
    %v604 = vld [vmem:[#allocation14 + $0x28] sm:$0xff]
    %v605 = vld [vmem:[#allocation14 + $0x30] sm:$0xff]
    %v606 = vld [vmem:[#allocation14 + $0x38] sm:$0xff]
    %v607 = vld [vmem:[#allocation14 + $0x40] sm:$0xff]
    %v608 = vld [vmem:[#allocation14 + $0x48] sm:$0xff]
    %v609 = vld [vmem:[#allocation14 + $0x50] sm:$0xff]
    %v610 = vld [vmem:[#allocation14 + $0x58] sm:$0xff]
    %v611 = vld [vmem:[#allocation14 + $0x60] sm:$0xff]
    %v612 = vld [vmem:[#allocation14 + $0x68] sm:$0xff]
    %v613 = vld [vmem:[#allocation14 + $0x70] sm:$0xff]
    %v614 = vld [vmem:[#allocation14 + $0x78] sm:$0xff]
    %v615 = vld [vmem:[#allocation14 + $0x80] sm:$0xff]
    %v616 = vld [vmem:[#allocation14 + $0x88] sm:$0xff]
    %v617 = vld [vmem:[#allocation14 + $0x90] sm:$0xff]
    %v618 = vld [vmem:[#allocation14 + $0x98] sm:$0xff]
    %v619 = vld [vmem:[#allocation14 + $0xa0] sm:$0xff]
    %v620 = vld [vmem:[#allocation14 + $0xa8] sm:$0xff]
    %v621 = vld [vmem:[#allocation14 + $0xb0] sm:$0xff]
    %v622 = vld [vmem:[#allocation14 + $0xb8] sm:$0xff]
    %v623 = vld [vmem:[#allocation14 + $0xc0] sm:$0xff]
    %v624 = vld [vmem:[#allocation14 + $0xc8] sm:$0xff]
    %v625 = vld [vmem:[#allocation14 + $0xd0] sm:$0xff]
    %v626 = vld [vmem:[#allocation14 + $0xd8] sm:$0xff]
    %v627 = vld [vmem:[#allocation14 + $0xe0] sm:$0xff]
    %v628 = vld [vmem:[#allocation14 + $0xe8] sm:$0xff]
    %v629 = vld [vmem:[#allocation14 + $0xf0] sm:$0xff]
    %v630 = vld [vmem:[#allocation14 + $0xf8] sm:$0xff]
    %v631 = vld [vmem:[#allocation14 + $0x100] sm:$0xff]
    %v632 = vld [vmem:[#allocation14 + $0x108] sm:$0xff]
    %v633 = vld [vmem:[#allocation14 + $0x110] sm:$0xff]
    %v634 = vld [vmem:[#allocation14 + $0x118] sm:$0xff]
    %v635 = vld [vmem:[#allocation14 + $0x120] sm:$0xff]
    %v636 = vld [vmem:[#allocation14 + $0x128] sm:$0xff]
    %v637 = vld [vmem:[#allocation14 + $0x130] sm:$0xff]
    %v638 = vld [vmem:[#allocation14 + $0x138] sm:$0xff]
    %v639 = vld [vmem:[#allocation14 + $0x140] sm:$0xff]
    %v640 = vld [vmem:[#allocation14 + $0x148] sm:$0xff]
    %v641 = vld [vmem:[#allocation14 + $0x150] sm:$0xff]
    %v642 = vld [vmem:[#allocation14 + $0x158] sm:$0xff]
    %v643 = vld [vmem:[#allocation14 + $0x160] sm:$0xff]
    %v644 = vld [vmem:[#allocation14 + $0x168] sm:$0xff]
    %v645 = vld [vmem:[#allocation14 + $0x170] sm:$0xff]
    %v646 = vld [vmem:[#allocation14 + $0x178] sm:$0xff]
    %v647 = vld [vmem:[#allocation14 + $0x180] sm:$0xff]
    %v648 = vld [vmem:[#allocation14 + $0x188] sm:$0xff]
    %v649 = vld [vmem:[#allocation14 + $0x190] sm:$0xff]
    %v650 = vld [vmem:[#allocation14 + $0x198] sm:$0xff]
    %v651 = vld [vmem:[#allocation14 + $0x1a0] sm:$0xff]
    %v652 = vld [vmem:[#allocation14 + $0x1a8] sm:$0xff]
    %v653 = vld [vmem:[#allocation14 + $0x1b0] sm:$0xff]
    %v654 = vld [vmem:[#allocation14 + $0x1b8] sm:$0xff]
    %v655 = vld [vmem:[#allocation14 + $0x1c0] sm:$0xff]
    %v656 = vld [vmem:[#allocation14 + $0x1c8] sm:$0xff]
    %v657 = vld [vmem:[#allocation14 + $0x1d0] sm:$0xff]
    %v658 = vld [vmem:[#allocation14 + $0x1d8] sm:$0xff]
    %v659 = vld [vmem:[#allocation14 + $0x1e0] sm:$0xff]
    %v660 = vld [vmem:[#allocation14 + $0x1e8] sm:$0xff]
    %v661 = vld [vmem:[#allocation14 + $0x1f0] sm:$0xff]
    %v662 = vld [vmem:[#allocation14 + $0x1f8] sm:$0xff]
    %v663 = vld [vmem:[#allocation16] sm:$0xf]
    %v665 = vperm.slane %v663, 0
    %v666 = vperm.slane %v663, 1
    %v667 = vperm.slane %v663, 2
    %v668 = vperm.slane %v663, 3
    %v737 = vunpack.c.l.b16 %v599
    %v738 = vunpack.c.h.b16 %v599
    %v739 = vunpack.c.l.b16 %v600
    %v740 = vunpack.c.h.b16 %v600
    %v741 = vunpack.c.l.b16 %v601
    %v742 = vunpack.c.h.b16 %v601
    %v743 = vunpack.c.l.b16 %v602
    %v744 = vunpack.c.h.b16 %v602
    %v745 = vunpack.c.l.b16 %v603
    %v746 = vunpack.c.h.b16 %v603
    %v747 = vunpack.c.l.b16 %v604
    %v748 = vunpack.c.h.b16 %v604
    %v749 = vunpack.c.l.b16 %v605
    %v750 = vunpack.c.h.b16 %v605
    %v751 = vunpack.c.l.b16 %v606
    %v752 = vunpack.c.h.b16 %v606
    %v753 = vunpack.c.l.b16 %v607
    %v754 = vunpack.c.h.b16 %v607
    %v755 = vunpack.c.l.b16 %v608
    %v756 = vunpack.c.h.b16 %v608
    %v757 = vunpack.c.l.b16 %v609
    %v758 = vunpack.c.h.b16 %v609
    %v759 = vunpack.c.l.b16 %v610
    %v760 = vunpack.c.h.b16 %v610
    %v761 = vunpack.c.l.b16 %v611
    %v762 = vunpack.c.h.b16 %v611
    %v763 = vunpack.c.l.b16 %v612
    %v764 = vunpack.c.h.b16 %v612
    %v765 = vunpack.c.l.b16 %v613
    %v766 = vunpack.c.h.b16 %v613
    %v767 = vunpack.c.l.b16 %v614
    %v768 = vunpack.c.h.b16 %v614
    %v769 = vunpack.c.l.b16 %v615
    %v770 = vunpack.c.h.b16 %v615
    %v771 = vunpack.c.l.b16 %v616
    %v772 = vunpack.c.h.b16 %v616
    %v773 = vunpack.c.l.b16 %v617
    %v774 = vunpack.c.h.b16 %v617
    %v775 = vunpack.c.l.b16 %v618
    %v776 = vunpack.c.h.b16 %v618
    %v777 = vunpack.c.l.b16 %v619
    %v778 = vunpack.c.h.b16 %v619
    %v779 = vunpack.c.l.b16 %v620
    %v780 = vunpack.c.h.b16 %v620
    %v781 = vunpack.c.l.b16 %v621
    %v782 = vunpack.c.h.b16 %v621
    %v783 = vunpack.c.l.b16 %v622
    %v784 = vunpack.c.h.b16 %v622
    %v785 = vunpack.c.l.b16 %v623
    %v786 = vunpack.c.h.b16 %v623
    %v787 = vunpack.c.l.b16 %v624
    %v788 = vunpack.c.h.b16 %v624
    %v789 = vunpack.c.l.b16 %v625
    %v790 = vunpack.c.h.b16 %v625
    %v791 = vunpack.c.l.b16 %v626
    %v792 = vunpack.c.h.b16 %v626
    %v793 = vunpack.c.l.b16 %v627
    %v794 = vunpack.c.h.b16 %v627
    %v795 = vunpack.c.l.b16 %v628
    %v796 = vunpack.c.h.b16 %v628
    %v797 = vunpack.c.l.b16 %v629
    %v798 = vunpack.c.h.b16 %v629
    %v799 = vunpack.c.l.b16 %v630
    %v800 = vunpack.c.h.b16 %v630
    %v801 = vunpack.c.l.b16 %v631
    %v802 = vunpack.c.h.b16 %v631
    %v803 = vunpack.c.l.b16 %v632
    %v804 = vunpack.c.h.b16 %v632
    %v805 = vunpack.c.l.b16 %v633
    %v806 = vunpack.c.h.b16 %v633
    %v807 = vunpack.c.l.b16 %v634
    %v808 = vunpack.c.h.b16 %v634
    %v809 = vunpack.c.l.b16 %v635
    %v810 = vunpack.c.h.b16 %v635
    %v811 = vunpack.c.l.b16 %v636
    %v812 = vunpack.c.h.b16 %v636
    %v813 = vunpack.c.l.b16 %v637
    %v814 = vunpack.c.h.b16 %v637
    %v815 = vunpack.c.l.b16 %v638
    %v816 = vunpack.c.h.b16 %v638
    %v817 = vunpack.c.l.b16 %v639
    %v818 = vunpack.c.h.b16 %v639
    %v819 = vunpack.c.l.b16 %v640
    %v820 = vunpack.c.h.b16 %v640
    %v821 = vunpack.c.l.b16 %v641
    %v822 = vunpack.c.h.b16 %v641
    %v823 = vunpack.c.l.b16 %v642
    %v824 = vunpack.c.h.b16 %v642
    %v825 = vunpack.c.l.b16 %v643
    %v826 = vunpack.c.h.b16 %v643
    %v827 = vunpack.c.l.b16 %v644
    %v828 = vunpack.c.h.b16 %v644
    %v829 = vunpack.c.l.b16 %v645
    %v830 = vunpack.c.h.b16 %v645
    %v831 = vunpack.c.l.b16 %v646
    %v832 = vunpack.c.h.b16 %v646
    %v833 = vunpack.c.l.b16 %v647
    %v834 = vunpack.c.h.b16 %v647
    %v835 = vunpack.c.l.b16 %v648
    %v836 = vunpack.c.h.b16 %v648
    %v837 = vunpack.c.l.b16 %v649
    %v838 = vunpack.c.h.b16 %v649
    %v839 = vunpack.c.l.b16 %v650
    %v840 = vunpack.c.h.b16 %v650
    %v841 = vunpack.c.l.b16 %v651
    %v842 = vunpack.c.h.b16 %v651
    %v843 = vunpack.c.l.b16 %v652
    %v844 = vunpack.c.h.b16 %v652
    %v845 = vunpack.c.l.b16 %v653
    %v846 = vunpack.c.h.b16 %v653
    %v847 = vunpack.c.l.b16 %v654
    %v848 = vunpack.c.h.b16 %v654
    %v849 = vunpack.c.l.b16 %v655
    %v850 = vunpack.c.h.b16 %v655
    %v851 = vunpack.c.l.b16 %v656
    %v852 = vunpack.c.h.b16 %v656
    %v853 = vunpack.c.l.b16 %v657
    %v854 = vunpack.c.h.b16 %v657
    %v855 = vunpack.c.l.b16 %v658
    %v856 = vunpack.c.h.b16 %v658
    %v857 = vunpack.c.l.b16 %v659
    %v858 = vunpack.c.h.b16 %v659
    %v859 = vunpack.c.l.b16 %v660
    %v860 = vunpack.c.h.b16 %v660
    %v861 = vunpack.c.l.b16 %v661
    %v862 = vunpack.c.h.b16 %v661
    %v863 = vunpack.c.l.b16 %v662
    %v864 = vunpack.c.h.b16 %v662
    %v865 = vpack.c.b16 %v741, %v737
    %v866 = vpack.c.b16 %v742, %v738
    %v867 = vpack.c.b16 %v743, %v739
    %v868 = vpack.c.b16 %v744, %v740
    %v869 = vpack.c.b16 %v749, %v745
    %v870 = vpack.c.b16 %v750, %v746
    %v871 = vpack.c.b16 %v751, %v747
    %v872 = vpack.c.b16 %v752, %v748
    %v873 = vpack.c.b16 %v757, %v753
    %v874 = vpack.c.b16 %v758, %v754
    %v875 = vpack.c.b16 %v759, %v755
    %v876 = vpack.c.b16 %v760, %v756
    %v877 = vpack.c.b16 %v765, %v761
    %v878 = vpack.c.b16 %v766, %v762
    %v879 = vpack.c.b16 %v767, %v763
    %v880 = vpack.c.b16 %v768, %v764
    %v881 = vpack.c.b16 %v773, %v769
    %v882 = vpack.c.b16 %v774, %v770
    %v883 = vpack.c.b16 %v775, %v771
    %v884 = vpack.c.b16 %v776, %v772
    %v885 = vpack.c.b16 %v781, %v777
    %v886 = vpack.c.b16 %v782, %v778
    %v887 = vpack.c.b16 %v783, %v779
    %v888 = vpack.c.b16 %v784, %v780
    %v889 = vpack.c.b16 %v789, %v785
    %v890 = vpack.c.b16 %v790, %v786
    %v891 = vpack.c.b16 %v791, %v787
    %v892 = vpack.c.b16 %v792, %v788
    %v893 = vpack.c.b16 %v797, %v793
    %v894 = vpack.c.b16 %v798, %v794
    %v895 = vpack.c.b16 %v799, %v795
    %v896 = vpack.c.b16 %v800, %v796
    %v897 = vpack.c.b16 %v805, %v801
    %v898 = vpack.c.b16 %v806, %v802
    %v899 = vpack.c.b16 %v807, %v803
    %v900 = vpack.c.b16 %v808, %v804
    %v901 = vpack.c.b16 %v813, %v809
    %v902 = vpack.c.b16 %v814, %v810
    %v903 = vpack.c.b16 %v815, %v811
    %v904 = vpack.c.b16 %v816, %v812
    %v905 = vpack.c.b16 %v821, %v817
    %v906 = vpack.c.b16 %v822, %v818
    %v907 = vpack.c.b16 %v823, %v819
    %v908 = vpack.c.b16 %v824, %v820
    %v909 = vpack.c.b16 %v829, %v825
    %v910 = vpack.c.b16 %v830, %v826
    %v911 = vpack.c.b16 %v831, %v827
    %v912 = vpack.c.b16 %v832, %v828
    %v913 = vpack.c.b16 %v837, %v833
    %v914 = vpack.c.b16 %v838, %v834
    %v915 = vpack.c.b16 %v839, %v835
    %v916 = vpack.c.b16 %v840, %v836
    %v917 = vpack.c.b16 %v845, %v841
    %v918 = vpack.c.b16 %v846, %v842
    %v919 = vpack.c.b16 %v847, %v843
    %v920 = vpack.c.b16 %v848, %v844
    %v921 = vpack.c.b16 %v853, %v849
    %v922 = vpack.c.b16 %v854, %v850
    %v923 = vpack.c.b16 %v855, %v851
    %v924 = vpack.c.b16 %v856, %v852
    %v925 = vpack.c.b16 %v861, %v857
    %v926 = vpack.c.b16 %v862, %v858
    %v927 = vpack.c.b16 %v863, %v859
    %v928 = vpack.c.b16 %v864, %v860
    %993 = vmatpush.bf16.msra.mxu0 %v893
    %994 = vmatpush.bf16.msra.mxu0 %v889
    %995 = vmatpush.bf16.msra.mxu0 %v885
    %996 = vmatpush.bf16.msra.mxu0 %v881
    %997 = vmatpush.bf16.msra.mxu0 %v877
    %998 = vmatpush.bf16.msra.mxu0 %v873
    %999 = vmatpush.bf16.msra.mxu0 %v869
    %1000 = vmatpush.bf16.msra.mxu0 %v865
    %1001 = vmatmul.bf16.gmra.mxu0 %v597
    %v1002 = vpop.f32.mrf.mxu0
    %v1003 = vadd.f32 %v665, %v1002
    %v1004 = vpop.f32.mrf.mxu0
    %1005 = vdwg.mxu0
    %1006 = vmatpush.bf16.msra.mxu0 %v925
    %1007 = vmatpush.bf16.msra.mxu0 %v921
    %1008 = vmatpush.bf16.msra.mxu0 %v917
    %1009 = vmatpush.bf16.msra.mxu0 %v913
    %1010 = vmatpush.bf16.msra.mxu0 %v909
    %1011 = vmatpush.bf16.msra.mxu0 %v905
    %1012 = vmatpush.bf16.msra.mxu0 %v901
    %1013 = vmatpush.bf16.msra.mxu0 %v897
    %1014 = vmatmul.bf16.gmra.mxu0 %v598
    %v1015 = vpop.f32.mrf.mxu0
    %v1016 = vadd.f32 %v1003, %v1015
    %v1017 = vpop.f32.mrf.mxu0
    %1018 = vdwg.mxu0
    %1019 = vmatpush.bf16.msra.mxu0 %v894
    %1020 = vmatpush.bf16.msra.mxu0 %v890
    %1021 = vmatpush.bf16.msra.mxu0 %v886
    %1022 = vmatpush.bf16.msra.mxu0 %v882
    %1023 = vmatpush.bf16.msra.mxu0 %v878
    %1024 = vmatpush.bf16.msra.mxu0 %v874
    %1025 = vmatpush.bf16.msra.mxu0 %v870
    %1026 = vmatpush.bf16.msra.mxu0 %v866
    %1027 = vmatmul.bf16.gmra.mxu0 %v597
    %v1028 = vpop.f32.mrf.mxu0
    %v1029 = vadd.f32 %v666, %v1028
    %v1030 = vpop.f32.mrf.mxu0
    %1031 = vdwg.mxu0
    %1032 = vmatpush.bf16.msra.mxu0 %v926
    %1033 = vmatpush.bf16.msra.mxu0 %v922
    %1034 = vmatpush.bf16.msra.mxu0 %v918
    %1035 = vmatpush.bf16.msra.mxu0 %v914
    %1036 = vmatpush.bf16.msra.mxu0 %v910
    %1037 = vmatpush.bf16.msra.mxu0 %v906
    %1038 = vmatpush.bf16.msra.mxu0 %v902
    %1039 = vmatpush.bf16.msra.mxu0 %v898
    %1040 = vmatmul.bf16.gmra.mxu0 %v598
    %v1041 = vpop.f32.mrf.mxu0
    %v1042 = vadd.f32 %v1029, %v1041
    %v1043 = vpop.f32.mrf.mxu0
    %1044 = vdwg.mxu0
    %1045 = vmatpush.bf16.msra.mxu0 %v895
    %1046 = vmatpush.bf16.msra.mxu0 %v891
    %1047 = vmatpush.bf16.msra.mxu0 %v887
    %1048 = vmatpush.bf16.msra.mxu0 %v883
    %1049 = vmatpush.bf16.msra.mxu0 %v879
    %1050 = vmatpush.bf16.msra.mxu0 %v875
    %1051 = vmatpush.bf16.msra.mxu0 %v871
    %1052 = vmatpush.bf16.msra.mxu0 %v867
    %1053 = vmatmul.bf16.gmra.mxu0 %v597
    %v1054 = vpop.f32.mrf.mxu0
    %v1055 = vadd.f32 %v667, %v1054
    %v1056 = vpop.f32.mrf.mxu0
    %1057 = vdwg.mxu0
    %1058 = vmatpush.bf16.msra.mxu0 %v927
    %1059 = vmatpush.bf16.msra.mxu0 %v923
    %1060 = vmatpush.bf16.msra.mxu0 %v919
    %1061 = vmatpush.bf16.msra.mxu0 %v915
    %1062 = vmatpush.bf16.msra.mxu0 %v911
    %1063 = vmatpush.bf16.msra.mxu0 %v907
    %1064 = vmatpush.bf16.msra.mxu0 %v903
    %1065 = vmatpush.bf16.msra.mxu0 %v899
    %1066 = vmatmul.bf16.gmra.mxu0 %v598
    %v1067 = vpop.f32.mrf.mxu0
    %v1068 = vadd.f32 %v1055, %v1067
    %v1069 = vpop.f32.mrf.mxu0
    %1070 = vdwg.mxu0
    %1071 = vmatpush.bf16.msra.mxu0 %v896
    %1072 = vmatpush.bf16.msra.mxu0 %v892
    %1073 = vmatpush.bf16.msra.mxu0 %v888
    %1074 = vmatpush.bf16.msra.mxu0 %v884
    %1075 = vmatpush.bf16.msra.mxu0 %v880
    %1076 = vmatpush.bf16.msra.mxu0 %v876
    %1077 = vmatpush.bf16.msra.mxu0 %v872
    %1078 = vmatpush.bf16.msra.mxu0 %v868
    %1079 = vmatmul.bf16.gmra.mxu0 %v597
    %v1080 = vpop.f32.mrf.mxu0
    %v1081 = vadd.f32 %v668, %v1080
    %v1082 = vpop.f32.mrf.mxu0
    %1083 = vdwg.mxu0
    %1084 = vmatpush.bf16.msra.mxu0 %v928
    %1085 = vmatpush.bf16.msra.mxu0 %v924
    %1086 = vmatpush.bf16.msra.mxu0 %v920
    %1087 = vmatpush.bf16.msra.mxu0 %v916
    %1088 = vmatpush.bf16.msra.mxu0 %v912
    %1089 = vmatpush.bf16.msra.mxu0 %v908
    %1090 = vmatpush.bf16.msra.mxu0 %v904
    %1091 = vmatpush.bf16.msra.mxu0 %v900
    %1092 = vmatmul.bf16.gmra.mxu0 %v598
    %v1093 = vpop.f32.mrf.mxu0
    %v1094 = vadd.f32 %v1081, %v1093
    %v1095 = vpop.f32.mrf.mxu0
    %1096 = vdwg.mxu0
    %v1097 = vld [vmem:[#allocation17] sm:$0xf]
    %v1098 = vld [vmem:[#allocation19] sm:$0xf]
    %v1099 = vsel %vm359, %v1016, 0.0
    %v1100 = vrot.slane %v1099, 4
    %v1101 = vadd.f32 %v1099, %v1100
    %v1102 = vrot.slane %v1101, 2
    %v1103 = vadd.f32 %v1101, %v1102
    %v1104 = vrot.slane %v1103, 1
    %v1105 = vadd.f32 %v1103, %v1104
    %v1106 = vsel %vm359, %v1042, 0.0
    %v1107 = vrot.slane %v1106, 4
    %v1108 = vadd.f32 %v1106, %v1107
    %v1109 = vrot.slane %v1108, 2
    %v1110 = vadd.f32 %v1108, %v1109
    %v1111 = vrot.slane %v1110, 1
    %v1112 = vadd.f32 %v1110, %v1111
    %v1113 = vsel %vm359, %v1068, 0.0
    %v1114 = vrot.slane %v1113, 4
    %v1115 = vadd.f32 %v1113, %v1114
    %v1116 = vrot.slane %v1115, 2
    %v1117 = vadd.f32 %v1115, %v1116
    %v1118 = vrot.slane %v1117, 1
    %v1119 = vadd.f32 %v1117, %v1118
    %v1120 = vsel %vm359, %v1094, 0.0
    %v1121 = vrot.slane %v1120, 4
    %v1122 = vadd.f32 %v1120, %v1121
    %v1123 = vrot.slane %v1122, 2
    %v1124 = vadd.f32 %v1122, %v1123
    %v1125 = vrot.slane %v1124, 1
    %v1126 = vadd.f32 %v1124, %v1125
    %v1127 = vmul.f32 %v1105, %v530
    %v1128 = vmul.f32 %v1112, %v530
    %v1129 = vmul.f32 %v1119, %v530
    %v1130 = vmul.f32 %v1126, %v530
    %v1131 = vsub.f32 %v1016, %v1127
    %v1132 = vsub.f32 %v1042, %v1128
    %v1133 = vsub.f32 %v1068, %v1129
    %v1134 = vsub.f32 %v1094, %v1130
    %v1135 = vmul.f32 %v1131, %v1131
    %v1136 = vmul.f32 %v1132, %v1132
    %v1137 = vmul.f32 %v1133, %v1133
    %v1138 = vmul.f32 %v1134, %v1134
    %v1139 = vsel %vm359, %v1135, 0.0
    %v1140 = vrot.slane %v1139, 4
    %v1141 = vadd.f32 %v1139, %v1140
    %v1142 = vrot.slane %v1141, 2
    %v1143 = vadd.f32 %v1141, %v1142
    %v1144 = vrot.slane %v1143, 1
    %v1145 = vadd.f32 %v1143, %v1144
    %v1146 = vsel %vm359, %v1136, 0.0
    %v1147 = vrot.slane %v1146, 4
    %v1148 = vadd.f32 %v1146, %v1147
    %v1149 = vrot.slane %v1148, 2
    %v1150 = vadd.f32 %v1148, %v1149
    %v1151 = vrot.slane %v1150, 1
    %v1152 = vadd.f32 %v1150, %v1151
    %v1153 = vsel %vm359, %v1137, 0.0
    %v1154 = vrot.slane %v1153, 4
    %v1155 = vadd.f32 %v1153, %v1154
    %v1156 = vrot.slane %v1155, 2
    %v1157 = vadd.f32 %v1155, %v1156
    %v1158 = vrot.slane %v1157, 1
    %v1159 = vadd.f32 %v1157, %v1158
    %v1160 = vsel %vm359, %v1138, 0.0
    %v1161 = vrot.slane %v1160, 4
    %v1162 = vadd.f32 %v1160, %v1161
    %v1163 = vrot.slane %v1162, 2
    %v1164 = vadd.f32 %v1162, %v1163
    %v1165 = vrot.slane %v1164, 1
    %v1166 = vadd.f32 %v1164, %v1165
    %v1167 = vmul.f32 %v1145, %v530
    %v1168 = vmul.f32 %v1152, %v530
    %v1169 = vmul.f32 %v1159, %v530
    %v1170 = vmul.f32 %v1166, %v530
    %v1171 = vadd.f32 %v1167, 0.8
    %v1172 = vadd.f32 %v1168, 0.8
    %v1173 = vadd.f32 %v1169, 0.8
    %v1174 = vadd.f32 %v1170, 0.8
    %v1175 = vrsqrt.pop %v1171
    %v1176 = vmul.f32 %v1175, %v1171
    %v1177 = vmul.f32 %v1176, %v1175
    %v1178 = vmul.f32 0.5, %v1177
    %v1179 = vsub.f32 1.5, %v1178
    %v1180 = vmul.f32 %v1175, %v1179
    %vm1181 = vweird.f32 %v1171
    %vm1182 = vweird.f32 %v1175
    %vm1183 = vmor %vm1181, %vm1182
    %v1184 = vsel %vm1183, %v1175, %v1180
    %v1185 = vrsqrt.pop %v1172
    %v1186 = vmul.f32 %v1185, %v1172
    %v1187 = vmul.f32 %v1186, %v1185
    %v1188 = vmul.f32 0.5, %v1187
    %v1189 = vsub.f32 1.5, %v1188
    %v1190 = vmul.f32 %v1185, %v1189
    %vm1191 = vweird.f32 %v1172
    %vm1192 = vweird.f32 %v1185
    %vm1193 = vmor %vm1191, %vm1192
    %v1194 = vsel %vm1193, %v1185, %v1190
    %v1195 = vrsqrt.pop %v1173
    %v1196 = vmul.f32 %v1195, %v1173
    %v1197 = vmul.f32 %v1196, %v1195
    %v1198 = vmul.f32 0.5, %v1197
    %v1199 = vsub.f32 1.5, %v1198
    %v1200 = vmul.f32 %v1195, %v1199
    %vm1201 = vweird.f32 %v1173
    %vm1202 = vweird.f32 %v1195
    %vm1203 = vmor %vm1201, %vm1202
    %v1204 = vsel %vm1203, %v1195, %v1200
    %v1205 = vrsqrt.pop %v1174
    %v1206 = vmul.f32 %v1205, %v1174
    %v1207 = vmul.f32 %v1206, %v1205
    %v1208 = vmul.f32 0.5, %v1207
    %v1209 = vsub.f32 1.5, %v1208
    %v1210 = vmul.f32 %v1205, %v1209
    %vm1211 = vweird.f32 %v1174
    %vm1212 = vweird.f32 %v1205
    %vm1213 = vmor %vm1211, %vm1212
    %v1214 = vsel %vm1213, %v1205, %v1210
    %v1215 = vmul.f32 %v1131, %v1184
    %v1216 = vmul.f32 %v1132, %v1194
    %v1217 = vmul.f32 %v1133, %v1204
    %v1218 = vmul.f32 %v1134, %v1214
    %v1220 = vperm.slane %v1097, 0
    %v1221 = vperm.slane %v1097, 1
    %v1222 = vperm.slane %v1097, 2
    %v1223 = vperm.slane %v1097, 3
    %v1228 = vmul.f32 %v1215, %v1220
    %v1229 = vmul.f32 %v1216, %v1221
    %v1230 = vmul.f32 %v1217, %v1222
    %v1231 = vmul.f32 %v1218, %v1223
    %v1233 = vperm.slane %v1098, 0
    %v1234 = vperm.slane %v1098, 1
    %v1235 = vperm.slane %v1098, 2
    %v1236 = vperm.slane %v1098, 3
    %v1241 = vadd.f32 %v1228, %v1233
    %v1242 = vadd.f32 %v1229, %v1234
    %v1243 = vadd.f32 %v1230, %v1235
    %v1244 = vadd.f32 %v1231, %v1236
    %vm1245 = vcmp.gt.f32.partialorder %v1241, 0.0
    %vm1246 = vcmp.gt.f32.partialorder %v1242, 0.0
    %vm1247 = vcmp.gt.f32.partialorder %v1243, 0.0
    %vm1248 = vcmp.gt.f32.partialorder %v1244, 0.0
    %v1249 = vmul.f32 %v1241, 0.2
    %v1250 = vmul.f32 %v1242, 0.2
    %v1251 = vmul.f32 %v1243, 0.2
    %v1252 = vmul.f32 %v1244, 0.2
    %v1253 = vsel %vm1245, %v1241, %v1249
    %v1254 = vsel %vm1246, %v1242, %v1250
    %v1255 = vsel %vm1247, %v1243, %v1251
    %v1256 = vsel %vm1248, %v1244, %v1252
    %v1257 = vpack.c.bf16 %v1253, %v1253
    %v1258 = vpack.c.bf16 %v1254, %v1254
    %v1259 = vpack.c.bf16 %v1255, %v1255
    %v1260 = vpack.c.bf16 %v1256, %v1256
    %v1261 = vld [vmem:[#allocation20] sm:$0xff]
    %v1262 = vld [vmem:[#allocation20 + $0x8] sm:$0xff]
    %v1263 = vld [vmem:[#allocation20 + $0x10] sm:$0xff]
    %v1264 = vld [vmem:[#allocation20 + $0x18] sm:$0xff]
    %v1265 = vld [vmem:[#allocation20 + $0x20] sm:$0xff]
    %v1266 = vld [vmem:[#allocation20 + $0x28] sm:$0xff]
    %v1267 = vld [vmem:[#allocation20 + $0x30] sm:$0xff]
    %v1268 = vld [vmem:[#allocation20 + $0x38] sm:$0xff]
    %v1269 = vld [vmem:[#allocation20 + $0x40] sm:$0xff]
    %v1270 = vld [vmem:[#allocation20 + $0x48] sm:$0xff]
    %v1271 = vld [vmem:[#allocation20 + $0x50] sm:$0xff]
    %v1272 = vld [vmem:[#allocation20 + $0x58] sm:$0xff]
    %v1273 = vld [vmem:[#allocation20 + $0x60] sm:$0xff]
    %v1274 = vld [vmem:[#allocation20 + $0x68] sm:$0xff]
    %v1275 = vld [vmem:[#allocation20 + $0x70] sm:$0xff]
    %v1276 = vld [vmem:[#allocation20 + $0x78] sm:$0xff]
    %v1277 = vld [vmem:[#allocation20 + $0x80] sm:$0xff]
    %v1278 = vld [vmem:[#allocation20 + $0x88] sm:$0xff]
    %v1279 = vld [vmem:[#allocation20 + $0x90] sm:$0xff]
    %v1280 = vld [vmem:[#allocation20 + $0x98] sm:$0xff]
    %v1281 = vld [vmem:[#allocation20 + $0xa0] sm:$0xff]
    %v1282 = vld [vmem:[#allocation20 + $0xa8] sm:$0xff]
    %v1283 = vld [vmem:[#allocation20 + $0xb0] sm:$0xff]
    %v1284 = vld [vmem:[#allocation20 + $0xb8] sm:$0xff]
    %v1285 = vld [vmem:[#allocation20 + $0xc0] sm:$0xff]
    %v1286 = vld [vmem:[#allocation20 + $0xc8] sm:$0xff]
    %v1287 = vld [vmem:[#allocation20 + $0xd0] sm:$0xff]
    %v1288 = vld [vmem:[#allocation20 + $0xd8] sm:$0xff]
    %v1289 = vld [vmem:[#allocation20 + $0xe0] sm:$0xff]
    %v1290 = vld [vmem:[#allocation20 + $0xe8] sm:$0xff]
    %v1291 = vld [vmem:[#allocation20 + $0xf0] sm:$0xff]
    %v1292 = vld [vmem:[#allocation20 + $0xf8] sm:$0xff]
    %v1293 = vld [vmem:[#allocation20 + $0x100] sm:$0xff]
    %v1294 = vld [vmem:[#allocation20 + $0x108] sm:$0xff]
    %v1295 = vld [vmem:[#allocation20 + $0x110] sm:$0xff]
    %v1296 = vld [vmem:[#allocation20 + $0x118] sm:$0xff]
    %v1297 = vld [vmem:[#allocation20 + $0x120] sm:$0xff]
    %v1298 = vld [vmem:[#allocation20 + $0x128] sm:$0xff]
    %v1299 = vld [vmem:[#allocation20 + $0x130] sm:$0xff]
    %v1300 = vld [vmem:[#allocation20 + $0x138] sm:$0xff]
    %v1301 = vld [vmem:[#allocation20 + $0x140] sm:$0xff]
    %v1302 = vld [vmem:[#allocation20 + $0x148] sm:$0xff]
    %v1303 = vld [vmem:[#allocation20 + $0x150] sm:$0xff]
    %v1304 = vld [vmem:[#allocation20 + $0x158] sm:$0xff]
    %v1305 = vld [vmem:[#allocation20 + $0x160] sm:$0xff]
    %v1306 = vld [vmem:[#allocation20 + $0x168] sm:$0xff]
    %v1307 = vld [vmem:[#allocation20 + $0x170] sm:$0xff]
    %v1308 = vld [vmem:[#allocation20 + $0x178] sm:$0xff]
    %v1309 = vld [vmem:[#allocation20 + $0x180] sm:$0xff]
    %v1310 = vld [vmem:[#allocation20 + $0x188] sm:$0xff]
    %v1311 = vld [vmem:[#allocation20 + $0x190] sm:$0xff]
    %v1312 = vld [vmem:[#allocation20 + $0x198] sm:$0xff]
    %v1313 = vld [vmem:[#allocation20 + $0x1a0] sm:$0xff]
    %v1314 = vld [vmem:[#allocation20 + $0x1a8] sm:$0xff]
    %v1315 = vld [vmem:[#allocation20 + $0x1b0] sm:$0xff]
    %v1316 = vld [vmem:[#allocation20 + $0x1b8] sm:$0xff]
    %v1317 = vld [vmem:[#allocation20 + $0x1c0] sm:$0xff]
    %v1318 = vld [vmem:[#allocation20 + $0x1c8] sm:$0xff]
    %v1319 = vld [vmem:[#allocation20 + $0x1d0] sm:$0xff]
    %v1320 = vld [vmem:[#allocation20 + $0x1d8] sm:$0xff]
    %v1321 = vld [vmem:[#allocation20 + $0x1e0] sm:$0xff]
    %v1322 = vld [vmem:[#allocation20 + $0x1e8] sm:$0xff]
    %v1323 = vld [vmem:[#allocation20 + $0x1f0] sm:$0xff]
    %v1324 = vld [vmem:[#allocation20 + $0x1f8] sm:$0xff]
    %v1325 = vld [vmem:[#allocation20 + $0x200] sm:$0xff]
    %v1326 = vld [vmem:[#allocation20 + $0x208] sm:$0xff]
    %v1327 = vld [vmem:[#allocation20 + $0x210] sm:$0xff]
    %v1328 = vld [vmem:[#allocation20 + $0x218] sm:$0xff]
    %v1329 = vld [vmem:[#allocation20 + $0x220] sm:$0xff]
    %v1330 = vld [vmem:[#allocation20 + $0x228] sm:$0xff]
    %v1331 = vld [vmem:[#allocation20 + $0x230] sm:$0xff]
    %v1332 = vld [vmem:[#allocation20 + $0x238] sm:$0xff]
    %v1333 = vld [vmem:[#allocation20 + $0x240] sm:$0xff]
    %v1334 = vld [vmem:[#allocation20 + $0x248] sm:$0xff]
    %v1335 = vld [vmem:[#allocation20 + $0x250] sm:$0xff]
    %v1336 = vld [vmem:[#allocation20 + $0x258] sm:$0xff]
    %v1337 = vld [vmem:[#allocation20 + $0x260] sm:$0xff]
    %v1338 = vld [vmem:[#allocation20 + $0x268] sm:$0xff]
    %v1339 = vld [vmem:[#allocation20 + $0x270] sm:$0xff]
    %v1340 = vld [vmem:[#allocation20 + $0x278] sm:$0xff]
    %v1341 = vld [vmem:[#allocation20 + $0x280] sm:$0xff]
    %v1342 = vld [vmem:[#allocation20 + $0x288] sm:$0xff]
    %v1343 = vld [vmem:[#allocation20 + $0x290] sm:$0xff]
    %v1344 = vld [vmem:[#allocation20 + $0x298] sm:$0xff]
    %v1345 = vld [vmem:[#allocation20 + $0x2a0] sm:$0xff]
    %v1346 = vld [vmem:[#allocation20 + $0x2a8] sm:$0xff]
    %v1347 = vld [vmem:[#allocation20 + $0x2b0] sm:$0xff]
    %v1348 = vld [vmem:[#allocation20 + $0x2b8] sm:$0xff]
    %v1349 = vld [vmem:[#allocation20 + $0x2c0] sm:$0xff]
    %v1350 = vld [vmem:[#allocation20 + $0x2c8] sm:$0xff]
    %v1351 = vld [vmem:[#allocation20 + $0x2d0] sm:$0xff]
    %v1352 = vld [vmem:[#allocation20 + $0x2d8] sm:$0xff]
    %v1353 = vld [vmem:[#allocation20 + $0x2e0] sm:$0xff]
    %v1354 = vld [vmem:[#allocation20 + $0x2e8] sm:$0xff]
    %v1355 = vld [vmem:[#allocation20 + $0x2f0] sm:$0xff]
    %v1356 = vld [vmem:[#allocation20 + $0x2f8] sm:$0xff]
    %v1357 = vld [vmem:[#allocation20 + $0x300] sm:$0xff]
    %v1358 = vld [vmem:[#allocation20 + $0x308] sm:$0xff]
    %v1359 = vld [vmem:[#allocation20 + $0x310] sm:$0xff]
    %v1360 = vld [vmem:[#allocation20 + $0x318] sm:$0xff]
    %v1361 = vld [vmem:[#allocation20 + $0x320] sm:$0xff]
    %v1362 = vld [vmem:[#allocation20 + $0x328] sm:$0xff]
    %v1363 = vld [vmem:[#allocation20 + $0x330] sm:$0xff]
    %v1364 = vld [vmem:[#allocation20 + $0x338] sm:$0xff]
    %v1365 = vld [vmem:[#allocation20 + $0x340] sm:$0xff]
    %v1366 = vld [vmem:[#allocation20 + $0x348] sm:$0xff]
    %v1367 = vld [vmem:[#allocation20 + $0x350] sm:$0xff]
    %v1368 = vld [vmem:[#allocation20 + $0x358] sm:$0xff]
    %v1369 = vld [vmem:[#allocation20 + $0x360] sm:$0xff]
    %v1370 = vld [vmem:[#allocation20 + $0x368] sm:$0xff]
    %v1371 = vld [vmem:[#allocation20 + $0x370] sm:$0xff]
    %v1372 = vld [vmem:[#allocation20 + $0x378] sm:$0xff]
    %v1373 = vld [vmem:[#allocation20 + $0x380] sm:$0xff]
    %v1374 = vld [vmem:[#allocation20 + $0x388] sm:$0xff]
    %v1375 = vld [vmem:[#allocation20 + $0x390] sm:$0xff]
    %v1376 = vld [vmem:[#allocation20 + $0x398] sm:$0xff]
    %v1377 = vld [vmem:[#allocation20 + $0x3a0] sm:$0xff]
    %v1378 = vld [vmem:[#allocation20 + $0x3a8] sm:$0xff]
    %v1379 = vld [vmem:[#allocation20 + $0x3b0] sm:$0xff]
    %v1380 = vld [vmem:[#allocation20 + $0x3b8] sm:$0xff]
    %v1381 = vld [vmem:[#allocation20 + $0x3c0] sm:$0xff]
    %v1382 = vld [vmem:[#allocation20 + $0x3c8] sm:$0xff]
    %v1383 = vld [vmem:[#allocation20 + $0x3d0] sm:$0xff]
    %v1384 = vld [vmem:[#allocation20 + $0x3d8] sm:$0xff]
    %v1385 = vld [vmem:[#allocation20 + $0x3e0] sm:$0xff]
    %v1386 = vld [vmem:[#allocation20 + $0x3e8] sm:$0xff]
    %v1387 = vld [vmem:[#allocation20 + $0x3f0] sm:$0xff]
    %v1388 = vld [vmem:[#allocation20 + $0x3f8] sm:$0xff]
    %v1389 = vld [vmem:[#allocation20 + $0x400] sm:$0xff]
    %v1390 = vld [vmem:[#allocation20 + $0x408] sm:$0xff]
    %v1391 = vld [vmem:[#allocation20 + $0x410] sm:$0xff]
    %v1392 = vld [vmem:[#allocation20 + $0x418] sm:$0xff]
    %v1393 = vld [vmem:[#allocation20 + $0x420] sm:$0xff]
    %v1394 = vld [vmem:[#allocation20 + $0x428] sm:$0xff]
    %v1395 = vld [vmem:[#allocation20 + $0x430] sm:$0xff]
    %v1396 = vld [vmem:[#allocation20 + $0x438] sm:$0xff]
    %v1397 = vld [vmem:[#allocation20 + $0x440] sm:$0xff]
    %v1398 = vld [vmem:[#allocation20 + $0x448] sm:$0xff]
    %v1399 = vld [vmem:[#allocation20 + $0x450] sm:$0xff]
    %v1400 = vld [vmem:[#allocation20 + $0x458] sm:$0xff]
    %v1401 = vld [vmem:[#allocation20 + $0x460] sm:$0xff]
    %v1402 = vld [vmem:[#allocation20 + $0x468] sm:$0xff]
    %v1403 = vld [vmem:[#allocation20 + $0x470] sm:$0xff]
    %v1404 = vld [vmem:[#allocation20 + $0x478] sm:$0xff]
    %v1405 = vld [vmem:[#allocation20 + $0x480] sm:$0xff]
    %v1406 = vld [vmem:[#allocation20 + $0x488] sm:$0xff]
    %v1407 = vld [vmem:[#allocation20 + $0x490] sm:$0xff]
    %v1408 = vld [vmem:[#allocation20 + $0x498] sm:$0xff]
    %v1409 = vld [vmem:[#allocation20 + $0x4a0] sm:$0xff]
    %v1410 = vld [vmem:[#allocation20 + $0x4a8] sm:$0xff]
    %v1411 = vld [vmem:[#allocation20 + $0x4b0] sm:$0xff]
    %v1412 = vld [vmem:[#allocation20 + $0x4b8] sm:$0xff]
    %v1413 = vld [vmem:[#allocation20 + $0x4c0] sm:$0xff]
    %v1414 = vld [vmem:[#allocation20 + $0x4c8] sm:$0xff]
    %v1415 = vld [vmem:[#allocation20 + $0x4d0] sm:$0xff]
    %v1416 = vld [vmem:[#allocation20 + $0x4d8] sm:$0xff]
    %v1417 = vld [vmem:[#allocation20 + $0x4e0] sm:$0xff]
    %v1418 = vld [vmem:[#allocation20 + $0x4e8] sm:$0xff]
    %v1419 = vld [vmem:[#allocation20 + $0x4f0] sm:$0xff]
    %v1420 = vld [vmem:[#allocation20 + $0x4f8] sm:$0xff]
    %v1421 = vld [vmem:[#allocation20 + $0x500] sm:$0xff]
    %v1422 = vld [vmem:[#allocation20 + $0x508] sm:$0xff]
    %v1423 = vld [vmem:[#allocation20 + $0x510] sm:$0xff]
    %v1424 = vld [vmem:[#allocation20 + $0x518] sm:$0xff]
    %v1425 = vld [vmem:[#allocation20 + $0x520] sm:$0xff]
    %v1426 = vld [vmem:[#allocation20 + $0x528] sm:$0xff]
    %v1427 = vld [vmem:[#allocation20 + $0x530] sm:$0xff]
    %v1428 = vld [vmem:[#allocation20 + $0x538] sm:$0xff]
    %v1429 = vld [vmem:[#allocation20 + $0x540] sm:$0xff]
    %v1430 = vld [vmem:[#allocation20 + $0x548] sm:$0xff]
    %v1431 = vld [vmem:[#allocation20 + $0x550] sm:$0xff]
    %v1432 = vld [vmem:[#allocation20 + $0x558] sm:$0xff]
    %v1433 = vld [vmem:[#allocation20 + $0x560] sm:$0xff]
    %v1434 = vld [vmem:[#allocation20 + $0x568] sm:$0xff]
    %v1435 = vld [vmem:[#allocation20 + $0x570] sm:$0xff]
    %v1436 = vld [vmem:[#allocation20 + $0x578] sm:$0xff]
    %v1437 = vld [vmem:[#allocation20 + $0x580] sm:$0xff]
    %v1438 = vld [vmem:[#allocation20 + $0x588] sm:$0xff]
    %v1439 = vld [vmem:[#allocation20 + $0x590] sm:$0xff]
    %v1440 = vld [vmem:[#allocation20 + $0x598] sm:$0xff]
    %v1441 = vld [vmem:[#allocation20 + $0x5a0] sm:$0xff]
    %v1442 = vld [vmem:[#allocation20 + $0x5a8] sm:$0xff]
    %v1443 = vld [vmem:[#allocation20 + $0x5b0] sm:$0xff]
    %v1444 = vld [vmem:[#allocation20 + $0x5b8] sm:$0xff]
    %v1445 = vld [vmem:[#allocation20 + $0x5c0] sm:$0xff]
    %v1446 = vld [vmem:[#allocation20 + $0x5c8] sm:$0xff]
    %v1447 = vld [vmem:[#allocation20 + $0x5d0] sm:$0xff]
    %v1448 = vld [vmem:[#allocation20 + $0x5d8] sm:$0xff]
    %v1449 = vld [vmem:[#allocation20 + $0x5e0] sm:$0xff]
    %v1450 = vld [vmem:[#allocation20 + $0x5e8] sm:$0xff]
    %v1451 = vld [vmem:[#allocation20 + $0x5f0] sm:$0xff]
    %v1452 = vld [vmem:[#allocation20 + $0x5f8] sm:$0xff]
    %v1453 = vld [vmem:[#allocation20 + $0x600] sm:$0xff]
    %v1454 = vld [vmem:[#allocation20 + $0x608] sm:$0xff]
    %v1455 = vld [vmem:[#allocation20 + $0x610] sm:$0xff]
    %v1456 = vld [vmem:[#allocation20 + $0x618] sm:$0xff]
    %v1457 = vld [vmem:[#allocation20 + $0x620] sm:$0xff]
    %v1458 = vld [vmem:[#allocation20 + $0x628] sm:$0xff]
    %v1459 = vld [vmem:[#allocation20 + $0x630] sm:$0xff]
    %v1460 = vld [vmem:[#allocation20 + $0x638] sm:$0xff]
    %v1461 = vld [vmem:[#allocation20 + $0x640] sm:$0xff]
    %v1462 = vld [vmem:[#allocation20 + $0x648] sm:$0xff]
    %v1463 = vld [vmem:[#allocation20 + $0x650] sm:$0xff]
    %v1464 = vld [vmem:[#allocation20 + $0x658] sm:$0xff]
    %v1465 = vld [vmem:[#allocation20 + $0x660] sm:$0xff]
    %v1466 = vld [vmem:[#allocation20 + $0x668] sm:$0xff]
    %v1467 = vld [vmem:[#allocation20 + $0x670] sm:$0xff]
    %v1468 = vld [vmem:[#allocation20 + $0x678] sm:$0xff]
    %v1469 = vld [vmem:[#allocation20 + $0x680] sm:$0xff]
    %v1470 = vld [vmem:[#allocation20 + $0x688] sm:$0xff]
    %v1471 = vld [vmem:[#allocation20 + $0x690] sm:$0xff]
    %v1472 = vld [vmem:[#allocation20 + $0x698] sm:$0xff]
    %v1473 = vld [vmem:[#allocation20 + $0x6a0] sm:$0xff]
    %v1474 = vld [vmem:[#allocation20 + $0x6a8] sm:$0xff]
    %v1475 = vld [vmem:[#allocation20 + $0x6b0] sm:$0xff]
    %v1476 = vld [vmem:[#allocation20 + $0x6b8] sm:$0xff]
    %v1477 = vld [vmem:[#allocation20 + $0x6c0] sm:$0xff]
    %v1478 = vld [vmem:[#allocation20 + $0x6c8] sm:$0xff]
    %v1479 = vld [vmem:[#allocation20 + $0x6d0] sm:$0xff]
    %v1480 = vld [vmem:[#allocation20 + $0x6d8] sm:$0xff]
    %v1481 = vld [vmem:[#allocation20 + $0x6e0] sm:$0xff]
    %v1482 = vld [vmem:[#allocation20 + $0x6e8] sm:$0xff]
    %v1483 = vld [vmem:[#allocation20 + $0x6f0] sm:$0xff]
    %v1484 = vld [vmem:[#allocation20 + $0x6f8] sm:$0xff]
    %v1485 = vld [vmem:[#allocation20 + $0x700] sm:$0xff]
    %v1486 = vld [vmem:[#allocation20 + $0x708] sm:$0xff]
    %v1487 = vld [vmem:[#allocation20 + $0x710] sm:$0xff]
    %v1488 = vld [vmem:[#allocation20 + $0x718] sm:$0xff]
    %v1489 = vld [vmem:[#allocation20 + $0x720] sm:$0xff]
    %v1490 = vld [vmem:[#allocation20 + $0x728] sm:$0xff]
    %v1491 = vld [vmem:[#allocation20 + $0x730] sm:$0xff]
    %v1492 = vld [vmem:[#allocation20 + $0x738] sm:$0xff]
    %v1493 = vld [vmem:[#allocation20 + $0x740] sm:$0xff]
    %v1494 = vld [vmem:[#allocation20 + $0x748] sm:$0xff]
    %v1495 = vld [vmem:[#allocation20 + $0x750] sm:$0xff]
    %v1496 = vld [vmem:[#allocation20 + $0x758] sm:$0xff]
    %v1497 = vld [vmem:[#allocation20 + $0x760] sm:$0xff]
    %v1498 = vld [vmem:[#allocation20 + $0x768] sm:$0xff]
    %v1499 = vld [vmem:[#allocation20 + $0x770] sm:$0xff]
    %v1500 = vld [vmem:[#allocation20 + $0x778] sm:$0xff]
    %v1501 = vld [vmem:[#allocation20 + $0x780] sm:$0xff]
    %v1502 = vld [vmem:[#allocation20 + $0x788] sm:$0xff]
    %v1503 = vld [vmem:[#allocation20 + $0x790] sm:$0xff]
    %v1504 = vld [vmem:[#allocation20 + $0x798] sm:$0xff]
    %v1505 = vld [vmem:[#allocation20 + $0x7a0] sm:$0xff]
    %v1506 = vld [vmem:[#allocation20 + $0x7a8] sm:$0xff]
    %v1507 = vld [vmem:[#allocation20 + $0x7b0] sm:$0xff]
    %v1508 = vld [vmem:[#allocation20 + $0x7b8] sm:$0xff]
    %v1509 = vld [vmem:[#allocation20 + $0x7c0] sm:$0xff]
    %v1510 = vld [vmem:[#allocation20 + $0x7c8] sm:$0xff]
    %v1511 = vld [vmem:[#allocation20 + $0x7d0] sm:$0xff]
    %v1512 = vld [vmem:[#allocation20 + $0x7d8] sm:$0xff]
    %v1513 = vld [vmem:[#allocation20 + $0x7e0] sm:$0xff]
    %v1514 = vld [vmem:[#allocation20 + $0x7e8] sm:$0xff]
    %v1515 = vld [vmem:[#allocation20 + $0x7f0] sm:$0xff]
    %v1516 = vld [vmem:[#allocation20 + $0x7f8] sm:$0xff]
    %v1517 = vld [vmem:[#allocation22] sm:$0xff]
    %v1519 = vperm.slane %v1517, 0
    %v1520 = vperm.slane %v1517, 1
    %v1521 = vperm.slane %v1517, 2
    %v1522 = vperm.slane %v1517, 3
    %v1523 = vperm.slane %v1517, 4
    %v1524 = vperm.slane %v1517, 5
    %v1525 = vperm.slane %v1517, 6
    %v1526 = vperm.slane %v1517, 7
    %v1791 = vunpack.c.l.b16 %v1261
    %v1792 = vunpack.c.h.b16 %v1261
    %v1793 = vunpack.c.l.b16 %v1262
    %v1794 = vunpack.c.h.b16 %v1262
    %v1795 = vunpack.c.l.b16 %v1263
    %v1796 = vunpack.c.h.b16 %v1263
    %v1797 = vunpack.c.l.b16 %v1264
    %v1798 = vunpack.c.h.b16 %v1264
    %v1799 = vunpack.c.l.b16 %v1265
    %v1800 = vunpack.c.h.b16 %v1265
    %v1801 = vunpack.c.l.b16 %v1266
    %v1802 = vunpack.c.h.b16 %v1266
    %v1803 = vunpack.c.l.b16 %v1267
    %v1804 = vunpack.c.h.b16 %v1267
    %v1805 = vunpack.c.l.b16 %v1268
    %v1806 = vunpack.c.h.b16 %v1268
    %v1807 = vunpack.c.l.b16 %v1269
    %v1808 = vunpack.c.h.b16 %v1269
    %v1809 = vunpack.c.l.b16 %v1270
    %v1810 = vunpack.c.h.b16 %v1270
    %v1811 = vunpack.c.l.b16 %v1271
    %v1812 = vunpack.c.h.b16 %v1271
    %v1813 = vunpack.c.l.b16 %v1272
    %v1814 = vunpack.c.h.b16 %v1272
    %v1815 = vunpack.c.l.b16 %v1273
    %v1816 = vunpack.c.h.b16 %v1273
    %v1817 = vunpack.c.l.b16 %v1274
    %v1818 = vunpack.c.h.b16 %v1274
    %v1819 = vunpack.c.l.b16 %v1275
    %v1820 = vunpack.c.h.b16 %v1275
    %v1821 = vunpack.c.l.b16 %v1276
    %v1822 = vunpack.c.h.b16 %v1276
    %v1823 = vunpack.c.l.b16 %v1277
    %v1824 = vunpack.c.h.b16 %v1277
    %v1825 = vunpack.c.l.b16 %v1278
    %v1826 = vunpack.c.h.b16 %v1278
    %v1827 = vunpack.c.l.b16 %v1279
    %v1828 = vunpack.c.h.b16 %v1279
    %v1829 = vunpack.c.l.b16 %v1280
    %v1830 = vunpack.c.h.b16 %v1280
    %v1831 = vunpack.c.l.b16 %v1281
    %v1832 = vunpack.c.h.b16 %v1281
    %v1833 = vunpack.c.l.b16 %v1282
    %v1834 = vunpack.c.h.b16 %v1282
    %v1835 = vunpack.c.l.b16 %v1283
    %v1836 = vunpack.c.h.b16 %v1283
    %v1837 = vunpack.c.l.b16 %v1284
    %v1838 = vunpack.c.h.b16 %v1284
    %v1839 = vunpack.c.l.b16 %v1285
    %v1840 = vunpack.c.h.b16 %v1285
    %v1841 = vunpack.c.l.b16 %v1286
    %v1842 = vunpack.c.h.b16 %v1286
    %v1843 = vunpack.c.l.b16 %v1287
    %v1844 = vunpack.c.h.b16 %v1287
    %v1845 = vunpack.c.l.b16 %v1288
    %v1846 = vunpack.c.h.b16 %v1288
    %v1847 = vunpack.c.l.b16 %v1289
    %v1848 = vunpack.c.h.b16 %v1289
    %v1849 = vunpack.c.l.b16 %v1290
    %v1850 = vunpack.c.h.b16 %v1290
    %v1851 = vunpack.c.l.b16 %v1291
    %v1852 = vunpack.c.h.b16 %v1291
    %v1853 = vunpack.c.l.b16 %v1292
    %v1854 = vunpack.c.h.b16 %v1292
    %v1855 = vunpack.c.l.b16 %v1293
    %v1856 = vunpack.c.h.b16 %v1293
    %v1857 = vunpack.c.l.b16 %v1294
    %v1858 = vunpack.c.h.b16 %v1294
    %v1859 = vunpack.c.l.b16 %v1295
    %v1860 = vunpack.c.h.b16 %v1295
    %v1861 = vunpack.c.l.b16 %v1296
    %v1862 = vunpack.c.h.b16 %v1296
    %v1863 = vunpack.c.l.b16 %v1297
    %v1864 = vunpack.c.h.b16 %v1297
    %v1865 = vunpack.c.l.b16 %v1298
    %v1866 = vunpack.c.h.b16 %v1298
    %v1867 = vunpack.c.l.b16 %v1299
    %v1868 = vunpack.c.h.b16 %v1299
    %v1869 = vunpack.c.l.b16 %v1300
    %v1870 = vunpack.c.h.b16 %v1300
    %v1871 = vunpack.c.l.b16 %v1301
    %v1872 = vunpack.c.h.b16 %v1301
    %v1873 = vunpack.c.l.b16 %v1302
    %v1874 = vunpack.c.h.b16 %v1302
    %v1875 = vunpack.c.l.b16 %v1303
    %v1876 = vunpack.c.h.b16 %v1303
    %v1877 = vunpack.c.l.b16 %v1304
    %v1878 = vunpack.c.h.b16 %v1304
    %v1879 = vunpack.c.l.b16 %v1305
    %v1880 = vunpack.c.h.b16 %v1305
    %v1881 = vunpack.c.l.b16 %v1306
    %v1882 = vunpack.c.h.b16 %v1306
    %v1883 = vunpack.c.l.b16 %v1307
    %v1884 = vunpack.c.h.b16 %v1307
    %v1885 = vunpack.c.l.b16 %v1308
    %v1886 = vunpack.c.h.b16 %v1308
    %v1887 = vunpack.c.l.b16 %v1309
    %v1888 = vunpack.c.h.b16 %v1309
    %v1889 = vunpack.c.l.b16 %v1310
    %v1890 = vunpack.c.h.b16 %v1310
    %v1891 = vunpack.c.l.b16 %v1311
    %v1892 = vunpack.c.h.b16 %v1311
    %v1893 = vunpack.c.l.b16 %v1312
    %v1894 = vunpack.c.h.b16 %v1312
    %v1895 = vunpack.c.l.b16 %v1313
    %v1896 = vunpack.c.h.b16 %v1313
    %v1897 = vunpack.c.l.b16 %v1314
    %v1898 = vunpack.c.h.b16 %v1314
    %v1899 = vunpack.c.l.b16 %v1315
    %v1900 = vunpack.c.h.b16 %v1315
    %v1901 = vunpack.c.l.b16 %v1316
    %v1902 = vunpack.c.h.b16 %v1316
    %v1903 = vunpack.c.l.b16 %v1317
    %v1904 = vunpack.c.h.b16 %v1317
    %v1905 = vunpack.c.l.b16 %v1318
    %v1906 = vunpack.c.h.b16 %v1318
    %v1907 = vunpack.c.l.b16 %v1319
    %v1908 = vunpack.c.h.b16 %v1319
    %v1909 = vunpack.c.l.b16 %v1320
    %v1910 = vunpack.c.h.b16 %v1320
    %v1911 = vunpack.c.l.b16 %v1321
    %v1912 = vunpack.c.h.b16 %v1321
    %v1913 = vunpack.c.l.b16 %v1322
    %v1914 = vunpack.c.h.b16 %v1322
    %v1915 = vunpack.c.l.b16 %v1323
    %v1916 = vunpack.c.h.b16 %v1323
    %v1917 = vunpack.c.l.b16 %v1324
    %v1918 = vunpack.c.h.b16 %v1324
    %v1919 = vunpack.c.l.b16 %v1325
    %v1920 = vunpack.c.h.b16 %v1325
    %v1921 = vunpack.c.l.b16 %v1326
    %v1922 = vunpack.c.h.b16 %v1326
    %v1923 = vunpack.c.l.b16 %v1327
    %v1924 = vunpack.c.h.b16 %v1327
    %v1925 = vunpack.c.l.b16 %v1328
    %v1926 = vunpack.c.h.b16 %v1328
    %v1927 = vunpack.c.l.b16 %v1329
    %v1928 = vunpack.c.h.b16 %v1329
    %v1929 = vunpack.c.l.b16 %v1330
    %v1930 = vunpack.c.h.b16 %v1330
    %v1931 = vunpack.c.l.b16 %v1331
    %v1932 = vunpack.c.h.b16 %v1331
    %v1933 = vunpack.c.l.b16 %v1332
    %v1934 = vunpack.c.h.b16 %v1332
    %v1935 = vunpack.c.l.b16 %v1333
    %v1936 = vunpack.c.h.b16 %v1333
    %v1937 = vunpack.c.l.b16 %v1334
    %v1938 = vunpack.c.h.b16 %v1334
    %v1939 = vunpack.c.l.b16 %v1335
    %v1940 = vunpack.c.h.b16 %v1335
    %v1941 = vunpack.c.l.b16 %v1336
    %v1942 = vunpack.c.h.b16 %v1336
    %v1943 = vunpack.c.l.b16 %v1337
    %v1944 = vunpack.c.h.b16 %v1337
    %v1945 = vunpack.c.l.b16 %v1338
    %v1946 = vunpack.c.h.b16 %v1338
    %v1947 = vunpack.c.l.b16 %v1339
    %v1948 = vunpack.c.h.b16 %v1339
    %v1949 = vunpack.c.l.b16 %v1340
    %v1950 = vunpack.c.h.b16 %v1340
    %v1951 = vunpack.c.l.b16 %v1341
    %v1952 = vunpack.c.h.b16 %v1341
    %v1953 = vunpack.c.l.b16 %v1342
    %v1954 = vunpack.c.h.b16 %v1342
    %v1955 = vunpack.c.l.b16 %v1343
    %v1956 = vunpack.c.h.b16 %v1343
    %v1957 = vunpack.c.l.b16 %v1344
    %v1958 = vunpack.c.h.b16 %v1344
    %v1959 = vunpack.c.l.b16 %v1345
    %v1960 = vunpack.c.h.b16 %v1345
    %v1961 = vunpack.c.l.b16 %v1346
    %v1962 = vunpack.c.h.b16 %v1346
    %v1963 = vunpack.c.l.b16 %v1347
    %v1964 = vunpack.c.h.b16 %v1347
    %v1965 = vunpack.c.l.b16 %v1348
    %v1966 = vunpack.c.h.b16 %v1348
    %v1967 = vunpack.c.l.b16 %v1349
    %v1968 = vunpack.c.h.b16 %v1349
    %v1969 = vunpack.c.l.b16 %v1350
    %v1970 = vunpack.c.h.b16 %v1350
    %v1971 = vunpack.c.l.b16 %v1351
    %v1972 = vunpack.c.h.b16 %v1351
    %v1973 = vunpack.c.l.b16 %v1352
    %v1974 = vunpack.c.h.b16 %v1352
    %v1975 = vunpack.c.l.b16 %v1353
    %v1976 = vunpack.c.h.b16 %v1353
    %v1977 = vunpack.c.l.b16 %v1354
    %v1978 = vunpack.c.h.b16 %v1354
    %v1979 = vunpack.c.l.b16 %v1355
    %v1980 = vunpack.c.h.b16 %v1355
    %v1981 = vunpack.c.l.b16 %v1356
    %v1982 = vunpack.c.h.b16 %v1356
    %v1983 = vunpack.c.l.b16 %v1357
    %v1984 = vunpack.c.h.b16 %v1357
    %v1985 = vunpack.c.l.b16 %v1358
    %v1986 = vunpack.c.h.b16 %v1358
    %v1987 = vunpack.c.l.b16 %v1359
    %v1988 = vunpack.c.h.b16 %v1359
    %v1989 = vunpack.c.l.b16 %v1360
    %v1990 = vunpack.c.h.b16 %v1360
    %v1991 = vunpack.c.l.b16 %v1361
    %v1992 = vunpack.c.h.b16 %v1361
    %v1993 = vunpack.c.l.b16 %v1362
    %v1994 = vunpack.c.h.b16 %v1362
    %v1995 = vunpack.c.l.b16 %v1363
    %v1996 = vunpack.c.h.b16 %v1363
    %v1997 = vunpack.c.l.b16 %v1364
    %v1998 = vunpack.c.h.b16 %v1364
    %v1999 = vunpack.c.l.b16 %v1365
    %v2000 = vunpack.c.h.b16 %v1365
    %v2001 = vunpack.c.l.b16 %v1366
    %v2002 = vunpack.c.h.b16 %v1366
    %v2003 = vunpack.c.l.b16 %v1367
    %v2004 = vunpack.c.h.b16 %v1367
    %v2005 = vunpack.c.l.b16 %v1368
    %v2006 = vunpack.c.h.b16 %v1368
    %v2007 = vunpack.c.l.b16 %v1369
    %v2008 = vunpack.c.h.b16 %v1369
    %v2009 = vunpack.c.l.b16 %v1370
    %v2010 = vunpack.c.h.b16 %v1370
    %v2011 = vunpack.c.l.b16 %v1371
    %v2012 = vunpack.c.h.b16 %v1371
    %v2013 = vunpack.c.l.b16 %v1372
    %v2014 = vunpack.c.h.b16 %v1372
    %v2015 = vunpack.c.l.b16 %v1373
    %v2016 = vunpack.c.h.b16 %v1373
    %v2017 = vunpack.c.l.b16 %v1374
    %v2018 = vunpack.c.h.b16 %v1374
    %v2019 = vunpack.c.l.b16 %v1375
    %v2020 = vunpack.c.h.b16 %v1375
    %v2021 = vunpack.c.l.b16 %v1376
    %v2022 = vunpack.c.h.b16 %v1376
    %v2023 = vunpack.c.l.b16 %v1377
    %v2024 = vunpack.c.h.b16 %v1377
    %v2025 = vunpack.c.l.b16 %v1378
    %v2026 = vunpack.c.h.b16 %v1378
    %v2027 = vunpack.c.l.b16 %v1379
    %v2028 = vunpack.c.h.b16 %v1379
    %v2029 = vunpack.c.l.b16 %v1380
    %v2030 = vunpack.c.h.b16 %v1380
    %v2031 = vunpack.c.l.b16 %v1381
    %v2032 = vunpack.c.h.b16 %v1381
    %v2033 = vunpack.c.l.b16 %v1382
    %v2034 = vunpack.c.h.b16 %v1382
    %v2035 = vunpack.c.l.b16 %v1383
    %v2036 = vunpack.c.h.b16 %v1383
    %v2037 = vunpack.c.l.b16 %v1384
    %v2038 = vunpack.c.h.b16 %v1384
    %v2039 = vunpack.c.l.b16 %v1385
    %v2040 = vunpack.c.h.b16 %v1385
    %v2041 = vunpack.c.l.b16 %v1386
    %v2042 = vunpack.c.h.b16 %v1386
    %v2043 = vunpack.c.l.b16 %v1387
    %v2044 = vunpack.c.h.b16 %v1387
    %v2045 = vunpack.c.l.b16 %v1388
    %v2046 = vunpack.c.h.b16 %v1388
    %v2047 = vunpack.c.l.b16 %v1389
    %v2048 = vunpack.c.h.b16 %v1389
    %v2049 = vunpack.c.l.b16 %v1390
    %v2050 = vunpack.c.h.b16 %v1390
    %v2051 = vunpack.c.l.b16 %v1391
    %v2052 = vunpack.c.h.b16 %v1391
    %v2053 = vunpack.c.l.b16 %v1392
    %v2054 = vunpack.c.h.b16 %v1392
    %v2055 = vunpack.c.l.b16 %v1393
    %v2056 = vunpack.c.h.b16 %v1393
    %v2057 = vunpack.c.l.b16 %v1394
    %v2058 = vunpack.c.h.b16 %v1394
    %v2059 = vunpack.c.l.b16 %v1395
    %v2060 = vunpack.c.h.b16 %v1395
    %v2061 = vunpack.c.l.b16 %v1396
    %v2062 = vunpack.c.h.b16 %v1396
    %v2063 = vunpack.c.l.b16 %v1397
    %v2064 = vunpack.c.h.b16 %v1397
    %v2065 = vunpack.c.l.b16 %v1398
    %v2066 = vunpack.c.h.b16 %v1398
    %v2067 = vunpack.c.l.b16 %v1399
    %v2068 = vunpack.c.h.b16 %v1399
    %v2069 = vunpack.c.l.b16 %v1400
    %v2070 = vunpack.c.h.b16 %v1400
    %v2071 = vunpack.c.l.b16 %v1401
    %v2072 = vunpack.c.h.b16 %v1401
    %v2073 = vunpack.c.l.b16 %v1402
    %v2074 = vunpack.c.h.b16 %v1402
    %v2075 = vunpack.c.l.b16 %v1403
    %v2076 = vunpack.c.h.b16 %v1403
    %v2077 = vunpack.c.l.b16 %v1404
    %v2078 = vunpack.c.h.b16 %v1404
    %v2079 = vunpack.c.l.b16 %v1405
    %v2080 = vunpack.c.h.b16 %v1405
    %v2081 = vunpack.c.l.b16 %v1406
    %v2082 = vunpack.c.h.b16 %v1406
    %v2083 = vunpack.c.l.b16 %v1407
    %v2084 = vunpack.c.h.b16 %v1407
    %v2085 = vunpack.c.l.b16 %v1408
    %v2086 = vunpack.c.h.b16 %v1408
    %v2087 = vunpack.c.l.b16 %v1409
    %v2088 = vunpack.c.h.b16 %v1409
    %v2089 = vunpack.c.l.b16 %v1410
    %v2090 = vunpack.c.h.b16 %v1410
    %v2091 = vunpack.c.l.b16 %v1411
    %v2092 = vunpack.c.h.b16 %v1411
    %v2093 = vunpack.c.l.b16 %v1412
    %v2094 = vunpack.c.h.b16 %v1412
    %v2095 = vunpack.c.l.b16 %v1413
    %v2096 = vunpack.c.h.b16 %v1413
    %v2097 = vunpack.c.l.b16 %v1414
    %v2098 = vunpack.c.h.b16 %v1414
    %v2099 = vunpack.c.l.b16 %v1415
    %v2100 = vunpack.c.h.b16 %v1415
    %v2101 = vunpack.c.l.b16 %v1416
    %v2102 = vunpack.c.h.b16 %v1416
    %v2103 = vunpack.c.l.b16 %v1417
    %v2104 = vunpack.c.h.b16 %v1417
    %v2105 = vunpack.c.l.b16 %v1418
    %v2106 = vunpack.c.h.b16 %v1418
    %v2107 = vunpack.c.l.b16 %v1419
    %v2108 = vunpack.c.h.b16 %v1419
    %v2109 = vunpack.c.l.b16 %v1420
    %v2110 = vunpack.c.h.b16 %v1420
    %v2111 = vunpack.c.l.b16 %v1421
    %v2112 = vunpack.c.h.b16 %v1421
    %v2113 = vunpack.c.l.b16 %v1422
    %v2114 = vunpack.c.h.b16 %v1422
    %v2115 = vunpack.c.l.b16 %v1423
    %v2116 = vunpack.c.h.b16 %v1423
    %v2117 = vunpack.c.l.b16 %v1424
    %v2118 = vunpack.c.h.b16 %v1424
    %v2119 = vunpack.c.l.b16 %v1425
    %v2120 = vunpack.c.h.b16 %v1425
    %v2121 = vunpack.c.l.b16 %v1426
    %v2122 = vunpack.c.h.b16 %v1426
    %v2123 = vunpack.c.l.b16 %v1427
    %v2124 = vunpack.c.h.b16 %v1427
    %v2125 = vunpack.c.l.b16 %v1428
    %v2126 = vunpack.c.h.b16 %v1428
    %v2127 = vunpack.c.l.b16 %v1429
    %v2128 = vunpack.c.h.b16 %v1429
    %v2129 = vunpack.c.l.b16 %v1430
    %v2130 = vunpack.c.h.b16 %v1430
    %v2131 = vunpack.c.l.b16 %v1431
    %v2132 = vunpack.c.h.b16 %v1431
    %v2133 = vunpack.c.l.b16 %v1432
    %v2134 = vunpack.c.h.b16 %v1432
    %v2135 = vunpack.c.l.b16 %v1433
    %v2136 = vunpack.c.h.b16 %v1433
    %v2137 = vunpack.c.l.b16 %v1434
    %v2138 = vunpack.c.h.b16 %v1434
    %v2139 = vunpack.c.l.b16 %v1435
    %v2140 = vunpack.c.h.b16 %v1435
    %v2141 = vunpack.c.l.b16 %v1436
    %v2142 = vunpack.c.h.b16 %v1436
    %v2143 = vunpack.c.l.b16 %v1437
    %v2144 = vunpack.c.h.b16 %v1437
    %v2145 = vunpack.c.l.b16 %v1438
    %v2146 = vunpack.c.h.b16 %v1438
    %v2147 = vunpack.c.l.b16 %v1439
    %v2148 = vunpack.c.h.b16 %v1439
    %v2149 = vunpack.c.l.b16 %v1440
    %v2150 = vunpack.c.h.b16 %v1440
    %v2151 = vunpack.c.l.b16 %v1441
    %v2152 = vunpack.c.h.b16 %v1441
    %v2153 = vunpack.c.l.b16 %v1442
    %v2154 = vunpack.c.h.b16 %v1442
    %v2155 = vunpack.c.l.b16 %v1443
    %v2156 = vunpack.c.h.b16 %v1443
    %v2157 = vunpack.c.l.b16 %v1444
    %v2158 = vunpack.c.h.b16 %v1444
    %v2159 = vunpack.c.l.b16 %v1445
    %v2160 = vunpack.c.h.b16 %v1445
    %v2161 = vunpack.c.l.b16 %v1446
    %v2162 = vunpack.c.h.b16 %v1446
    %v2163 = vunpack.c.l.b16 %v1447
    %v2164 = vunpack.c.h.b16 %v1447
    %v2165 = vunpack.c.l.b16 %v1448
    %v2166 = vunpack.c.h.b16 %v1448
    %v2167 = vunpack.c.l.b16 %v1449
    %v2168 = vunpack.c.h.b16 %v1449
    %v2169 = vunpack.c.l.b16 %v1450
    %v2170 = vunpack.c.h.b16 %v1450
    %v2171 = vunpack.c.l.b16 %v1451
    %v2172 = vunpack.c.h.b16 %v1451
    %v2173 = vunpack.c.l.b16 %v1452
    %v2174 = vunpack.c.h.b16 %v1452
    %v2175 = vunpack.c.l.b16 %v1453
    %v2176 = vunpack.c.h.b16 %v1453
    %v2177 = vunpack.c.l.b16 %v1454
    %v2178 = vunpack.c.h.b16 %v1454
    %v2179 = vunpack.c.l.b16 %v1455
    %v2180 = vunpack.c.h.b16 %v1455
    %v2181 = vunpack.c.l.b16 %v1456
    %v2182 = vunpack.c.h.b16 %v1456
    %v2183 = vunpack.c.l.b16 %v1457
    %v2184 = vunpack.c.h.b16 %v1457
    %v2185 = vunpack.c.l.b16 %v1458
    %v2186 = vunpack.c.h.b16 %v1458
    %v2187 = vunpack.c.l.b16 %v1459
    %v2188 = vunpack.c.h.b16 %v1459
    %v2189 = vunpack.c.l.b16 %v1460
    %v2190 = vunpack.c.h.b16 %v1460
    %v2191 = vunpack.c.l.b16 %v1461
    %v2192 = vunpack.c.h.b16 %v1461
    %v2193 = vunpack.c.l.b16 %v1462
    %v2194 = vunpack.c.h.b16 %v1462
    %v2195 = vunpack.c.l.b16 %v1463
    %v2196 = vunpack.c.h.b16 %v1463
    %v2197 = vunpack.c.l.b16 %v1464
    %v2198 = vunpack.c.h.b16 %v1464
    %v2199 = vunpack.c.l.b16 %v1465
    %v2200 = vunpack.c.h.b16 %v1465
    %v2201 = vunpack.c.l.b16 %v1466
    %v2202 = vunpack.c.h.b16 %v1466
    %v2203 = vunpack.c.l.b16 %v1467
    %v2204 = vunpack.c.h.b16 %v1467
    %v2205 = vunpack.c.l.b16 %v1468
    %v2206 = vunpack.c.h.b16 %v1468
    %v2207 = vunpack.c.l.b16 %v1469
    %v2208 = vunpack.c.h.b16 %v1469
    %v2209 = vunpack.c.l.b16 %v1470
    %v2210 = vunpack.c.h.b16 %v1470
    %v2211 = vunpack.c.l.b16 %v1471
    %v2212 = vunpack.c.h.b16 %v1471
    %v2213 = vunpack.c.l.b16 %v1472
    %v2214 = vunpack.c.h.b16 %v1472
    %v2215 = vunpack.c.l.b16 %v1473
    %v2216 = vunpack.c.h.b16 %v1473
    %v2217 = vunpack.c.l.b16 %v1474
    %v2218 = vunpack.c.h.b16 %v1474
    %v2219 = vunpack.c.l.b16 %v1475
    %v2220 = vunpack.c.h.b16 %v1475
    %v2221 = vunpack.c.l.b16 %v1476
    %v2222 = vunpack.c.h.b16 %v1476
    %v2223 = vunpack.c.l.b16 %v1477
    %v2224 = vunpack.c.h.b16 %v1477
    %v2225 = vunpack.c.l.b16 %v1478
    %v2226 = vunpack.c.h.b16 %v1478
    %v2227 = vunpack.c.l.b16 %v1479
    %v2228 = vunpack.c.h.b16 %v1479
    %v2229 = vunpack.c.l.b16 %v1480
    %v2230 = vunpack.c.h.b16 %v1480
    %v2231 = vunpack.c.l.b16 %v1481
    %v2232 = vunpack.c.h.b16 %v1481
    %v2233 = vunpack.c.l.b16 %v1482
    %v2234 = vunpack.c.h.b16 %v1482
    %v2235 = vunpack.c.l.b16 %v1483
    %v2236 = vunpack.c.h.b16 %v1483
    %v2237 = vunpack.c.l.b16 %v1484
    %v2238 = vunpack.c.h.b16 %v1484
    %v2239 = vunpack.c.l.b16 %v1485
    %v2240 = vunpack.c.h.b16 %v1485
    %v2241 = vunpack.c.l.b16 %v1486
    %v2242 = vunpack.c.h.b16 %v1486
    %v2243 = vunpack.c.l.b16 %v1487
    %v2244 = vunpack.c.h.b16 %v1487
    %v2245 = vunpack.c.l.b16 %v1488
    %v2246 = vunpack.c.h.b16 %v1488
    %v2247 = vunpack.c.l.b16 %v1489
    %v2248 = vunpack.c.h.b16 %v1489
    %v2249 = vunpack.c.l.b16 %v1490
    %v2250 = vunpack.c.h.b16 %v1490
    %v2251 = vunpack.c.l.b16 %v1491
    %v2252 = vunpack.c.h.b16 %v1491
    %v2253 = vunpack.c.l.b16 %v1492
    %v2254 = vunpack.c.h.b16 %v1492
    %v2255 = vunpack.c.l.b16 %v1493
    %v2256 = vunpack.c.h.b16 %v1493
    %v2257 = vunpack.c.l.b16 %v1494
    %v2258 = vunpack.c.h.b16 %v1494
    %v2259 = vunpack.c.l.b16 %v1495
    %v2260 = vunpack.c.h.b16 %v1495
    %v2261 = vunpack.c.l.b16 %v1496
    %v2262 = vunpack.c.h.b16 %v1496
    %v2263 = vunpack.c.l.b16 %v1497
    %v2264 = vunpack.c.h.b16 %v1497
    %v2265 = vunpack.c.l.b16 %v1498
    %v2266 = vunpack.c.h.b16 %v1498
    %v2267 = vunpack.c.l.b16 %v1499
    %v2268 = vunpack.c.h.b16 %v1499
    %v2269 = vunpack.c.l.b16 %v1500
    %v2270 = vunpack.c.h.b16 %v1500
    %v2271 = vunpack.c.l.b16 %v1501
    %v2272 = vunpack.c.h.b16 %v1501
    %v2273 = vunpack.c.l.b16 %v1502
    %v2274 = vunpack.c.h.b16 %v1502
    %v2275 = vunpack.c.l.b16 %v1503
    %v2276 = vunpack.c.h.b16 %v1503
    %v2277 = vunpack.c.l.b16 %v1504
    %v2278 = vunpack.c.h.b16 %v1504
    %v2279 = vunpack.c.l.b16 %v1505
    %v2280 = vunpack.c.h.b16 %v1505
    %v2281 = vunpack.c.l.b16 %v1506
    %v2282 = vunpack.c.h.b16 %v1506
    %v2283 = vunpack.c.l.b16 %v1507
    %v2284 = vunpack.c.h.b16 %v1507
    %v2285 = vunpack.c.l.b16 %v1508
    %v2286 = vunpack.c.h.b16 %v1508
    %v2287 = vunpack.c.l.b16 %v1509
    %v2288 = vunpack.c.h.b16 %v1509
    %v2289 = vunpack.c.l.b16 %v1510
    %v2290 = vunpack.c.h.b16 %v1510
    %v2291 = vunpack.c.l.b16 %v1511
    %v2292 = vunpack.c.h.b16 %v1511
    %v2293 = vunpack.c.l.b16 %v1512
    %v2294 = vunpack.c.h.b16 %v1512
    %v2295 = vunpack.c.l.b16 %v1513
    %v2296 = vunpack.c.h.b16 %v1513
    %v2297 = vunpack.c.l.b16 %v1514
    %v2298 = vunpack.c.h.b16 %v1514
    %v2299 = vunpack.c.l.b16 %v1515
    %v2300 = vunpack.c.h.b16 %v1515
    %v2301 = vunpack.c.l.b16 %v1516
    %v2302 = vunpack.c.h.b16 %v1516
    %v2303 = vpack.c.b16 %v1799, %v1791
    %v2304 = vpack.c.b16 %v1800, %v1792
    %v2305 = vpack.c.b16 %v1801, %v1793
    %v2306 = vpack.c.b16 %v1802, %v1794
    %v2307 = vpack.c.b16 %v1803, %v1795
    %v2308 = vpack.c.b16 %v1804, %v1796
    %v2309 = vpack.c.b16 %v1805, %v1797
    %v2310 = vpack.c.b16 %v1806, %v1798
    %v2311 = vpack.c.b16 %v1815, %v1807
    %v2312 = vpack.c.b16 %v1816, %v1808
    %v2313 = vpack.c.b16 %v1817, %v1809
    %v2314 = vpack.c.b16 %v1818, %v1810
    %v2315 = vpack.c.b16 %v1819, %v1811
    %v2316 = vpack.c.b16 %v1820, %v1812
    %v2317 = vpack.c.b16 %v1821, %v1813
    %v2318 = vpack.c.b16 %v1822, %v1814
    %v2319 = vpack.c.b16 %v1831, %v1823
    %v2320 = vpack.c.b16 %v1832, %v1824
    %v2321 = vpack.c.b16 %v1833, %v1825
    %v2322 = vpack.c.b16 %v1834, %v1826
    %v2323 = vpack.c.b16 %v1835, %v1827
    %v2324 = vpack.c.b16 %v1836, %v1828
    %v2325 = vpack.c.b16 %v1837, %v1829
    %v2326 = vpack.c.b16 %v1838, %v1830
    %v2327 = vpack.c.b16 %v1847, %v1839
    %v2328 = vpack.c.b16 %v1848, %v1840
    %v2329 = vpack.c.b16 %v1849, %v1841
    %v2330 = vpack.c.b16 %v1850, %v1842
    %v2331 = vpack.c.b16 %v1851, %v1843
    %v2332 = vpack.c.b16 %v1852, %v1844
    %v2333 = vpack.c.b16 %v1853, %v1845
    %v2334 = vpack.c.b16 %v1854, %v1846
    %v2335 = vpack.c.b16 %v1863, %v1855
    %v2336 = vpack.c.b16 %v1864, %v1856
    %v2337 = vpack.c.b16 %v1865, %v1857
    %v2338 = vpack.c.b16 %v1866, %v1858
    %v2339 = vpack.c.b16 %v1867, %v1859
    %v2340 = vpack.c.b16 %v1868, %v1860
    %v2341 = vpack.c.b16 %v1869, %v1861
    %v2342 = vpack.c.b16 %v1870, %v1862
    %v2343 = vpack.c.b16 %v1879, %v1871
    %v2344 = vpack.c.b16 %v1880, %v1872
    %v2345 = vpack.c.b16 %v1881, %v1873
    %v2346 = vpack.c.b16 %v1882, %v1874
    %v2347 = vpack.c.b16 %v1883, %v1875
    %v2348 = vpack.c.b16 %v1884, %v1876
    %v2349 = vpack.c.b16 %v1885, %v1877
    %v2350 = vpack.c.b16 %v1886, %v1878
    %v2351 = vpack.c.b16 %v1895, %v1887
    %v2352 = vpack.c.b16 %v1896, %v1888
    %v2353 = vpack.c.b16 %v1897, %v1889
    %v2354 = vpack.c.b16 %v1898, %v1890
    %v2355 = vpack.c.b16 %v1899, %v1891
    %v2356 = vpack.c.b16 %v1900, %v1892
    %v2357 = vpack.c.b16 %v1901, %v1893
    %v2358 = vpack.c.b16 %v1902, %v1894
    %v2359 = vpack.c.b16 %v1911, %v1903
    %v2360 = vpack.c.b16 %v1912, %v1904
    %v2361 = vpack.c.b16 %v1913, %v1905
    %v2362 = vpack.c.b16 %v1914, %v1906
    %v2363 = vpack.c.b16 %v1915, %v1907
    %v2364 = vpack.c.b16 %v1916, %v1908
    %v2365 = vpack.c.b16 %v1917, %v1909
    %v2366 = vpack.c.b16 %v1918, %v1910
    %v2367 = vpack.c.b16 %v1927, %v1919
    %v2368 = vpack.c.b16 %v1928, %v1920
    %v2369 = vpack.c.b16 %v1929, %v1921
    %v2370 = vpack.c.b16 %v1930, %v1922
    %v2371 = vpack.c.b16 %v1931, %v1923
    %v2372 = vpack.c.b16 %v1932, %v1924
    %v2373 = vpack.c.b16 %v1933, %v1925
    %v2374 = vpack.c.b16 %v1934, %v1926
    %v2375 = vpack.c.b16 %v1943, %v1935
    %v2376 = vpack.c.b16 %v1944, %v1936
    %v2377 = vpack.c.b16 %v1945, %v1937
    %v2378 = vpack.c.b16 %v1946, %v1938
    %v2379 = vpack.c.b16 %v1947, %v1939
    %v2380 = vpack.c.b16 %v1948, %v1940
    %v2381 = vpack.c.b16 %v1949, %v1941
    %v2382 = vpack.c.b16 %v1950, %v1942
    %v2383 = vpack.c.b16 %v1959, %v1951
    %v2384 = vpack.c.b16 %v1960, %v1952
    %v2385 = vpack.c.b16 %v1961, %v1953
    %v2386 = vpack.c.b16 %v1962, %v1954
    %v2387 = vpack.c.b16 %v1963, %v1955
    %v2388 = vpack.c.b16 %v1964, %v1956
    %v2389 = vpack.c.b16 %v1965, %v1957
    %v2390 = vpack.c.b16 %v1966, %v1958
    %v2391 = vpack.c.b16 %v1975, %v1967
    %v2392 = vpack.c.b16 %v1976, %v1968
    %v2393 = vpack.c.b16 %v1977, %v1969
    %v2394 = vpack.c.b16 %v1978, %v1970
    %v2395 = vpack.c.b16 %v1979, %v1971
    %v2396 = vpack.c.b16 %v1980, %v1972
    %v2397 = vpack.c.b16 %v1981, %v1973
    %v2398 = vpack.c.b16 %v1982, %v1974
    %v2399 = vpack.c.b16 %v1991, %v1983
    %v2400 = vpack.c.b16 %v1992, %v1984
    %v2401 = vpack.c.b16 %v1993, %v1985
    %v2402 = vpack.c.b16 %v1994, %v1986
    %v2403 = vpack.c.b16 %v1995, %v1987
    %v2404 = vpack.c.b16 %v1996, %v1988
    %v2405 = vpack.c.b16 %v1997, %v1989
    %v2406 = vpack.c.b16 %v1998, %v1990
    %v2407 = vpack.c.b16 %v2007, %v1999
    %v2408 = vpack.c.b16 %v2008, %v2000
    %v2409 = vpack.c.b16 %v2009, %v2001
    %v2410 = vpack.c.b16 %v2010, %v2002
    %v2411 = vpack.c.b16 %v2011, %v2003
    %v2412 = vpack.c.b16 %v2012, %v2004
    %v2413 = vpack.c.b16 %v2013, %v2005
    %v2414 = vpack.c.b16 %v2014, %v2006
    %v2415 = vpack.c.b16 %v2023, %v2015
    %v2416 = vpack.c.b16 %v2024, %v2016
    %v2417 = vpack.c.b16 %v2025, %v2017
    %v2418 = vpack.c.b16 %v2026, %v2018
    %v2419 = vpack.c.b16 %v2027, %v2019
    %v2420 = vpack.c.b16 %v2028, %v2020
    %v2421 = vpack.c.b16 %v2029, %v2021
    %v2422 = vpack.c.b16 %v2030, %v2022
    %v2423 = vpack.c.b16 %v2039, %v2031
    %v2424 = vpack.c.b16 %v2040, %v2032
    %v2425 = vpack.c.b16 %v2041, %v2033
    %v2426 = vpack.c.b16 %v2042, %v2034
    %v2427 = vpack.c.b16 %v2043, %v2035
    %v2428 = vpack.c.b16 %v2044, %v2036
    %v2429 = vpack.c.b16 %v2045, %v2037
    %v2430 = vpack.c.b16 %v2046, %v2038
    %v2431 = vpack.c.b16 %v2055, %v2047
    %v2432 = vpack.c.b16 %v2056, %v2048
    %v2433 = vpack.c.b16 %v2057, %v2049
    %v2434 = vpack.c.b16 %v2058, %v2050
    %v2435 = vpack.c.b16 %v2059, %v2051
    %v2436 = vpack.c.b16 %v2060, %v2052
    %v2437 = vpack.c.b16 %v2061, %v2053
    %v2438 = vpack.c.b16 %v2062, %v2054
    %v2439 = vpack.c.b16 %v2071, %v2063
    %v2440 = vpack.c.b16 %v2072, %v2064
    %v2441 = vpack.c.b16 %v2073, %v2065
    %v2442 = vpack.c.b16 %v2074, %v2066
    %v2443 = vpack.c.b16 %v2075, %v2067
    %v2444 = vpack.c.b16 %v2076, %v2068
    %v2445 = vpack.c.b16 %v2077, %v2069
    %v2446 = vpack.c.b16 %v2078, %v2070
    %v2447 = vpack.c.b16 %v2087, %v2079
    %v2448 = vpack.c.b16 %v2088, %v2080
    %v2449 = vpack.c.b16 %v2089, %v2081
    %v2450 = vpack.c.b16 %v2090, %v2082
    %v2451 = vpack.c.b16 %v2091, %v2083
    %v2452 = vpack.c.b16 %v2092, %v2084
    %v2453 = vpack.c.b16 %v2093, %v2085
    %v2454 = vpack.c.b16 %v2094, %v2086
    %v2455 = vpack.c.b16 %v2103, %v2095
    %v2456 = vpack.c.b16 %v2104, %v2096
    %v2457 = vpack.c.b16 %v2105, %v2097
    %v2458 = vpack.c.b16 %v2106, %v2098
    %v2459 = vpack.c.b16 %v2107, %v2099
    %v2460 = vpack.c.b16 %v2108, %v2100
    %v2461 = vpack.c.b16 %v2109, %v2101
    %v2462 = vpack.c.b16 %v2110, %v2102
    %v2463 = vpack.c.b16 %v2119, %v2111
    %v2464 = vpack.c.b16 %v2120, %v2112
    %v2465 = vpack.c.b16 %v2121, %v2113
    %v2466 = vpack.c.b16 %v2122, %v2114
    %v2467 = vpack.c.b16 %v2123, %v2115
    %v2468 = vpack.c.b16 %v2124, %v2116
    %v2469 = vpack.c.b16 %v2125, %v2117
    %v2470 = vpack.c.b16 %v2126, %v2118
    %v2471 = vpack.c.b16 %v2135, %v2127
    %v2472 = vpack.c.b16 %v2136, %v2128
    %v2473 = vpack.c.b16 %v2137, %v2129
    %v2474 = vpack.c.b16 %v2138, %v2130
    %v2475 = vpack.c.b16 %v2139, %v2131
    %v2476 = vpack.c.b16 %v2140, %v2132
    %v2477 = vpack.c.b16 %v2141, %v2133
    %v2478 = vpack.c.b16 %v2142, %v2134
    %v2479 = vpack.c.b16 %v2151, %v2143
    %v2480 = vpack.c.b16 %v2152, %v2144
    %v2481 = vpack.c.b16 %v2153, %v2145
    %v2482 = vpack.c.b16 %v2154, %v2146
    %v2483 = vpack.c.b16 %v2155, %v2147
    %v2484 = vpack.c.b16 %v2156, %v2148
    %v2485 = vpack.c.b16 %v2157, %v2149
    %v2486 = vpack.c.b16 %v2158, %v2150
    %v2487 = vpack.c.b16 %v2167, %v2159
    %v2488 = vpack.c.b16 %v2168, %v2160
    %v2489 = vpack.c.b16 %v2169, %v2161
    %v2490 = vpack.c.b16 %v2170, %v2162
    %v2491 = vpack.c.b16 %v2171, %v2163
    %v2492 = vpack.c.b16 %v2172, %v2164
    %v2493 = vpack.c.b16 %v2173, %v2165
    %v2494 = vpack.c.b16 %v2174, %v2166
    %v2495 = vpack.c.b16 %v2183, %v2175
    %v2496 = vpack.c.b16 %v2184, %v2176
    %v2497 = vpack.c.b16 %v2185, %v2177
    %v2498 = vpack.c.b16 %v2186, %v2178
    %v2499 = vpack.c.b16 %v2187, %v2179
    %v2500 = vpack.c.b16 %v2188, %v2180
    %v2501 = vpack.c.b16 %v2189, %v2181
    %v2502 = vpack.c.b16 %v2190, %v2182
    %v2503 = vpack.c.b16 %v2199, %v2191
    %v2504 = vpack.c.b16 %v2200, %v2192
    %v2505 = vpack.c.b16 %v2201, %v2193
    %v2506 = vpack.c.b16 %v2202, %v2194
    %v2507 = vpack.c.b16 %v2203, %v2195
    %v2508 = vpack.c.b16 %v2204, %v2196
    %v2509 = vpack.c.b16 %v2205, %v2197
    %v2510 = vpack.c.b16 %v2206, %v2198
    %v2511 = vpack.c.b16 %v2215, %v2207
    %v2512 = vpack.c.b16 %v2216, %v2208
    %v2513 = vpack.c.b16 %v2217, %v2209
    %v2514 = vpack.c.b16 %v2218, %v2210
    %v2515 = vpack.c.b16 %v2219, %v2211
    %v2516 = vpack.c.b16 %v2220, %v2212
    %v2517 = vpack.c.b16 %v2221, %v2213
    %v2518 = vpack.c.b16 %v2222, %v2214
    %v2519 = vpack.c.b16 %v2231, %v2223
    %v2520 = vpack.c.b16 %v2232, %v2224
    %v2521 = vpack.c.b16 %v2233, %v2225
    %v2522 = vpack.c.b16 %v2234, %v2226
    %v2523 = vpack.c.b16 %v2235, %v2227
    %v2524 = vpack.c.b16 %v2236, %v2228
    %v2525 = vpack.c.b16 %v2237, %v2229
    %v2526 = vpack.c.b16 %v2238, %v2230
    %v2527 = vpack.c.b16 %v2247, %v2239
    %v2528 = vpack.c.b16 %v2248, %v2240
    %v2529 = vpack.c.b16 %v2249, %v2241
    %v2530 = vpack.c.b16 %v2250, %v2242
    %v2531 = vpack.c.b16 %v2251, %v2243
    %v2532 = vpack.c.b16 %v2252, %v2244
    %v2533 = vpack.c.b16 %v2253, %v2245
    %v2534 = vpack.c.b16 %v2254, %v2246
    %v2535 = vpack.c.b16 %v2263, %v2255
    %v2536 = vpack.c.b16 %v2264, %v2256
    %v2537 = vpack.c.b16 %v2265, %v2257
    %v2538 = vpack.c.b16 %v2266, %v2258
    %v2539 = vpack.c.b16 %v2267, %v2259
    %v2540 = vpack.c.b16 %v2268, %v2260
    %v2541 = vpack.c.b16 %v2269, %v2261
    %v2542 = vpack.c.b16 %v2270, %v2262
    %v2543 = vpack.c.b16 %v2279, %v2271
    %v2544 = vpack.c.b16 %v2280, %v2272
    %v2545 = vpack.c.b16 %v2281, %v2273
    %v2546 = vpack.c.b16 %v2282, %v2274
    %v2547 = vpack.c.b16 %v2283, %v2275
    %v2548 = vpack.c.b16 %v2284, %v2276
    %v2549 = vpack.c.b16 %v2285, %v2277
    %v2550 = vpack.c.b16 %v2286, %v2278
    %v2551 = vpack.c.b16 %v2295, %v2287
    %v2552 = vpack.c.b16 %v2296, %v2288
    %v2553 = vpack.c.b16 %v2297, %v2289
    %v2554 = vpack.c.b16 %v2298, %v2290
    %v2555 = vpack.c.b16 %v2299, %v2291
    %v2556 = vpack.c.b16 %v2300, %v2292
    %v2557 = vpack.c.b16 %v2301, %v2293
    %v2558 = vpack.c.b16 %v2302, %v2294
    %2815 = vmatpush.bf16.msra.mxu0 %v2359
    %2816 = vmatpush.bf16.msra.mxu0 %v2351
    %2817 = vmatpush.bf16.msra.mxu0 %v2343
    %2818 = vmatpush.bf16.msra.mxu0 %v2335
    %2819 = vmatpush.bf16.msra.mxu0 %v2327
    %2820 = vmatpush.bf16.msra.mxu0 %v2319
    %2821 = vmatpush.bf16.msra.mxu0 %v2311
    %2822 = vmatpush.bf16.msra.mxu0 %v2303
    %2823 = vmatmul.bf16.gmra.mxu0 %v1257
    %v2824 = vpop.f32.mrf.mxu0
    %v2825 = vadd.f32 %v1519, %v2824
    %v2826 = vpop.f32.mrf.mxu0
    %2827 = vdwg.mxu0
    %2828 = vmatpush.bf16.msra.mxu0 %v2423
    %2829 = vmatpush.bf16.msra.mxu0 %v2415
    %2830 = vmatpush.bf16.msra.mxu0 %v2407
    %2831 = vmatpush.bf16.msra.mxu0 %v2399
    %2832 = vmatpush.bf16.msra.mxu0 %v2391
    %2833 = vmatpush.bf16.msra.mxu0 %v2383
    %2834 = vmatpush.bf16.msra.mxu0 %v2375
    %2835 = vmatpush.bf16.msra.mxu0 %v2367
    %2836 = vmatmul.bf16.gmra.mxu0 %v1258
    %v2837 = vpop.f32.mrf.mxu0
    %v2838 = vadd.f32 %v2825, %v2837
    %v2839 = vpop.f32.mrf.mxu0
    %2840 = vdwg.mxu0
    %2841 = vmatpush.bf16.msra.mxu0 %v2487
    %2842 = vmatpush.bf16.msra.mxu0 %v2479
    %2843 = vmatpush.bf16.msra.mxu0 %v2471
    %2844 = vmatpush.bf16.msra.mxu0 %v2463
    %2845 = vmatpush.bf16.msra.mxu0 %v2455
    %2846 = vmatpush.bf16.msra.mxu0 %v2447
    %2847 = vmatpush.bf16.msra.mxu0 %v2439
    %2848 = vmatpush.bf16.msra.mxu0 %v2431
    %2849 = vmatmul.bf16.gmra.mxu0 %v1259
    %v2850 = vpop.f32.mrf.mxu0
    %v2851 = vadd.f32 %v2838, %v2850
    %v2852 = vpop.f32.mrf.mxu0
    %2853 = vdwg.mxu0
    %2854 = vmatpush.bf16.msra.mxu0 %v2551
    %2855 = vmatpush.bf16.msra.mxu0 %v2543
    %2856 = vmatpush.bf16.msra.mxu0 %v2535
    %2857 = vmatpush.bf16.msra.mxu0 %v2527
    %2858 = vmatpush.bf16.msra.mxu0 %v2519
    %2859 = vmatpush.bf16.msra.mxu0 %v2511
    %2860 = vmatpush.bf16.msra.mxu0 %v2503
    %2861 = vmatpush.bf16.msra.mxu0 %v2495
    %2862 = vmatmul.bf16.gmra.mxu0 %v1260
    %v2863 = vpop.f32.mrf.mxu0
    %v2864 = vadd.f32 %v2851, %v2863
    %v2865 = vpop.f32.mrf.mxu0
    %2866 = vdwg.mxu0
    %2867 = vmatpush.bf16.msra.mxu0 %v2360
    %2868 = vmatpush.bf16.msra.mxu0 %v2352
    %2869 = vmatpush.bf16.msra.mxu0 %v2344
    %2870 = vmatpush.bf16.msra.mxu0 %v2336
    %2871 = vmatpush.bf16.msra.mxu0 %v2328
    %2872 = vmatpush.bf16.msra.mxu0 %v2320
    %2873 = vmatpush.bf16.msra.mxu0 %v2312
    %2874 = vmatpush.bf16.msra.mxu0 %v2304
    %2875 = vmatmul.bf16.gmra.mxu0 %v1257
    %v2876 = vpop.f32.mrf.mxu0
    %v2877 = vadd.f32 %v1520, %v2876
    %v2878 = vpop.f32.mrf.mxu0
    %2879 = vdwg.mxu0
    %2880 = vmatpush.bf16.msra.mxu0 %v2424
    %2881 = vmatpush.bf16.msra.mxu0 %v2416
    %2882 = vmatpush.bf16.msra.mxu0 %v2408
    %2883 = vmatpush.bf16.msra.mxu0 %v2400
    %2884 = vmatpush.bf16.msra.mxu0 %v2392
    %2885 = vmatpush.bf16.msra.mxu0 %v2384
    %2886 = vmatpush.bf16.msra.mxu0 %v2376
    %2887 = vmatpush.bf16.msra.mxu0 %v2368
    %2888 = vmatmul.bf16.gmra.mxu0 %v1258
    %v2889 = vpop.f32.mrf.mxu0
    %v2890 = vadd.f32 %v2877, %v2889
    %v2891 = vpop.f32.mrf.mxu0
    %2892 = vdwg.mxu0
    %2893 = vmatpush.bf16.msra.mxu0 %v2488
    %2894 = vmatpush.bf16.msra.mxu0 %v2480
    %2895 = vmatpush.bf16.msra.mxu0 %v2472
    %2896 = vmatpush.bf16.msra.mxu0 %v2464
    %2897 = vmatpush.bf16.msra.mxu0 %v2456
    %2898 = vmatpush.bf16.msra.mxu0 %v2448
    %2899 = vmatpush.bf16.msra.mxu0 %v2440
    %2900 = vmatpush.bf16.msra.mxu0 %v2432
    %2901 = vmatmul.bf16.gmra.mxu0 %v1259
    %v2902 = vpop.f32.mrf.mxu0
    %v2903 = vadd.f32 %v2890, %v2902
    %v2904 = vpop.f32.mrf.mxu0
    %2905 = vdwg.mxu0
    %2906 = vmatpush.bf16.msra.mxu0 %v2552
    %2907 = vmatpush.bf16.msra.mxu0 %v2544
    %2908 = vmatpush.bf16.msra.mxu0 %v2536
    %2909 = vmatpush.bf16.msra.mxu0 %v2528
    %2910 = vmatpush.bf16.msra.mxu0 %v2520
    %2911 = vmatpush.bf16.msra.mxu0 %v2512
    %2912 = vmatpush.bf16.msra.mxu0 %v2504
    %2913 = vmatpush.bf16.msra.mxu0 %v2496
    %2914 = vmatmul.bf16.gmra.mxu0 %v1260
    %v2915 = vpop.f32.mrf.mxu0
    %v2916 = vadd.f32 %v2903, %v2915
    %v2917 = vpop.f32.mrf.mxu0
    %2918 = vdwg.mxu0
    %2919 = vmatpush.bf16.msra.mxu0 %v2361
    %2920 = vmatpush.bf16.msra.mxu0 %v2353
    %2921 = vmatpush.bf16.msra.mxu0 %v2345
    %2922 = vmatpush.bf16.msra.mxu0 %v2337
    %2923 = vmatpush.bf16.msra.mxu0 %v2329
    %2924 = vmatpush.bf16.msra.mxu0 %v2321
    %2925 = vmatpush.bf16.msra.mxu0 %v2313
    %2926 = vmatpush.bf16.msra.mxu0 %v2305
    %2927 = vmatmul.bf16.gmra.mxu0 %v1257
    %v2928 = vpop.f32.mrf.mxu0
    %v2929 = vadd.f32 %v1521, %v2928
    %v2930 = vpop.f32.mrf.mxu0
    %2931 = vdwg.mxu0
    %2932 = vmatpush.bf16.msra.mxu0 %v2425
    %2933 = vmatpush.bf16.msra.mxu0 %v2417
    %2934 = vmatpush.bf16.msra.mxu0 %v2409
    %2935 = vmatpush.bf16.msra.mxu0 %v2401
    %2936 = vmatpush.bf16.msra.mxu0 %v2393
    %2937 = vmatpush.bf16.msra.mxu0 %v2385
    %2938 = vmatpush.bf16.msra.mxu0 %v2377
    %2939 = vmatpush.bf16.msra.mxu0 %v2369
    %2940 = vmatmul.bf16.gmra.mxu0 %v1258
    %v2941 = vpop.f32.mrf.mxu0
    %v2942 = vadd.f32 %v2929, %v2941
    %v2943 = vpop.f32.mrf.mxu0
    %2944 = vdwg.mxu0
    %2945 = vmatpush.bf16.msra.mxu0 %v2489
    %2946 = vmatpush.bf16.msra.mxu0 %v2481
    %2947 = vmatpush.bf16.msra.mxu0 %v2473
    %2948 = vmatpush.bf16.msra.mxu0 %v2465
    %2949 = vmatpush.bf16.msra.mxu0 %v2457
    %2950 = vmatpush.bf16.msra.mxu0 %v2449
    %2951 = vmatpush.bf16.msra.mxu0 %v2441
    %2952 = vmatpush.bf16.msra.mxu0 %v2433
    %2953 = vmatmul.bf16.gmra.mxu0 %v1259
    %v2954 = vpop.f32.mrf.mxu0
    %v2955 = vadd.f32 %v2942, %v2954
    %v2956 = vpop.f32.mrf.mxu0
    %2957 = vdwg.mxu0
    %2958 = vmatpush.bf16.msra.mxu0 %v2553
    %2959 = vmatpush.bf16.msra.mxu0 %v2545
    %2960 = vmatpush.bf16.msra.mxu0 %v2537
    %2961 = vmatpush.bf16.msra.mxu0 %v2529
    %2962 = vmatpush.bf16.msra.mxu0 %v2521
    %2963 = vmatpush.bf16.msra.mxu0 %v2513
    %2964 = vmatpush.bf16.msra.mxu0 %v2505
    %2965 = vmatpush.bf16.msra.mxu0 %v2497
    %2966 = vmatmul.bf16.gmra.mxu0 %v1260
    %v2967 = vpop.f32.mrf.mxu0
    %v2968 = vadd.f32 %v2955, %v2967
    %v2969 = vpop.f32.mrf.mxu0
    %2970 = vdwg.mxu0
    %2971 = vmatpush.bf16.msra.mxu0 %v2362
    %2972 = vmatpush.bf16.msra.mxu0 %v2354
    %2973 = vmatpush.bf16.msra.mxu0 %v2346
    %2974 = vmatpush.bf16.msra.mxu0 %v2338
    %2975 = vmatpush.bf16.msra.mxu0 %v2330
    %2976 = vmatpush.bf16.msra.mxu0 %v2322
    %2977 = vmatpush.bf16.msra.mxu0 %v2314
    %2978 = vmatpush.bf16.msra.mxu0 %v2306
    %2979 = vmatmul.bf16.gmra.mxu0 %v1257
    %v2980 = vpop.f32.mrf.mxu0
    %v2981 = vadd.f32 %v1522, %v2980
    %v2982 = vpop.f32.mrf.mxu0
    %2983 = vdwg.mxu0
    %2984 = vmatpush.bf16.msra.mxu0 %v2426
    %2985 = vmatpush.bf16.msra.mxu0 %v2418
    %2986 = vmatpush.bf16.msra.mxu0 %v2410
    %2987 = vmatpush.bf16.msra.mxu0 %v2402
    %2988 = vmatpush.bf16.msra.mxu0 %v2394
    %2989 = vmatpush.bf16.msra.mxu0 %v2386
    %2990 = vmatpush.bf16.msra.mxu0 %v2378
    %2991 = vmatpush.bf16.msra.mxu0 %v2370
    %2992 = vmatmul.bf16.gmra.mxu0 %v1258
    %v2993 = vpop.f32.mrf.mxu0
    %v2994 = vadd.f32 %v2981, %v2993
    %v2995 = vpop.f32.mrf.mxu0
    %2996 = vdwg.mxu0
    %2997 = vmatpush.bf16.msra.mxu0 %v2490
    %2998 = vmatpush.bf16.msra.mxu0 %v2482
    %2999 = vmatpush.bf16.msra.mxu0 %v2474
    %3000 = vmatpush.bf16.msra.mxu0 %v2466
    %3001 = vmatpush.bf16.msra.mxu0 %v2458
    %3002 = vmatpush.bf16.msra.mxu0 %v2450
    %3003 = vmatpush.bf16.msra.mxu0 %v2442
    %3004 = vmatpush.bf16.msra.mxu0 %v2434
    %3005 = vmatmul.bf16.gmra.mxu0 %v1259
    %v3006 = vpop.f32.mrf.mxu0
    %v3007 = vadd.f32 %v2994, %v3006
    %v3008 = vpop.f32.mrf.mxu0
    %3009 = vdwg.mxu0
    %3010 = vmatpush.bf16.msra.mxu0 %v2554
    %3011 = vmatpush.bf16.msra.mxu0 %v2546
    %3012 = vmatpush.bf16.msra.mxu0 %v2538
    %3013 = vmatpush.bf16.msra.mxu0 %v2530
    %3014 = vmatpush.bf16.msra.mxu0 %v2522
    %3015 = vmatpush.bf16.msra.mxu0 %v2514
    %3016 = vmatpush.bf16.msra.mxu0 %v2506
    %3017 = vmatpush.bf16.msra.mxu0 %v2498
    %3018 = vmatmul.bf16.gmra.mxu0 %v1260
    %v3019 = vpop.f32.mrf.mxu0
    %v3020 = vadd.f32 %v3007, %v3019
    %v3021 = vpop.f32.mrf.mxu0
    %3022 = vdwg.mxu0
    %3023 = vmatpush.bf16.msra.mxu0 %v2363
    %3024 = vmatpush.bf16.msra.mxu0 %v2355
    %3025 = vmatpush.bf16.msra.mxu0 %v2347
    %3026 = vmatpush.bf16.msra.mxu0 %v2339
    %3027 = vmatpush.bf16.msra.mxu0 %v2331
    %3028 = vmatpush.bf16.msra.mxu0 %v2323
    %3029 = vmatpush.bf16.msra.mxu0 %v2315
    %3030 = vmatpush.bf16.msra.mxu0 %v2307
    %3031 = vmatmul.bf16.gmra.mxu0 %v1257
    %v3032 = vpop.f32.mrf.mxu0
    %v3033 = vadd.f32 %v1523, %v3032
    %v3034 = vpop.f32.mrf.mxu0
    %3035 = vdwg.mxu0
    %3036 = vmatpush.bf16.msra.mxu0 %v2427
    %3037 = vmatpush.bf16.msra.mxu0 %v2419
    %3038 = vmatpush.bf16.msra.mxu0 %v2411
    %3039 = vmatpush.bf16.msra.mxu0 %v2403
    %3040 = vmatpush.bf16.msra.mxu0 %v2395
    %3041 = vmatpush.bf16.msra.mxu0 %v2387
    %3042 = vmatpush.bf16.msra.mxu0 %v2379
    %3043 = vmatpush.bf16.msra.mxu0 %v2371
    %3044 = vmatmul.bf16.gmra.mxu0 %v1258
    %v3045 = vpop.f32.mrf.mxu0
    %v3046 = vadd.f32 %v3033, %v3045
    %v3047 = vpop.f32.mrf.mxu0
    %3048 = vdwg.mxu0
    %3049 = vmatpush.bf16.msra.mxu0 %v2491
    %3050 = vmatpush.bf16.msra.mxu0 %v2483
    %3051 = vmatpush.bf16.msra.mxu0 %v2475
    %3052 = vmatpush.bf16.msra.mxu0 %v2467
    %3053 = vmatpush.bf16.msra.mxu0 %v2459
    %3054 = vmatpush.bf16.msra.mxu0 %v2451
    %3055 = vmatpush.bf16.msra.mxu0 %v2443
    %3056 = vmatpush.bf16.msra.mxu0 %v2435
    %3057 = vmatmul.bf16.gmra.mxu0 %v1259
    %v3058 = vpop.f32.mrf.mxu0
    %v3059 = vadd.f32 %v3046, %v3058
    %v3060 = vpop.f32.mrf.mxu0
    %3061 = vdwg.mxu0
    %3062 = vmatpush.bf16.msra.mxu0 %v2555
    %3063 = vmatpush.bf16.msra.mxu0 %v2547
    %3064 = vmatpush.bf16.msra.mxu0 %v2539
    %3065 = vmatpush.bf16.msra.mxu0 %v2531
    %3066 = vmatpush.bf16.msra.mxu0 %v2523
    %3067 = vmatpush.bf16.msra.mxu0 %v2515
    %3068 = vmatpush.bf16.msra.mxu0 %v2507
    %3069 = vmatpush.bf16.msra.mxu0 %v2499
    %3070 = vmatmul.bf16.gmra.mxu0 %v1260
    %v3071 = vpop.f32.mrf.mxu0
    %v3072 = vadd.f32 %v3059, %v3071
    %v3073 = vpop.f32.mrf.mxu0
    %3074 = vdwg.mxu0
    %3075 = vmatpush.bf16.msra.mxu0 %v2364
    %3076 = vmatpush.bf16.msra.mxu0 %v2356
    %3077 = vmatpush.bf16.msra.mxu0 %v2348
    %3078 = vmatpush.bf16.msra.mxu0 %v2340
    %3079 = vmatpush.bf16.msra.mxu0 %v2332
    %3080 = vmatpush.bf16.msra.mxu0 %v2324
    %3081 = vmatpush.bf16.msra.mxu0 %v2316
    %3082 = vmatpush.bf16.msra.mxu0 %v2308
    %3083 = vmatmul.bf16.gmra.mxu0 %v1257
    %v3084 = vpop.f32.mrf.mxu0
    %v3085 = vadd.f32 %v1524, %v3084
    %v3086 = vpop.f32.mrf.mxu0
    %3087 = vdwg.mxu0
    %3088 = vmatpush.bf16.msra.mxu0 %v2428
    %3089 = vmatpush.bf16.msra.mxu0 %v2420
    %3090 = vmatpush.bf16.msra.mxu0 %v2412
    %3091 = vmatpush.bf16.msra.mxu0 %v2404
    %3092 = vmatpush.bf16.msra.mxu0 %v2396
    %3093 = vmatpush.bf16.msra.mxu0 %v2388
    %3094 = vmatpush.bf16.msra.mxu0 %v2380
    %3095 = vmatpush.bf16.msra.mxu0 %v2372
    %3096 = vmatmul.bf16.gmra.mxu0 %v1258
    %v3097 = vpop.f32.mrf.mxu0
    %v3098 = vadd.f32 %v3085, %v3097
    %v3099 = vpop.f32.mrf.mxu0
    %3100 = vdwg.mxu0
    %3101 = vmatpush.bf16.msra.mxu0 %v2492
    %3102 = vmatpush.bf16.msra.mxu0 %v2484
    %3103 = vmatpush.bf16.msra.mxu0 %v2476
    %3104 = vmatpush.bf16.msra.mxu0 %v2468
    %3105 = vmatpush.bf16.msra.mxu0 %v2460
    %3106 = vmatpush.bf16.msra.mxu0 %v2452
    %3107 = vmatpush.bf16.msra.mxu0 %v2444
    %3108 = vmatpush.bf16.msra.mxu0 %v2436
    %3109 = vmatmul.bf16.gmra.mxu0 %v1259
    %v3110 = vpop.f32.mrf.mxu0
    %v3111 = vadd.f32 %v3098, %v3110
    %v3112 = vpop.f32.mrf.mxu0
    %3113 = vdwg.mxu0
    %3114 = vmatpush.bf16.msra.mxu0 %v2556
    %3115 = vmatpush.bf16.msra.mxu0 %v2548
    %3116 = vmatpush.bf16.msra.mxu0 %v2540
    %3117 = vmatpush.bf16.msra.mxu0 %v2532
    %3118 = vmatpush.bf16.msra.mxu0 %v2524
    %3119 = vmatpush.bf16.msra.mxu0 %v2516
    %3120 = vmatpush.bf16.msra.mxu0 %v2508
    %3121 = vmatpush.bf16.msra.mxu0 %v2500
    %3122 = vmatmul.bf16.gmra.mxu0 %v1260
    %v3123 = vpop.f32.mrf.mxu0
    %v3124 = vadd.f32 %v3111, %v3123
    %v3125 = vpop.f32.mrf.mxu0
    %3126 = vdwg.mxu0
    %3127 = vmatpush.bf16.msra.mxu0 %v2365
    %3128 = vmatpush.bf16.msra.mxu0 %v2357
    %3129 = vmatpush.bf16.msra.mxu0 %v2349
    %3130 = vmatpush.bf16.msra.mxu0 %v2341
    %3131 = vmatpush.bf16.msra.mxu0 %v2333
    %3132 = vmatpush.bf16.msra.mxu0 %v2325
    %3133 = vmatpush.bf16.msra.mxu0 %v2317
    %3134 = vmatpush.bf16.msra.mxu0 %v2309
    %3135 = vmatmul.bf16.gmra.mxu0 %v1257
    %v3136 = vpop.f32.mrf.mxu0
    %v3137 = vadd.f32 %v1525, %v3136
    %v3138 = vpop.f32.mrf.mxu0
    %3139 = vdwg.mxu0
    %3140 = vmatpush.bf16.msra.mxu0 %v2429
    %3141 = vmatpush.bf16.msra.mxu0 %v2421
    %3142 = vmatpush.bf16.msra.mxu0 %v2413
    %3143 = vmatpush.bf16.msra.mxu0 %v2405
    %3144 = vmatpush.bf16.msra.mxu0 %v2397
    %3145 = vmatpush.bf16.msra.mxu0 %v2389
    %3146 = vmatpush.bf16.msra.mxu0 %v2381
    %3147 = vmatpush.bf16.msra.mxu0 %v2373
    %3148 = vmatmul.bf16.gmra.mxu0 %v1258
    %v3149 = vpop.f32.mrf.mxu0
    %v3150 = vadd.f32 %v3137, %v3149
    %v3151 = vpop.f32.mrf.mxu0
    %3152 = vdwg.mxu0
    %3153 = vmatpush.bf16.msra.mxu0 %v2493
    %3154 = vmatpush.bf16.msra.mxu0 %v2485
    %3155 = vmatpush.bf16.msra.mxu0 %v2477
    %3156 = vmatpush.bf16.msra.mxu0 %v2469
    %3157 = vmatpush.bf16.msra.mxu0 %v2461
    %3158 = vmatpush.bf16.msra.mxu0 %v2453
    %3159 = vmatpush.bf16.msra.mxu0 %v2445
    %3160 = vmatpush.bf16.msra.mxu0 %v2437
    %3161 = vmatmul.bf16.gmra.mxu0 %v1259
    %v3162 = vpop.f32.mrf.mxu0
    %v3163 = vadd.f32 %v3150, %v3162
    %v3164 = vpop.f32.mrf.mxu0
    %3165 = vdwg.mxu0
    %3166 = vmatpush.bf16.msra.mxu0 %v2557
    %3167 = vmatpush.bf16.msra.mxu0 %v2549
    %3168 = vmatpush.bf16.msra.mxu0 %v2541
    %3169 = vmatpush.bf16.msra.mxu0 %v2533
    %3170 = vmatpush.bf16.msra.mxu0 %v2525
    %3171 = vmatpush.bf16.msra.mxu0 %v2517
    %3172 = vmatpush.bf16.msra.mxu0 %v2509
    %3173 = vmatpush.bf16.msra.mxu0 %v2501
    %3174 = vmatmul.bf16.gmra.mxu0 %v1260
    %v3175 = vpop.f32.mrf.mxu0
    %v3176 = vadd.f32 %v3163, %v3175
    %v3177 = vpop.f32.mrf.mxu0
    %3178 = vdwg.mxu0
    %3179 = vmatpush.bf16.msra.mxu0 %v2366
    %3180 = vmatpush.bf16.msra.mxu0 %v2358
    %3181 = vmatpush.bf16.msra.mxu0 %v2350
    %3182 = vmatpush.bf16.msra.mxu0 %v2342
    %3183 = vmatpush.bf16.msra.mxu0 %v2334
    %3184 = vmatpush.bf16.msra.mxu0 %v2326
    %3185 = vmatpush.bf16.msra.mxu0 %v2318
    %3186 = vmatpush.bf16.msra.mxu0 %v2310
    %3187 = vmatmul.bf16.gmra.mxu0 %v1257
    %v3188 = vpop.f32.mrf.mxu0
    %v3189 = vadd.f32 %v1526, %v3188
    %v3190 = vpop.f32.mrf.mxu0
    %3191 = vdwg.mxu0
    %3192 = vmatpush.bf16.msra.mxu0 %v2430
    %3193 = vmatpush.bf16.msra.mxu0 %v2422
    %3194 = vmatpush.bf16.msra.mxu0 %v2414
    %3195 = vmatpush.bf16.msra.mxu0 %v2406
    %3196 = vmatpush.bf16.msra.mxu0 %v2398
    %3197 = vmatpush.bf16.msra.mxu0 %v2390
    %3198 = vmatpush.bf16.msra.mxu0 %v2382
    %3199 = vmatpush.bf16.msra.mxu0 %v2374
    %3200 = vmatmul.bf16.gmra.mxu0 %v1258
    %v3201 = vpop.f32.mrf.mxu0
    %v3202 = vadd.f32 %v3189, %v3201
    %v3203 = vpop.f32.mrf.mxu0
    %3204 = vdwg.mxu0
    %3205 = vmatpush.bf16.msra.mxu0 %v2494
    %3206 = vmatpush.bf16.msra.mxu0 %v2486
    %3207 = vmatpush.bf16.msra.mxu0 %v2478
    %3208 = vmatpush.bf16.msra.mxu0 %v2470
    %3209 = vmatpush.bf16.msra.mxu0 %v2462
    %3210 = vmatpush.bf16.msra.mxu0 %v2454
    %3211 = vmatpush.bf16.msra.mxu0 %v2446
    %3212 = vmatpush.bf16.msra.mxu0 %v2438
    %3213 = vmatmul.bf16.gmra.mxu0 %v1259
    %v3214 = vpop.f32.mrf.mxu0
    %v3215 = vadd.f32 %v3202, %v3214
    %v3216 = vpop.f32.mrf.mxu0
    %3217 = vdwg.mxu0
    %3218 = vmatpush.bf16.msra.mxu0 %v2558
    %3219 = vmatpush.bf16.msra.mxu0 %v2550
    %3220 = vmatpush.bf16.msra.mxu0 %v2542
    %3221 = vmatpush.bf16.msra.mxu0 %v2534
    %3222 = vmatpush.bf16.msra.mxu0 %v2526
    %3223 = vmatpush.bf16.msra.mxu0 %v2518
    %3224 = vmatpush.bf16.msra.mxu0 %v2510
    %3225 = vmatpush.bf16.msra.mxu0 %v2502
    %3226 = vmatmul.bf16.gmra.mxu0 %v1260
    %v3227 = vpop.f32.mrf.mxu0
    %v3228 = vadd.f32 %v3215, %v3227
    %v3229 = vpop.f32.mrf.mxu0
    %3230 = vdwg.mxu0
    %v3231 = vld [vmem:[#allocation23] sm:$0xff]
    %v3232 = vld [vmem:[#allocation25] sm:$0xff]
    %v3233 = vsel %vm359, %v2864, 0.0
    %v3234 = vrot.slane %v3233, 4
    %v3235 = vadd.f32 %v3233, %v3234
    %v3236 = vrot.slane %v3235, 2
    %v3237 = vadd.f32 %v3235, %v3236
    %v3238 = vrot.slane %v3237, 1
    %v3239 = vadd.f32 %v3237, %v3238
    %v3240 = vsel %vm359, %v2916, 0.0
    %v3241 = vrot.slane %v3240, 4
    %v3242 = vadd.f32 %v3240, %v3241
    %v3243 = vrot.slane %v3242, 2
    %v3244 = vadd.f32 %v3242, %v3243
    %v3245 = vrot.slane %v3244, 1
    %v3246 = vadd.f32 %v3244, %v3245
    %v3247 = vsel %vm359, %v2968, 0.0
    %v3248 = vrot.slane %v3247, 4
    %v3249 = vadd.f32 %v3247, %v3248
    %v3250 = vrot.slane %v3249, 2
    %v3251 = vadd.f32 %v3249, %v3250
    %v3252 = vrot.slane %v3251, 1
    %v3253 = vadd.f32 %v3251, %v3252
    %v3254 = vsel %vm359, %v3020, 0.0
    %v3255 = vrot.slane %v3254, 4
    %v3256 = vadd.f32 %v3254, %v3255
    %v3257 = vrot.slane %v3256, 2
    %v3258 = vadd.f32 %v3256, %v3257
    %v3259 = vrot.slane %v3258, 1
    %v3260 = vadd.f32 %v3258, %v3259
    %v3261 = vsel %vm359, %v3072, 0.0
    %v3262 = vrot.slane %v3261, 4
    %v3263 = vadd.f32 %v3261, %v3262
    %v3264 = vrot.slane %v3263, 2
    %v3265 = vadd.f32 %v3263, %v3264
    %v3266 = vrot.slane %v3265, 1
    %v3267 = vadd.f32 %v3265, %v3266
    %v3268 = vsel %vm359, %v3124, 0.0
    %v3269 = vrot.slane %v3268, 4
    %v3270 = vadd.f32 %v3268, %v3269
    %v3271 = vrot.slane %v3270, 2
    %v3272 = vadd.f32 %v3270, %v3271
    %v3273 = vrot.slane %v3272, 1
    %v3274 = vadd.f32 %v3272, %v3273
    %v3275 = vsel %vm359, %v3176, 0.0
    %v3276 = vrot.slane %v3275, 4
    %v3277 = vadd.f32 %v3275, %v3276
    %v3278 = vrot.slane %v3277, 2
    %v3279 = vadd.f32 %v3277, %v3278
    %v3280 = vrot.slane %v3279, 1
    %v3281 = vadd.f32 %v3279, %v3280
    %v3282 = vsel %vm359, %v3228, 0.0
    %v3283 = vrot.slane %v3282, 4
    %v3284 = vadd.f32 %v3282, %v3283
    %v3285 = vrot.slane %v3284, 2
    %v3286 = vadd.f32 %v3284, %v3285
    %v3287 = vrot.slane %v3286, 1
    %v3288 = vadd.f32 %v3286, %v3287
    %v3289 = vmul.f32 %v3239, %v530
    %v3290 = vmul.f32 %v3246, %v530
    %v3291 = vmul.f32 %v3253, %v530
    %v3292 = vmul.f32 %v3260, %v530
    %v3293 = vmul.f32 %v3267, %v530
    %v3294 = vmul.f32 %v3274, %v530
    %v3295 = vmul.f32 %v3281, %v530
    %v3296 = vmul.f32 %v3288, %v530
    %v3297 = vsub.f32 %v2864, %v3289
    %v3298 = vsub.f32 %v2916, %v3290
    %v3299 = vsub.f32 %v2968, %v3291
    %v3300 = vsub.f32 %v3020, %v3292
    %v3301 = vsub.f32 %v3072, %v3293
    %v3302 = vsub.f32 %v3124, %v3294
    %v3303 = vsub.f32 %v3176, %v3295
    %v3304 = vsub.f32 %v3228, %v3296
    %v3305 = vmul.f32 %v3297, %v3297
    %v3306 = vmul.f32 %v3298, %v3298
    %v3307 = vmul.f32 %v3299, %v3299
    %v3308 = vmul.f32 %v3300, %v3300
    %v3309 = vmul.f32 %v3301, %v3301
    %v3310 = vmul.f32 %v3302, %v3302
    %v3311 = vmul.f32 %v3303, %v3303
    %v3312 = vmul.f32 %v3304, %v3304
    %v3313 = vsel %vm359, %v3305, 0.0
    %v3314 = vrot.slane %v3313, 4
    %v3315 = vadd.f32 %v3313, %v3314
    %v3316 = vrot.slane %v3315, 2
    %v3317 = vadd.f32 %v3315, %v3316
    %v3318 = vrot.slane %v3317, 1
    %v3319 = vadd.f32 %v3317, %v3318
    %v3320 = vsel %vm359, %v3306, 0.0
    %v3321 = vrot.slane %v3320, 4
    %v3322 = vadd.f32 %v3320, %v3321
    %v3323 = vrot.slane %v3322, 2
    %v3324 = vadd.f32 %v3322, %v3323
    %v3325 = vrot.slane %v3324, 1
    %v3326 = vadd.f32 %v3324, %v3325
    %v3327 = vsel %vm359, %v3307, 0.0
    %v3328 = vrot.slane %v3327, 4
    %v3329 = vadd.f32 %v3327, %v3328
    %v3330 = vrot.slane %v3329, 2
    %v3331 = vadd.f32 %v3329, %v3330
    %v3332 = vrot.slane %v3331, 1
    %v3333 = vadd.f32 %v3331, %v3332
    %v3334 = vsel %vm359, %v3308, 0.0
    %v3335 = vrot.slane %v3334, 4
    %v3336 = vadd.f32 %v3334, %v3335
    %v3337 = vrot.slane %v3336, 2
    %v3338 = vadd.f32 %v3336, %v3337
    %v3339 = vrot.slane %v3338, 1
    %v3340 = vadd.f32 %v3338, %v3339
    %v3341 = vsel %vm359, %v3309, 0.0
    %v3342 = vrot.slane %v3341, 4
    %v3343 = vadd.f32 %v3341, %v3342
    %v3344 = vrot.slane %v3343, 2
    %v3345 = vadd.f32 %v3343, %v3344
    %v3346 = vrot.slane %v3345, 1
    %v3347 = vadd.f32 %v3345, %v3346
    %v3348 = vsel %vm359, %v3310, 0.0
    %v3349 = vrot.slane %v3348, 4
    %v3350 = vadd.f32 %v3348, %v3349
    %v3351 = vrot.slane %v3350, 2
    %v3352 = vadd.f32 %v3350, %v3351
    %v3353 = vrot.slane %v3352, 1
    %v3354 = vadd.f32 %v3352, %v3353
    %v3355 = vsel %vm359, %v3311, 0.0
    %v3356 = vrot.slane %v3355, 4
    %v3357 = vadd.f32 %v3355, %v3356
    %v3358 = vrot.slane %v3357, 2
    %v3359 = vadd.f32 %v3357, %v3358
    %v3360 = vrot.slane %v3359, 1
    %v3361 = vadd.f32 %v3359, %v3360
    %v3362 = vsel %vm359, %v3312, 0.0
    %v3363 = vrot.slane %v3362, 4
    %v3364 = vadd.f32 %v3362, %v3363
    %v3365 = vrot.slane %v3364, 2
    %v3366 = vadd.f32 %v3364, %v3365
    %v3367 = vrot.slane %v3366, 1
    %v3368 = vadd.f32 %v3366, %v3367
    %v3369 = vmul.f32 %v3319, %v530
    %v3370 = vmul.f32 %v3326, %v530
    %v3371 = vmul.f32 %v3333, %v530
    %v3372 = vmul.f32 %v3340, %v530
    %v3373 = vmul.f32 %v3347, %v530
    %v3374 = vmul.f32 %v3354, %v530
    %v3375 = vmul.f32 %v3361, %v530
    %v3376 = vmul.f32 %v3368, %v530
    %v3377 = vadd.f32 %v3369, 0.8
    %v3378 = vadd.f32 %v3370, 0.8
    %v3379 = vadd.f32 %v3371, 0.8
    %v3380 = vadd.f32 %v3372, 0.8
    %v3381 = vadd.f32 %v3373, 0.8
    %v3382 = vadd.f32 %v3374, 0.8
    %v3383 = vadd.f32 %v3375, 0.8
    %v3384 = vadd.f32 %v3376, 0.8
    %v3385 = vrsqrt.pop %v3377
    %v3386 = vmul.f32 %v3385, %v3377
    %v3387 = vmul.f32 %v3386, %v3385
    %v3388 = vmul.f32 0.5, %v3387
    %v3389 = vsub.f32 1.5, %v3388
    %v3390 = vmul.f32 %v3385, %v3389
    %vm3391 = vweird.f32 %v3377
    %vm3392 = vweird.f32 %v3385
    %vm3393 = vmor %vm3391, %vm3392
    %v3394 = vsel %vm3393, %v3385, %v3390
    %v3395 = vrsqrt.pop %v3378
    %v3396 = vmul.f32 %v3395, %v3378
    %v3397 = vmul.f32 %v3396, %v3395
    %v3398 = vmul.f32 0.5, %v3397
    %v3399 = vsub.f32 1.5, %v3398
    %v3400 = vmul.f32 %v3395, %v3399
    %vm3401 = vweird.f32 %v3378
    %vm3402 = vweird.f32 %v3395
    %vm3403 = vmor %vm3401, %vm3402
    %v3404 = vsel %vm3403, %v3395, %v3400
    %v3405 = vrsqrt.pop %v3379
    %v3406 = vmul.f32 %v3405, %v3379
    %v3407 = vmul.f32 %v3406, %v3405
    %v3408 = vmul.f32 0.5, %v3407
    %v3409 = vsub.f32 1.5, %v3408
    %v3410 = vmul.f32 %v3405, %v3409
    %vm3411 = vweird.f32 %v3379
    %vm3412 = vweird.f32 %v3405
    %vm3413 = vmor %vm3411, %vm3412
    %v3414 = vsel %vm3413, %v3405, %v3410
    %v3415 = vrsqrt.pop %v3380
    %v3416 = vmul.f32 %v3415, %v3380
    %v3417 = vmul.f32 %v3416, %v3415
    %v3418 = vmul.f32 0.5, %v3417
    %v3419 = vsub.f32 1.5, %v3418
    %v3420 = vmul.f32 %v3415, %v3419
    %vm3421 = vweird.f32 %v3380
    %vm3422 = vweird.f32 %v3415
    %vm3423 = vmor %vm3421, %vm3422
    %v3424 = vsel %vm3423, %v3415, %v3420
    %v3425 = vrsqrt.pop %v3381
    %v3426 = vmul.f32 %v3425, %v3381
    %v3427 = vmul.f32 %v3426, %v3425
    %v3428 = vmul.f32 0.5, %v3427
    %v3429 = vsub.f32 1.5, %v3428
    %v3430 = vmul.f32 %v3425, %v3429
    %vm3431 = vweird.f32 %v3381
    %vm3432 = vweird.f32 %v3425
    %vm3433 = vmor %vm3431, %vm3432
    %v3434 = vsel %vm3433, %v3425, %v3430
    %v3435 = vrsqrt.pop %v3382
    %v3436 = vmul.f32 %v3435, %v3382
    %v3437 = vmul.f32 %v3436, %v3435
    %v3438 = vmul.f32 0.5, %v3437
    %v3439 = vsub.f32 1.5, %v3438
    %v3440 = vmul.f32 %v3435, %v3439
    %vm3441 = vweird.f32 %v3382
    %vm3442 = vweird.f32 %v3435
    %vm3443 = vmor %vm3441, %vm3442
    %v3444 = vsel %vm3443, %v3435, %v3440
    %v3445 = vrsqrt.pop %v3383
    %v3446 = vmul.f32 %v3445, %v3383
    %v3447 = vmul.f32 %v3446, %v3445
    %v3448 = vmul.f32 0.5, %v3447
    %v3449 = vsub.f32 1.5, %v3448
    %v3450 = vmul.f32 %v3445, %v3449
    %vm3451 = vweird.f32 %v3383
    %vm3452 = vweird.f32 %v3445
    %vm3453 = vmor %vm3451, %vm3452
    %v3454 = vsel %vm3453, %v3445, %v3450
    %v3455 = vrsqrt.pop %v3384
    %v3456 = vmul.f32 %v3455, %v3384
    %v3457 = vmul.f32 %v3456, %v3455
    %v3458 = vmul.f32 0.5, %v3457
    %v3459 = vsub.f32 1.5, %v3458
    %v3460 = vmul.f32 %v3455, %v3459
    %vm3461 = vweird.f32 %v3384
    %vm3462 = vweird.f32 %v3455
    %vm3463 = vmor %vm3461, %vm3462
    %v3464 = vsel %vm3463, %v3455, %v3460
    %v3465 = vmul.f32 %v3297, %v3394
    %v3466 = vmul.f32 %v3298, %v3404
    %v3467 = vmul.f32 %v3299, %v3414
    %v3468 = vmul.f32 %v3300, %v3424
    %v3469 = vmul.f32 %v3301, %v3434
    %v3470 = vmul.f32 %v3302, %v3444
    %v3471 = vmul.f32 %v3303, %v3454
    %v3472 = vmul.f32 %v3304, %v3464
    %v3474 = vperm.slane %v3231, 0
    %v3475 = vperm.slane %v3231, 1
    %v3476 = vperm.slane %v3231, 2
    %v3477 = vperm.slane %v3231, 3
    %v3478 = vperm.slane %v3231, 4
    %v3479 = vperm.slane %v3231, 5
    %v3480 = vperm.slane %v3231, 6
    %v3481 = vperm.slane %v3231, 7
    %v3490 = vmul.f32 %v3465, %v3474
    %v3491 = vmul.f32 %v3466, %v3475
    %v3492 = vmul.f32 %v3467, %v3476
    %v3493 = vmul.f32 %v3468, %v3477
    %v3494 = vmul.f32 %v3469, %v3478
    %v3495 = vmul.f32 %v3470, %v3479
    %v3496 = vmul.f32 %v3471, %v3480
    %v3497 = vmul.f32 %v3472, %v3481
    %v3499 = vperm.slane %v3232, 0
    %v3500 = vperm.slane %v3232, 1
    %v3501 = vperm.slane %v3232, 2
    %v3502 = vperm.slane %v3232, 3
    %v3503 = vperm.slane %v3232, 4
    %v3504 = vperm.slane %v3232, 5
    %v3505 = vperm.slane %v3232, 6
    %v3506 = vperm.slane %v3232, 7
    %v3515 = vadd.f32 %v3490, %v3499
    %v3516 = vadd.f32 %v3491, %v3500
    %v3517 = vadd.f32 %v3492, %v3501
    %v3518 = vadd.f32 %v3493, %v3502
    %v3519 = vadd.f32 %v3494, %v3503
    %v3520 = vadd.f32 %v3495, %v3504
    %v3521 = vadd.f32 %v3496, %v3505
    %v3522 = vadd.f32 %v3497, %v3506
    %vm3523 = vcmp.gt.f32.partialorder %v3515, 0.0
    %vm3524 = vcmp.gt.f32.partialorder %v3516, 0.0
    %vm3525 = vcmp.gt.f32.partialorder %v3517, 0.0
    %vm3526 = vcmp.gt.f32.partialorder %v3518, 0.0
    %vm3527 = vcmp.gt.f32.partialorder %v3519, 0.0
    %vm3528 = vcmp.gt.f32.partialorder %v3520, 0.0
    %vm3529 = vcmp.gt.f32.partialorder %v3521, 0.0
    %vm3530 = vcmp.gt.f32.partialorder %v3522, 0.0
    %v3531 = vmul.f32 %v3515, 0.2
    %v3532 = vmul.f32 %v3516, 0.2
    %v3533 = vmul.f32 %v3517, 0.2
    %v3534 = vmul.f32 %v3518, 0.2
    %v3535 = vmul.f32 %v3519, 0.2
    %v3536 = vmul.f32 %v3520, 0.2
    %v3537 = vmul.f32 %v3521, 0.2
    %v3538 = vmul.f32 %v3522, 0.2
    %v3539 = vsel %vm3523, %v3515, %v3531
    %v3540 = vsel %vm3524, %v3516, %v3532
    %v3541 = vsel %vm3525, %v3517, %v3533
    %v3542 = vsel %vm3526, %v3518, %v3534
    %v3543 = vsel %vm3527, %v3519, %v3535
    %v3544 = vsel %vm3528, %v3520, %v3536
    %v3545 = vsel %vm3529, %v3521, %v3537
    %v3546 = vsel %vm3530, %v3522, %v3538
    %v3547 = vpack.c.bf16 %v3539, %v3539
    %v3548 = vpack.c.bf16 %v3540, %v3540
    %v3549 = vpack.c.bf16 %v3541, %v3541
    %v3550 = vpack.c.bf16 %v3542, %v3542
    %v3551 = vpack.c.bf16 %v3543, %v3543
    %v3552 = vpack.c.bf16 %v3544, %v3544
    %v3553 = vpack.c.bf16 %v3545, %v3545
    %v3554 = vpack.c.bf16 %v3546, %v3546
    %v3555 = vld [vmem:[#allocation26] sm:$0xff]
    %v3556 = vld [vmem:[#allocation26 + $0x8] sm:$0xff]
    %v3557 = vld [vmem:[#allocation26 + $0x10] sm:$0xff]
    %v3558 = vld [vmem:[#allocation26 + $0x18] sm:$0xf]
    %v3559 = vld [vmem:[#allocation26 + $0x1c] sm:$0xff]
    %v3560 = vld [vmem:[#allocation26 + $0x24] sm:$0xff]
    %v3561 = vld [vmem:[#allocation26 + $0x2c] sm:$0xff]
    %v3562 = vld [vmem:[#allocation26 + $0x34] sm:$0xf]
    %v3563 = vld [vmem:[#allocation26 + $0x38] sm:$0xff]
    %v3564 = vld [vmem:[#allocation26 + $0x40] sm:$0xff]
    %v3565 = vld [vmem:[#allocation26 + $0x48] sm:$0xff]
    %v3566 = vld [vmem:[#allocation26 + $0x50] sm:$0xf]
    %v3567 = vld [vmem:[#allocation26 + $0x54] sm:$0xff]
    %v3568 = vld [vmem:[#allocation26 + $0x5c] sm:$0xff]
    %v3569 = vld [vmem:[#allocation26 + $0x64] sm:$0xff]
    %v3570 = vld [vmem:[#allocation26 + $0x6c] sm:$0xf]
    %v3571 = vld [vmem:[#allocation26 + $0x70] sm:$0xff]
    %v3572 = vld [vmem:[#allocation26 + $0x78] sm:$0xff]
    %v3573 = vld [vmem:[#allocation26 + $0x80] sm:$0xff]
    %v3574 = vld [vmem:[#allocation26 + $0x88] sm:$0xf]
    %v3575 = vld [vmem:[#allocation26 + $0x8c] sm:$0xff]
    %v3576 = vld [vmem:[#allocation26 + $0x94] sm:$0xff]
    %v3577 = vld [vmem:[#allocation26 + $0x9c] sm:$0xff]
    %v3578 = vld [vmem:[#allocation26 + $0xa4] sm:$0xf]
    %v3579 = vld [vmem:[#allocation26 + $0xa8] sm:$0xff]
    %v3580 = vld [vmem:[#allocation26 + $0xb0] sm:$0xff]
    %v3581 = vld [vmem:[#allocation26 + $0xb8] sm:$0xff]
    %v3582 = vld [vmem:[#allocation26 + $0xc0] sm:$0xf]
    %v3583 = vld [vmem:[#allocation26 + $0xc4] sm:$0xff]
    %v3584 = vld [vmem:[#allocation26 + $0xcc] sm:$0xff]
    %v3585 = vld [vmem:[#allocation26 + $0xd4] sm:$0xff]
    %v3586 = vld [vmem:[#allocation26 + $0xdc] sm:$0xf]
    %v3587 = vld [vmem:[#allocation26 + $0xe0] sm:$0xff]
    %v3588 = vld [vmem:[#allocation26 + $0xe8] sm:$0xff]
    %v3589 = vld [vmem:[#allocation26 + $0xf0] sm:$0xff]
    %v3590 = vld [vmem:[#allocation26 + $0xf8] sm:$0xf]
    %v3591 = vld [vmem:[#allocation26 + $0xfc] sm:$0xff]
    %v3592 = vld [vmem:[#allocation26 + $0x104] sm:$0xff]
    %v3593 = vld [vmem:[#allocation26 + $0x10c] sm:$0xff]
    %v3594 = vld [vmem:[#allocation26 + $0x114] sm:$0xf]
    %v3595 = vld [vmem:[#allocation26 + $0x118] sm:$0xff]
    %v3596 = vld [vmem:[#allocation26 + $0x120] sm:$0xff]
    %v3597 = vld [vmem:[#allocation26 + $0x128] sm:$0xff]
    %v3598 = vld [vmem:[#allocation26 + $0x130] sm:$0xf]
    %v3599 = vld [vmem:[#allocation26 + $0x134] sm:$0xff]
    %v3600 = vld [vmem:[#allocation26 + $0x13c] sm:$0xff]
    %v3601 = vld [vmem:[#allocation26 + $0x144] sm:$0xff]
    %v3602 = vld [vmem:[#allocation26 + $0x14c] sm:$0xf]
    %v3603 = vld [vmem:[#allocation26 + $0x150] sm:$0xff]
    %v3604 = vld [vmem:[#allocation26 + $0x158] sm:$0xff]
    %v3605 = vld [vmem:[#allocation26 + $0x160] sm:$0xff]
    %v3606 = vld [vmem:[#allocation26 + $0x168] sm:$0xf]
    %v3607 = vld [vmem:[#allocation26 + $0x16c] sm:$0xff]
    %v3608 = vld [vmem:[#allocation26 + $0x174] sm:$0xff]
    %v3609 = vld [vmem:[#allocation26 + $0x17c] sm:$0xff]
    %v3610 = vld [vmem:[#allocation26 + $0x184] sm:$0xf]
    %v3611 = vld [vmem:[#allocation26 + $0x188] sm:$0xff]
    %v3612 = vld [vmem:[#allocation26 + $0x190] sm:$0xff]
    %v3613 = vld [vmem:[#allocation26 + $0x198] sm:$0xff]
    %v3614 = vld [vmem:[#allocation26 + $0x1a0] sm:$0xf]
    %v3615 = vld [vmem:[#allocation26 + $0x1a4] sm:$0xff]
    %v3616 = vld [vmem:[#allocation26 + $0x1ac] sm:$0xff]
    %v3617 = vld [vmem:[#allocation26 + $0x1b4] sm:$0xff]
    %v3618 = vld [vmem:[#allocation26 + $0x1bc] sm:$0xf]
    %v3619 = vld [vmem:[#allocation26 + $0x1c0] sm:$0xff]
    %v3620 = vld [vmem:[#allocation26 + $0x1c8] sm:$0xff]
    %v3621 = vld [vmem:[#allocation26 + $0x1d0] sm:$0xff]
    %v3622 = vld [vmem:[#allocation26 + $0x1d8] sm:$0xf]
    %v3623 = vld [vmem:[#allocation26 + $0x1dc] sm:$0xff]
    %v3624 = vld [vmem:[#allocation26 + $0x1e4] sm:$0xff]
    %v3625 = vld [vmem:[#allocation26 + $0x1ec] sm:$0xff]
    %v3626 = vld [vmem:[#allocation26 + $0x1f4] sm:$0xf]
    %v3627 = vld [vmem:[#allocation26 + $0x1f8] sm:$0xff]
    %v3628 = vld [vmem:[#allocation26 + $0x200] sm:$0xff]
    %v3629 = vld [vmem:[#allocation26 + $0x208] sm:$0xff]
    %v3630 = vld [vmem:[#allocation26 + $0x210] sm:$0xf]
    %v3631 = vld [vmem:[#allocation26 + $0x214] sm:$0xff]
    %v3632 = vld [vmem:[#allocation26 + $0x21c] sm:$0xff]
    %v3633 = vld [vmem:[#allocation26 + $0x224] sm:$0xff]
    %v3634 = vld [vmem:[#allocation26 + $0x22c] sm:$0xf]
    %v3635 = vld [vmem:[#allocation26 + $0x230] sm:$0xff]
    %v3636 = vld [vmem:[#allocation26 + $0x238] sm:$0xff]
    %v3637 = vld [vmem:[#allocation26 + $0x240] sm:$0xff]
    %v3638 = vld [vmem:[#allocation26 + $0x248] sm:$0xf]
    %v3639 = vld [vmem:[#allocation26 + $0x24c] sm:$0xff]
    %v3640 = vld [vmem:[#allocation26 + $0x254] sm:$0xff]
    %v3641 = vld [vmem:[#allocation26 + $0x25c] sm:$0xff]
    %v3642 = vld [vmem:[#allocation26 + $0x264] sm:$0xf]
    %v3643 = vld [vmem:[#allocation26 + $0x268] sm:$0xff]
    %v3644 = vld [vmem:[#allocation26 + $0x270] sm:$0xff]
    %v3645 = vld [vmem:[#allocation26 + $0x278] sm:$0xff]
    %v3646 = vld [vmem:[#allocation26 + $0x280] sm:$0xf]
    %v3647 = vld [vmem:[#allocation26 + $0x284] sm:$0xff]
    %v3648 = vld [vmem:[#allocation26 + $0x28c] sm:$0xff]
    %v3649 = vld [vmem:[#allocation26 + $0x294] sm:$0xff]
    %v3650 = vld [vmem:[#allocation26 + $0x29c] sm:$0xf]
    %v3651 = vld [vmem:[#allocation26 + $0x2a0] sm:$0xff]
    %v3652 = vld [vmem:[#allocation26 + $0x2a8] sm:$0xff]
    %v3653 = vld [vmem:[#allocation26 + $0x2b0] sm:$0xff]
    %v3654 = vld [vmem:[#allocation26 + $0x2b8] sm:$0xf]
    %v3655 = vld [vmem:[#allocation26 + $0x2bc] sm:$0xff]
    %v3656 = vld [vmem:[#allocation26 + $0x2c4] sm:$0xff]
    %v3657 = vld [vmem:[#allocation26 + $0x2cc] sm:$0xff]
    %v3658 = vld [vmem:[#allocation26 + $0x2d4] sm:$0xf]
    %v3659 = vld [vmem:[#allocation26 + $0x2d8] sm:$0xff]
    %v3660 = vld [vmem:[#allocation26 + $0x2e0] sm:$0xff]
    %v3661 = vld [vmem:[#allocation26 + $0x2e8] sm:$0xff]
    %v3662 = vld [vmem:[#allocation26 + $0x2f0] sm:$0xf]
    %v3663 = vld [vmem:[#allocation26 + $0x2f4] sm:$0xff]
    %v3664 = vld [vmem:[#allocation26 + $0x2fc] sm:$0xff]
    %v3665 = vld [vmem:[#allocation26 + $0x304] sm:$0xff]
    %v3666 = vld [vmem:[#allocation26 + $0x30c] sm:$0xf]
    %v3667 = vld [vmem:[#allocation26 + $0x310] sm:$0xff]
    %v3668 = vld [vmem:[#allocation26 + $0x318] sm:$0xff]
    %v3669 = vld [vmem:[#allocation26 + $0x320] sm:$0xff]
    %v3670 = vld [vmem:[#allocation26 + $0x328] sm:$0xf]
    %v3671 = vld [vmem:[#allocation26 + $0x32c] sm:$0xff]
    %v3672 = vld [vmem:[#allocation26 + $0x334] sm:$0xff]
    %v3673 = vld [vmem:[#allocation26 + $0x33c] sm:$0xff]
    %v3674 = vld [vmem:[#allocation26 + $0x344] sm:$0xf]
    %v3675 = vld [vmem:[#allocation26 + $0x348] sm:$0xff]
    %v3676 = vld [vmem:[#allocation26 + $0x350] sm:$0xff]
    %v3677 = vld [vmem:[#allocation26 + $0x358] sm:$0xff]
    %v3678 = vld [vmem:[#allocation26 + $0x360] sm:$0xf]
    %v3679 = vld [vmem:[#allocation26 + $0x364] sm:$0xff]
    %v3680 = vld [vmem:[#allocation26 + $0x36c] sm:$0xff]
    %v3681 = vld [vmem:[#allocation26 + $0x374] sm:$0xff]
    %v3682 = vld [vmem:[#allocation26 + $0x37c] sm:$0xf]
    %v3683 = vld [vmem:[#allocation26 + $0x380] sm:$0xff]
    %v3684 = vld [vmem:[#allocation26 + $0x388] sm:$0xff]
    %v3685 = vld [vmem:[#allocation26 + $0x390] sm:$0xff]
    %v3686 = vld [vmem:[#allocation26 + $0x398] sm:$0xf]
    %v3687 = vld [vmem:[#allocation26 + $0x39c] sm:$0xff]
    %v3688 = vld [vmem:[#allocation26 + $0x3a4] sm:$0xff]
    %v3689 = vld [vmem:[#allocation26 + $0x3ac] sm:$0xff]
    %v3690 = vld [vmem:[#allocation26 + $0x3b4] sm:$0xf]
    %v3691 = vld [vmem:[#allocation26 + $0x3b8] sm:$0xff]
    %v3692 = vld [vmem:[#allocation26 + $0x3c0] sm:$0xff]
    %v3693 = vld [vmem:[#allocation26 + $0x3c8] sm:$0xff]
    %v3694 = vld [vmem:[#allocation26 + $0x3d0] sm:$0xf]
    %v3695 = vld [vmem:[#allocation26 + $0x3d4] sm:$0xff]
    %v3696 = vld [vmem:[#allocation26 + $0x3dc] sm:$0xff]
    %v3697 = vld [vmem:[#allocation26 + $0x3e4] sm:$0xff]
    %v3698 = vld [vmem:[#allocation26 + $0x3ec] sm:$0xf]
    %v3699 = vld [vmem:[#allocation26 + $0x3f0] sm:$0xff]
    %v3700 = vld [vmem:[#allocation26 + $0x3f8] sm:$0xff]
    %v3701 = vld [vmem:[#allocation26 + $0x400] sm:$0xff]
    %v3702 = vld [vmem:[#allocation26 + $0x408] sm:$0xf]
    %v3703 = vld [vmem:[#allocation26 + $0x40c] sm:$0xff]
    %v3704 = vld [vmem:[#allocation26 + $0x414] sm:$0xff]
    %v3705 = vld [vmem:[#allocation26 + $0x41c] sm:$0xff]
    %v3706 = vld [vmem:[#allocation26 + $0x424] sm:$0xf]
    %v3707 = vld [vmem:[#allocation26 + $0x428] sm:$0xff]
    %v3708 = vld [vmem:[#allocation26 + $0x430] sm:$0xff]
    %v3709 = vld [vmem:[#allocation26 + $0x438] sm:$0xff]
    %v3710 = vld [vmem:[#allocation26 + $0x440] sm:$0xf]
    %v3711 = vld [vmem:[#allocation26 + $0x444] sm:$0xff]
    %v3712 = vld [vmem:[#allocation26 + $0x44c] sm:$0xff]
    %v3713 = vld [vmem:[#allocation26 + $0x454] sm:$0xff]
    %v3714 = vld [vmem:[#allocation26 + $0x45c] sm:$0xf]
    %v3715 = vld [vmem:[#allocation26 + $0x460] sm:$0xff]
    %v3716 = vld [vmem:[#allocation26 + $0x468] sm:$0xff]
    %v3717 = vld [vmem:[#allocation26 + $0x470] sm:$0xff]
    %v3718 = vld [vmem:[#allocation26 + $0x478] sm:$0xf]
    %v3719 = vld [vmem:[#allocation26 + $0x47c] sm:$0xff]
    %v3720 = vld [vmem:[#allocation26 + $0x484] sm:$0xff]
    %v3721 = vld [vmem:[#allocation26 + $0x48c] sm:$0xff]
    %v3722 = vld [vmem:[#allocation26 + $0x494] sm:$0xf]
    %v3723 = vld [vmem:[#allocation26 + $0x498] sm:$0xff]
    %v3724 = vld [vmem:[#allocation26 + $0x4a0] sm:$0xff]
    %v3725 = vld [vmem:[#allocation26 + $0x4a8] sm:$0xff]
    %v3726 = vld [vmem:[#allocation26 + $0x4b0] sm:$0xf]
    %v3727 = vld [vmem:[#allocation26 + $0x4b4] sm:$0xff]
    %v3728 = vld [vmem:[#allocation26 + $0x4bc] sm:$0xff]
    %v3729 = vld [vmem:[#allocation26 + $0x4c4] sm:$0xff]
    %v3730 = vld [vmem:[#allocation26 + $0x4cc] sm:$0xf]
    %v3731 = vld [vmem:[#allocation26 + $0x4d0] sm:$0xff]
    %v3732 = vld [vmem:[#allocation26 + $0x4d8] sm:$0xff]
    %v3733 = vld [vmem:[#allocation26 + $0x4e0] sm:$0xff]
    %v3734 = vld [vmem:[#allocation26 + $0x4e8] sm:$0xf]
    %v3735 = vld [vmem:[#allocation26 + $0x4ec] sm:$0xff]
    %v3736 = vld [vmem:[#allocation26 + $0x4f4] sm:$0xff]
    %v3737 = vld [vmem:[#allocation26 + $0x4fc] sm:$0xff]
    %v3738 = vld [vmem:[#allocation26 + $0x504] sm:$0xf]
    %v3739 = vld [vmem:[#allocation26 + $0x508] sm:$0xff]
    %v3740 = vld [vmem:[#allocation26 + $0x510] sm:$0xff]
    %v3741 = vld [vmem:[#allocation26 + $0x518] sm:$0xff]
    %v3742 = vld [vmem:[#allocation26 + $0x520] sm:$0xf]
    %v3743 = vld [vmem:[#allocation26 + $0x524] sm:$0xff]
    %v3744 = vld [vmem:[#allocation26 + $0x52c] sm:$0xff]
    %v3745 = vld [vmem:[#allocation26 + $0x534] sm:$0xff]
    %v3746 = vld [vmem:[#allocation26 + $0x53c] sm:$0xf]
    %v3747 = vld [vmem:[#allocation26 + $0x540] sm:$0xff]
    %v3748 = vld [vmem:[#allocation26 + $0x548] sm:$0xff]
    %v3749 = vld [vmem:[#allocation26 + $0x550] sm:$0xff]
    %v3750 = vld [vmem:[#allocation26 + $0x558] sm:$0xf]
    %v3751 = vld [vmem:[#allocation26 + $0x55c] sm:$0xff]
    %v3752 = vld [vmem:[#allocation26 + $0x564] sm:$0xff]
    %v3753 = vld [vmem:[#allocation26 + $0x56c] sm:$0xff]
    %v3754 = vld [vmem:[#allocation26 + $0x574] sm:$0xf]
    %v3755 = vld [vmem:[#allocation26 + $0x578] sm:$0xff]
    %v3756 = vld [vmem:[#allocation26 + $0x580] sm:$0xff]
    %v3757 = vld [vmem:[#allocation26 + $0x588] sm:$0xff]
    %v3758 = vld [vmem:[#allocation26 + $0x590] sm:$0xf]
    %v3759 = vld [vmem:[#allocation26 + $0x594] sm:$0xff]
    %v3760 = vld [vmem:[#allocation26 + $0x59c] sm:$0xff]
    %v3761 = vld [vmem:[#allocation26 + $0x5a4] sm:$0xff]
    %v3762 = vld [vmem:[#allocation26 + $0x5ac] sm:$0xf]
    %v3763 = vld [vmem:[#allocation26 + $0x5b0] sm:$0xff]
    %v3764 = vld [vmem:[#allocation26 + $0x5b8] sm:$0xff]
    %v3765 = vld [vmem:[#allocation26 + $0x5c0] sm:$0xff]
    %v3766 = vld [vmem:[#allocation26 + $0x5c8] sm:$0xf]
    %v3767 = vld [vmem:[#allocation26 + $0x5cc] sm:$0xff]
    %v3768 = vld [vmem:[#allocation26 + $0x5d4] sm:$0xff]
    %v3769 = vld [vmem:[#allocation26 + $0x5dc] sm:$0xff]
    %v3770 = vld [vmem:[#allocation26 + $0x5e4] sm:$0xf]
    %v3771 = vld [vmem:[#allocation26 + $0x5e8] sm:$0xff]
    %v3772 = vld [vmem:[#allocation26 + $0x5f0] sm:$0xff]
    %v3773 = vld [vmem:[#allocation26 + $0x5f8] sm:$0xff]
    %v3774 = vld [vmem:[#allocation26 + $0x600] sm:$0xf]
    %v3775 = vld [vmem:[#allocation26 + $0x604] sm:$0xff]
    %v3776 = vld [vmem:[#allocation26 + $0x60c] sm:$0xff]
    %v3777 = vld [vmem:[#allocation26 + $0x614] sm:$0xff]
    %v3778 = vld [vmem:[#allocation26 + $0x61c] sm:$0xf]
    %v3779 = vld [vmem:[#allocation26 + $0x620] sm:$0xff]
    %v3780 = vld [vmem:[#allocation26 + $0x628] sm:$0xff]
    %v3781 = vld [vmem:[#allocation26 + $0x630] sm:$0xff]
    %v3782 = vld [vmem:[#allocation26 + $0x638] sm:$0xf]
    %v3783 = vld [vmem:[#allocation26 + $0x63c] sm:$0xff]
    %v3784 = vld [vmem:[#allocation26 + $0x644] sm:$0xff]
    %v3785 = vld [vmem:[#allocation26 + $0x64c] sm:$0xff]
    %v3786 = vld [vmem:[#allocation26 + $0x654] sm:$0xf]
    %v3787 = vld [vmem:[#allocation26 + $0x658] sm:$0xff]
    %v3788 = vld [vmem:[#allocation26 + $0x660] sm:$0xff]
    %v3789 = vld [vmem:[#allocation26 + $0x668] sm:$0xff]
    %v3790 = vld [vmem:[#allocation26 + $0x670] sm:$0xf]
    %v3791 = vld [vmem:[#allocation26 + $0x674] sm:$0xff]
    %v3792 = vld [vmem:[#allocation26 + $0x67c] sm:$0xff]
    %v3793 = vld [vmem:[#allocation26 + $0x684] sm:$0xff]
    %v3794 = vld [vmem:[#allocation26 + $0x68c] sm:$0xf]
    %v3795 = vld [vmem:[#allocation26 + $0x690] sm:$0xff]
    %v3796 = vld [vmem:[#allocation26 + $0x698] sm:$0xff]
    %v3797 = vld [vmem:[#allocation26 + $0x6a0] sm:$0xff]
    %v3798 = vld [vmem:[#allocation26 + $0x6a8] sm:$0xf]
    %v3799 = vld [vmem:[#allocation26 + $0x6ac] sm:$0xff]
    %v3800 = vld [vmem:[#allocation26 + $0x6b4] sm:$0xff]
    %v3801 = vld [vmem:[#allocation26 + $0x6bc] sm:$0xff]
    %v3802 = vld [vmem:[#allocation26 + $0x6c4] sm:$0xf]
    %v3803 = vld [vmem:[#allocation26 + $0x6c8] sm:$0xff]
    %v3804 = vld [vmem:[#allocation26 + $0x6d0] sm:$0xff]
    %v3805 = vld [vmem:[#allocation26 + $0x6d8] sm:$0xff]
    %v3806 = vld [vmem:[#allocation26 + $0x6e0] sm:$0xf]
    %v3807 = vld [vmem:[#allocation26 + $0x6e4] sm:$0xff]
    %v3808 = vld [vmem:[#allocation26 + $0x6ec] sm:$0xff]
    %v3809 = vld [vmem:[#allocation26 + $0x6f4] sm:$0xff]
    %v3810 = vld [vmem:[#allocation26 + $0x6fc] sm:$0xf]
    %v3811 = vld [vmem:[#allocation26 + $0x700] sm:$0xff]
    %v3812 = vld [vmem:[#allocation26 + $0x708] sm:$0xff]
    %v3813 = vld [vmem:[#allocation26 + $0x710] sm:$0xff]
    %v3814 = vld [vmem:[#allocation26 + $0x718] sm:$0xf]
    %v3815 = vld [vmem:[#allocation26 + $0x71c] sm:$0xff]
    %v3816 = vld [vmem:[#allocation26 + $0x724] sm:$0xff]
    %v3817 = vld [vmem:[#allocation26 + $0x72c] sm:$0xff]
    %v3818 = vld [vmem:[#allocation26 + $0x734] sm:$0xf]
    %v3819 = vld [vmem:[#allocation26 + $0x738] sm:$0xff]
    %v3820 = vld [vmem:[#allocation26 + $0x740] sm:$0xff]
    %v3821 = vld [vmem:[#allocation26 + $0x748] sm:$0xff]
    %v3822 = vld [vmem:[#allocation26 + $0x750] sm:$0xf]
    %v3823 = vld [vmem:[#allocation26 + $0x754] sm:$0xff]
    %v3824 = vld [vmem:[#allocation26 + $0x75c] sm:$0xff]
    %v3825 = vld [vmem:[#allocation26 + $0x764] sm:$0xff]
    %v3826 = vld [vmem:[#allocation26 + $0x76c] sm:$0xf]
    %v3827 = vld [vmem:[#allocation26 + $0x770] sm:$0xff]
    %v3828 = vld [vmem:[#allocation26 + $0x778] sm:$0xff]
    %v3829 = vld [vmem:[#allocation26 + $0x780] sm:$0xff]
    %v3830 = vld [vmem:[#allocation26 + $0x788] sm:$0xf]
    %v3831 = vld [vmem:[#allocation26 + $0x78c] sm:$0xff]
    %v3832 = vld [vmem:[#allocation26 + $0x794] sm:$0xff]
    %v3833 = vld [vmem:[#allocation26 + $0x79c] sm:$0xff]
    %v3834 = vld [vmem:[#allocation26 + $0x7a4] sm:$0xf]
    %v3835 = vld [vmem:[#allocation26 + $0x7a8] sm:$0xff]
    %v3836 = vld [vmem:[#allocation26 + $0x7b0] sm:$0xff]
    %v3837 = vld [vmem:[#allocation26 + $0x7b8] sm:$0xff]
    %v3838 = vld [vmem:[#allocation26 + $0x7c0] sm:$0xf]
    %v3839 = vld [vmem:[#allocation26 + $0x7c4] sm:$0xff]
    %v3840 = vld [vmem:[#allocation26 + $0x7cc] sm:$0xff]
    %v3841 = vld [vmem:[#allocation26 + $0x7d4] sm:$0xff]
    %v3842 = vld [vmem:[#allocation26 + $0x7dc] sm:$0xf]
    %v3843 = vld [vmem:[#allocation26 + $0x7e0] sm:$0xff]
    %v3844 = vld [vmem:[#allocation26 + $0x7e8] sm:$0xff]
    %v3845 = vld [vmem:[#allocation26 + $0x7f0] sm:$0xff]
    %v3846 = vld [vmem:[#allocation26 + $0x7f8] sm:$0xf]
    %v3847 = vld [vmem:[#allocation26 + $0x7fc] sm:$0xff]
    %v3848 = vld [vmem:[#allocation26 + $0x804] sm:$0xff]
    %v3849 = vld [vmem:[#allocation26 + $0x80c] sm:$0xff]
    %v3850 = vld [vmem:[#allocation26 + $0x814] sm:$0xf]
    %v3851 = vld [vmem:[#allocation26 + $0x818] sm:$0xff]
    %v3852 = vld [vmem:[#allocation26 + $0x820] sm:$0xff]
    %v3853 = vld [vmem:[#allocation26 + $0x828] sm:$0xff]
    %v3854 = vld [vmem:[#allocation26 + $0x830] sm:$0xf]
    %v3855 = vld [vmem:[#allocation26 + $0x834] sm:$0xff]
    %v3856 = vld [vmem:[#allocation26 + $0x83c] sm:$0xff]
    %v3857 = vld [vmem:[#allocation26 + $0x844] sm:$0xff]
    %v3858 = vld [vmem:[#allocation26 + $0x84c] sm:$0xf]
    %v3859 = vld [vmem:[#allocation26 + $0x850] sm:$0xff]
    %v3860 = vld [vmem:[#allocation26 + $0x858] sm:$0xff]
    %v3861 = vld [vmem:[#allocation26 + $0x860] sm:$0xff]
    %v3862 = vld [vmem:[#allocation26 + $0x868] sm:$0xf]
    %v3863 = vld [vmem:[#allocation26 + $0x86c] sm:$0xff]
    %v3864 = vld [vmem:[#allocation26 + $0x874] sm:$0xff]
    %v3865 = vld [vmem:[#allocation26 + $0x87c] sm:$0xff]
    %v3866 = vld [vmem:[#allocation26 + $0x884] sm:$0xf]
    %v3867 = vld [vmem:[#allocation26 + $0x888] sm:$0xff]
    %v3868 = vld [vmem:[#allocation26 + $0x890] sm:$0xff]
    %v3869 = vld [vmem:[#allocation26 + $0x898] sm:$0xff]
    %v3870 = vld [vmem:[#allocation26 + $0x8a0] sm:$0xf]
    %v3871 = vld [vmem:[#allocation26 + $0x8a4] sm:$0xff]
    %v3872 = vld [vmem:[#allocation26 + $0x8ac] sm:$0xff]
    %v3873 = vld [vmem:[#allocation26 + $0x8b4] sm:$0xff]
    %v3874 = vld [vmem:[#allocation26 + $0x8bc] sm:$0xf]
    %v3875 = vld [vmem:[#allocation26 + $0x8c0] sm:$0xff]
    %v3876 = vld [vmem:[#allocation26 + $0x8c8] sm:$0xff]
    %v3877 = vld [vmem:[#allocation26 + $0x8d0] sm:$0xff]
    %v3878 = vld [vmem:[#allocation26 + $0x8d8] sm:$0xf]
    %v3879 = vld [vmem:[#allocation26 + $0x8dc] sm:$0xff]
    %v3880 = vld [vmem:[#allocation26 + $0x8e4] sm:$0xff]
    %v3881 = vld [vmem:[#allocation26 + $0x8ec] sm:$0xff]
    %v3882 = vld [vmem:[#allocation26 + $0x8f4] sm:$0xf]
    %v3883 = vld [vmem:[#allocation26 + $0x8f8] sm:$0xff]
    %v3884 = vld [vmem:[#allocation26 + $0x900] sm:$0xff]
    %v3885 = vld [vmem:[#allocation26 + $0x908] sm:$0xff]
    %v3886 = vld [vmem:[#allocation26 + $0x910] sm:$0xf]
    %v3887 = vld [vmem:[#allocation26 + $0x914] sm:$0xff]
    %v3888 = vld [vmem:[#allocation26 + $0x91c] sm:$0xff]
    %v3889 = vld [vmem:[#allocation26 + $0x924] sm:$0xff]
    %v3890 = vld [vmem:[#allocation26 + $0x92c] sm:$0xf]
    %v3891 = vld [vmem:[#allocation26 + $0x930] sm:$0xff]
    %v3892 = vld [vmem:[#allocation26 + $0x938] sm:$0xff]
    %v3893 = vld [vmem:[#allocation26 + $0x940] sm:$0xff]
    %v3894 = vld [vmem:[#allocation26 + $0x948] sm:$0xf]
    %v3895 = vld [vmem:[#allocation26 + $0x94c] sm:$0xff]
    %v3896 = vld [vmem:[#allocation26 + $0x954] sm:$0xff]
    %v3897 = vld [vmem:[#allocation26 + $0x95c] sm:$0xff]
    %v3898 = vld [vmem:[#allocation26 + $0x964] sm:$0xf]
    %v3899 = vld [vmem:[#allocation26 + $0x968] sm:$0xff]
    %v3900 = vld [vmem:[#allocation26 + $0x970] sm:$0xff]
    %v3901 = vld [vmem:[#allocation26 + $0x978] sm:$0xff]
    %v3902 = vld [vmem:[#allocation26 + $0x980] sm:$0xf]
    %v3903 = vld [vmem:[#allocation26 + $0x984] sm:$0xff]
    %v3904 = vld [vmem:[#allocation26 + $0x98c] sm:$0xff]
    %v3905 = vld [vmem:[#allocation26 + $0x994] sm:$0xff]
    %v3906 = vld [vmem:[#allocation26 + $0x99c] sm:$0xf]
    %v3907 = vld [vmem:[#allocation26 + $0x9a0] sm:$0xff]
    %v3908 = vld [vmem:[#allocation26 + $0x9a8] sm:$0xff]
    %v3909 = vld [vmem:[#allocation26 + $0x9b0] sm:$0xff]
    %v3910 = vld [vmem:[#allocation26 + $0x9b8] sm:$0xf]
    %v3911 = vld [vmem:[#allocation26 + $0x9bc] sm:$0xff]
    %v3912 = vld [vmem:[#allocation26 + $0x9c4] sm:$0xff]
    %v3913 = vld [vmem:[#allocation26 + $0x9cc] sm:$0xff]
    %v3914 = vld [vmem:[#allocation26 + $0x9d4] sm:$0xf]
    %v3915 = vld [vmem:[#allocation26 + $0x9d8] sm:$0xff]
    %v3916 = vld [vmem:[#allocation26 + $0x9e0] sm:$0xff]
    %v3917 = vld [vmem:[#allocation26 + $0x9e8] sm:$0xff]
    %v3918 = vld [vmem:[#allocation26 + $0x9f0] sm:$0xf]
    %v3919 = vld [vmem:[#allocation26 + $0x9f4] sm:$0xff]
    %v3920 = vld [vmem:[#allocation26 + $0x9fc] sm:$0xff]
    %v3921 = vld [vmem:[#allocation26 + $0xa04] sm:$0xff]
    %v3922 = vld [vmem:[#allocation26 + $0xa0c] sm:$0xf]
    %v3923 = vld [vmem:[#allocation26 + $0xa10] sm:$0xff]
    %v3924 = vld [vmem:[#allocation26 + $0xa18] sm:$0xff]
    %v3925 = vld [vmem:[#allocation26 + $0xa20] sm:$0xff]
    %v3926 = vld [vmem:[#allocation26 + $0xa28] sm:$0xf]
    %v3927 = vld [vmem:[#allocation26 + $0xa2c] sm:$0xff]
    %v3928 = vld [vmem:[#allocation26 + $0xa34] sm:$0xff]
    %v3929 = vld [vmem:[#allocation26 + $0xa3c] sm:$0xff]
    %v3930 = vld [vmem:[#allocation26 + $0xa44] sm:$0xf]
    %v3931 = vld [vmem:[#allocation26 + $0xa48] sm:$0xff]
    %v3932 = vld [vmem:[#allocation26 + $0xa50] sm:$0xff]
    %v3933 = vld [vmem:[#allocation26 + $0xa58] sm:$0xff]
    %v3934 = vld [vmem:[#allocation26 + $0xa60] sm:$0xf]
    %v3935 = vld [vmem:[#allocation26 + $0xa64] sm:$0xff]
    %v3936 = vld [vmem:[#allocation26 + $0xa6c] sm:$0xff]
    %v3937 = vld [vmem:[#allocation26 + $0xa74] sm:$0xff]
    %v3938 = vld [vmem:[#allocation26 + $0xa7c] sm:$0xf]
    %v3939 = vld [vmem:[#allocation26 + $0xa80] sm:$0xff]
    %v3940 = vld [vmem:[#allocation26 + $0xa88] sm:$0xff]
    %v3941 = vld [vmem:[#allocation26 + $0xa90] sm:$0xff]
    %v3942 = vld [vmem:[#allocation26 + $0xa98] sm:$0xf]
    %v3943 = vld [vmem:[#allocation26 + $0xa9c] sm:$0xff]
    %v3944 = vld [vmem:[#allocation26 + $0xaa4] sm:$0xff]
    %v3945 = vld [vmem:[#allocation26 + $0xaac] sm:$0xff]
    %v3946 = vld [vmem:[#allocation26 + $0xab4] sm:$0xf]
    %v3947 = vld [vmem:[#allocation26 + $0xab8] sm:$0xff]
    %v3948 = vld [vmem:[#allocation26 + $0xac0] sm:$0xff]
    %v3949 = vld [vmem:[#allocation26 + $0xac8] sm:$0xff]
    %v3950 = vld [vmem:[#allocation26 + $0xad0] sm:$0xf]
    %v3951 = vld [vmem:[#allocation26 + $0xad4] sm:$0xff]
    %v3952 = vld [vmem:[#allocation26 + $0xadc] sm:$0xff]
    %v3953 = vld [vmem:[#allocation26 + $0xae4] sm:$0xff]
    %v3954 = vld [vmem:[#allocation26 + $0xaec] sm:$0xf]
    %v3955 = vld [vmem:[#allocation26 + $0xaf0] sm:$0xff]
    %v3956 = vld [vmem:[#allocation26 + $0xaf8] sm:$0xff]
    %v3957 = vld [vmem:[#allocation26 + $0xb00] sm:$0xff]
    %v3958 = vld [vmem:[#allocation26 + $0xb08] sm:$0xf]
    %v3959 = vld [vmem:[#allocation26 + $0xb0c] sm:$0xff]
    %v3960 = vld [vmem:[#allocation26 + $0xb14] sm:$0xff]
    %v3961 = vld [vmem:[#allocation26 + $0xb1c] sm:$0xff]
    %v3962 = vld [vmem:[#allocation26 + $0xb24] sm:$0xf]
    %v3963 = vld [vmem:[#allocation26 + $0xb28] sm:$0xff]
    %v3964 = vld [vmem:[#allocation26 + $0xb30] sm:$0xff]
    %v3965 = vld [vmem:[#allocation26 + $0xb38] sm:$0xff]
    %v3966 = vld [vmem:[#allocation26 + $0xb40] sm:$0xf]
    %v3967 = vld [vmem:[#allocation26 + $0xb44] sm:$0xff]
    %v3968 = vld [vmem:[#allocation26 + $0xb4c] sm:$0xff]
    %v3969 = vld [vmem:[#allocation26 + $0xb54] sm:$0xff]
    %v3970 = vld [vmem:[#allocation26 + $0xb5c] sm:$0xf]
    %v3971 = vld [vmem:[#allocation26 + $0xb60] sm:$0xff]
    %v3972 = vld [vmem:[#allocation26 + $0xb68] sm:$0xff]
    %v3973 = vld [vmem:[#allocation26 + $0xb70] sm:$0xff]
    %v3974 = vld [vmem:[#allocation26 + $0xb78] sm:$0xf]
    %v3975 = vld [vmem:[#allocation26 + $0xb7c] sm:$0xff]
    %v3976 = vld [vmem:[#allocation26 + $0xb84] sm:$0xff]
    %v3977 = vld [vmem:[#allocation26 + $0xb8c] sm:$0xff]
    %v3978 = vld [vmem:[#allocation26 + $0xb94] sm:$0xf]
    %v3979 = vld [vmem:[#allocation26 + $0xb98] sm:$0xff]
    %v3980 = vld [vmem:[#allocation26 + $0xba0] sm:$0xff]
    %v3981 = vld [vmem:[#allocation26 + $0xba8] sm:$0xff]
    %v3982 = vld [vmem:[#allocation26 + $0xbb0] sm:$0xf]
    %v3983 = vld [vmem:[#allocation26 + $0xbb4] sm:$0xff]
    %v3984 = vld [vmem:[#allocation26 + $0xbbc] sm:$0xff]
    %v3985 = vld [vmem:[#allocation26 + $0xbc4] sm:$0xff]
    %v3986 = vld [vmem:[#allocation26 + $0xbcc] sm:$0xf]
    %v3987 = vld [vmem:[#allocation26 + $0xbd0] sm:$0xff]
    %v3988 = vld [vmem:[#allocation26 + $0xbd8] sm:$0xff]
    %v3989 = vld [vmem:[#allocation26 + $0xbe0] sm:$0xff]
    %v3990 = vld [vmem:[#allocation26 + $0xbe8] sm:$0xf]
    %v3991 = vld [vmem:[#allocation26 + $0xbec] sm:$0xff]
    %v3992 = vld [vmem:[#allocation26 + $0xbf4] sm:$0xff]
    %v3993 = vld [vmem:[#allocation26 + $0xbfc] sm:$0xff]
    %v3994 = vld [vmem:[#allocation26 + $0xc04] sm:$0xf]
    %v3995 = vld [vmem:[#allocation26 + $0xc08] sm:$0xff]
    %v3996 = vld [vmem:[#allocation26 + $0xc10] sm:$0xff]
    %v3997 = vld [vmem:[#allocation26 + $0xc18] sm:$0xff]
    %v3998 = vld [vmem:[#allocation26 + $0xc20] sm:$0xf]
    %v3999 = vld [vmem:[#allocation26 + $0xc24] sm:$0xff]
    %v4000 = vld [vmem:[#allocation26 + $0xc2c] sm:$0xff]
    %v4001 = vld [vmem:[#allocation26 + $0xc34] sm:$0xff]
    %v4002 = vld [vmem:[#allocation26 + $0xc3c] sm:$0xf]
    %v4003 = vld [vmem:[#allocation26 + $0xc40] sm:$0xff]
    %v4004 = vld [vmem:[#allocation26 + $0xc48] sm:$0xff]
    %v4005 = vld [vmem:[#allocation26 + $0xc50] sm:$0xff]
    %v4006 = vld [vmem:[#allocation26 + $0xc58] sm:$0xf]
    %v4007 = vld [vmem:[#allocation26 + $0xc5c] sm:$0xff]
    %v4008 = vld [vmem:[#allocation26 + $0xc64] sm:$0xff]
    %v4009 = vld [vmem:[#allocation26 + $0xc6c] sm:$0xff]
    %v4010 = vld [vmem:[#allocation26 + $0xc74] sm:$0xf]
    %v4011 = vld [vmem:[#allocation26 + $0xc78] sm:$0xff]
    %v4012 = vld [vmem:[#allocation26 + $0xc80] sm:$0xff]
    %v4013 = vld [vmem:[#allocation26 + $0xc88] sm:$0xff]
    %v4014 = vld [vmem:[#allocation26 + $0xc90] sm:$0xf]
    %v4015 = vld [vmem:[#allocation26 + $0xc94] sm:$0xff]
    %v4016 = vld [vmem:[#allocation26 + $0xc9c] sm:$0xff]
    %v4017 = vld [vmem:[#allocation26 + $0xca4] sm:$0xff]
    %v4018 = vld [vmem:[#allocation26 + $0xcac] sm:$0xf]
    %v4019 = vld [vmem:[#allocation26 + $0xcb0] sm:$0xff]
    %v4020 = vld [vmem:[#allocation26 + $0xcb8] sm:$0xff]
    %v4021 = vld [vmem:[#allocation26 + $0xcc0] sm:$0xff]
    %v4022 = vld [vmem:[#allocation26 + $0xcc8] sm:$0xf]
    %v4023 = vld [vmem:[#allocation26 + $0xccc] sm:$0xff]
    %v4024 = vld [vmem:[#allocation26 + $0xcd4] sm:$0xff]
    %v4025 = vld [vmem:[#allocation26 + $0xcdc] sm:$0xff]
    %v4026 = vld [vmem:[#allocation26 + $0xce4] sm:$0xf]
    %v4027 = vld [vmem:[#allocation26 + $0xce8] sm:$0xff]
    %v4028 = vld [vmem:[#allocation26 + $0xcf0] sm:$0xff]
    %v4029 = vld [vmem:[#allocation26 + $0xcf8] sm:$0xff]
    %v4030 = vld [vmem:[#allocation26 + $0xd00] sm:$0xf]
    %v4031 = vld [vmem:[#allocation26 + $0xd04] sm:$0xff]
    %v4032 = vld [vmem:[#allocation26 + $0xd0c] sm:$0xff]
    %v4033 = vld [vmem:[#allocation26 + $0xd14] sm:$0xff]
    %v4034 = vld [vmem:[#allocation26 + $0xd1c] sm:$0xf]
    %v4035 = vld [vmem:[#allocation26 + $0xd20] sm:$0xff]
    %v4036 = vld [vmem:[#allocation26 + $0xd28] sm:$0xff]
    %v4037 = vld [vmem:[#allocation26 + $0xd30] sm:$0xff]
    %v4038 = vld [vmem:[#allocation26 + $0xd38] sm:$0xf]
    %v4039 = vld [vmem:[#allocation26 + $0xd3c] sm:$0xff]
    %v4040 = vld [vmem:[#allocation26 + $0xd44] sm:$0xff]
    %v4041 = vld [vmem:[#allocation26 + $0xd4c] sm:$0xff]
    %v4042 = vld [vmem:[#allocation26 + $0xd54] sm:$0xf]
    %v4043 = vld [vmem:[#allocation26 + $0xd58] sm:$0xff]
    %v4044 = vld [vmem:[#allocation26 + $0xd60] sm:$0xff]
    %v4045 = vld [vmem:[#allocation26 + $0xd68] sm:$0xff]
    %v4046 = vld [vmem:[#allocation26 + $0xd70] sm:$0xf]
    %v4047 = vld [vmem:[#allocation26 + $0xd74] sm:$0xff]
    %v4048 = vld [vmem:[#allocation26 + $0xd7c] sm:$0xff]
    %v4049 = vld [vmem:[#allocation26 + $0xd84] sm:$0xff]
    %v4050 = vld [vmem:[#allocation26 + $0xd8c] sm:$0xf]
    %v4051 = vld [vmem:[#allocation26 + $0xd90] sm:$0xff]
    %v4052 = vld [vmem:[#allocation26 + $0xd98] sm:$0xff]
    %v4053 = vld [vmem:[#allocation26 + $0xda0] sm:$0xff]
    %v4054 = vld [vmem:[#allocation26 + $0xda8] sm:$0xf]
    %v4055 = vld [vmem:[#allocation26 + $0xdac] sm:$0xff]
    %v4056 = vld [vmem:[#allocation26 + $0xdb4] sm:$0xff]
    %v4057 = vld [vmem:[#allocation26 + $0xdbc] sm:$0xff]
    %v4058 = vld [vmem:[#allocation26 + $0xdc4] sm:$0xf]
    %v4059 = vld [vmem:[#allocation26 + $0xdc8] sm:$0xff]
    %v4060 = vld [vmem:[#allocation26 + $0xdd0] sm:$0xff]
    %v4061 = vld [vmem:[#allocation26 + $0xdd8] sm:$0xff]
    %v4062 = vld [vmem:[#allocation26 + $0xde0] sm:$0xf]
    %v4063 = vld [vmem:[#allocation26 + $0xde4] sm:$0xff]
    %v4064 = vld [vmem:[#allocation26 + $0xdec] sm:$0xff]
    %v4065 = vld [vmem:[#allocation26 + $0xdf4] sm:$0xff]
    %v4066 = vld [vmem:[#allocation26 + $0xdfc] sm:$0xf]
    %v4067 = vld [vmem:[#allocation28] sm:$0xff]
    %v4069 = vperm.slane %v4067, 0
    %v4070 = vperm.slane %v4067, 1
    %v4071 = vperm.slane %v4067, 2
    %v4072 = vperm.slane %v4067, 3
    %v4073 = vperm.slane %v4067, 4
    %v4074 = vperm.slane %v4067, 5
    %v4075 = vperm.slane %v4067, 6
    %v4595 = vunpack.c.l.b16 %v3555
    %v4596 = vunpack.c.h.b16 %v3555
    %v4597 = vunpack.c.l.b16 %v3556
    %v4598 = vunpack.c.h.b16 %v3556
    %v4599 = vunpack.c.l.b16 %v3557
    %v4600 = vunpack.c.h.b16 %v3557
    %v4601 = vunpack.c.l.b16 %v3558
    %v4602 = vunpack.c.l.b16 %v3559
    %v4603 = vunpack.c.h.b16 %v3559
    %v4604 = vunpack.c.l.b16 %v3560
    %v4605 = vunpack.c.h.b16 %v3560
    %v4606 = vunpack.c.l.b16 %v3561
    %v4607 = vunpack.c.h.b16 %v3561
    %v4608 = vunpack.c.l.b16 %v3562
    %v4609 = vunpack.c.l.b16 %v3563
    %v4610 = vunpack.c.h.b16 %v3563
    %v4611 = vunpack.c.l.b16 %v3564
    %v4612 = vunpack.c.h.b16 %v3564
    %v4613 = vunpack.c.l.b16 %v3565
    %v4614 = vunpack.c.h.b16 %v3565
    %v4615 = vunpack.c.l.b16 %v3566
    %v4616 = vunpack.c.l.b16 %v3567
    %v4617 = vunpack.c.h.b16 %v3567
    %v4618 = vunpack.c.l.b16 %v3568
    %v4619 = vunpack.c.h.b16 %v3568
    %v4620 = vunpack.c.l.b16 %v3569
    %v4621 = vunpack.c.h.b16 %v3569
    %v4622 = vunpack.c.l.b16 %v3570
    %v4623 = vunpack.c.l.b16 %v3571
    %v4624 = vunpack.c.h.b16 %v3571
    %v4625 = vunpack.c.l.b16 %v3572
    %v4626 = vunpack.c.h.b16 %v3572
    %v4627 = vunpack.c.l.b16 %v3573
    %v4628 = vunpack.c.h.b16 %v3573
    %v4629 = vunpack.c.l.b16 %v3574
    %v4630 = vunpack.c.l.b16 %v3575
    %v4631 = vunpack.c.h.b16 %v3575
    %v4632 = vunpack.c.l.b16 %v3576
    %v4633 = vunpack.c.h.b16 %v3576
    %v4634 = vunpack.c.l.b16 %v3577
    %v4635 = vunpack.c.h.b16 %v3577
    %v4636 = vunpack.c.l.b16 %v3578
    %v4637 = vunpack.c.l.b16 %v3579
    %v4638 = vunpack.c.h.b16 %v3579
    %v4639 = vunpack.c.l.b16 %v3580
    %v4640 = vunpack.c.h.b16 %v3580
    %v4641 = vunpack.c.l.b16 %v3581
    %v4642 = vunpack.c.h.b16 %v3581
    %v4643 = vunpack.c.l.b16 %v3582
    %v4644 = vunpack.c.l.b16 %v3583
    %v4645 = vunpack.c.h.b16 %v3583
    %v4646 = vunpack.c.l.b16 %v3584
    %v4647 = vunpack.c.h.b16 %v3584
    %v4648 = vunpack.c.l.b16 %v3585
    %v4649 = vunpack.c.h.b16 %v3585
    %v4650 = vunpack.c.l.b16 %v3586
    %v4651 = vunpack.c.l.b16 %v3587
    %v4652 = vunpack.c.h.b16 %v3587
    %v4653 = vunpack.c.l.b16 %v3588
    %v4654 = vunpack.c.h.b16 %v3588
    %v4655 = vunpack.c.l.b16 %v3589
    %v4656 = vunpack.c.h.b16 %v3589
    %v4657 = vunpack.c.l.b16 %v3590
    %v4658 = vunpack.c.l.b16 %v3591
    %v4659 = vunpack.c.h.b16 %v3591
    %v4660 = vunpack.c.l.b16 %v3592
    %v4661 = vunpack.c.h.b16 %v3592
    %v4662 = vunpack.c.l.b16 %v3593
    %v4663 = vunpack.c.h.b16 %v3593
    %v4664 = vunpack.c.l.b16 %v3594
    %v4665 = vunpack.c.l.b16 %v3595
    %v4666 = vunpack.c.h.b16 %v3595
    %v4667 = vunpack.c.l.b16 %v3596
    %v4668 = vunpack.c.h.b16 %v3596
    %v4669 = vunpack.c.l.b16 %v3597
    %v4670 = vunpack.c.h.b16 %v3597
    %v4671 = vunpack.c.l.b16 %v3598
    %v4672 = vunpack.c.l.b16 %v3599
    %v4673 = vunpack.c.h.b16 %v3599
    %v4674 = vunpack.c.l.b16 %v3600
    %v4675 = vunpack.c.h.b16 %v3600
    %v4676 = vunpack.c.l.b16 %v3601
    %v4677 = vunpack.c.h.b16 %v3601
    %v4678 = vunpack.c.l.b16 %v3602
    %v4679 = vunpack.c.l.b16 %v3603
    %v4680 = vunpack.c.h.b16 %v3603
    %v4681 = vunpack.c.l.b16 %v3604
    %v4682 = vunpack.c.h.b16 %v3604
    %v4683 = vunpack.c.l.b16 %v3605
    %v4684 = vunpack.c.h.b16 %v3605
    %v4685 = vunpack.c.l.b16 %v3606
    %v4686 = vunpack.c.l.b16 %v3607
    %v4687 = vunpack.c.h.b16 %v3607
    %v4688 = vunpack.c.l.b16 %v3608
    %v4689 = vunpack.c.h.b16 %v3608
    %v4690 = vunpack.c.l.b16 %v3609
    %v4691 = vunpack.c.h.b16 %v3609
    %v4692 = vunpack.c.l.b16 %v3610
    %v4693 = vunpack.c.l.b16 %v3611
    %v4694 = vunpack.c.h.b16 %v3611
    %v4695 = vunpack.c.l.b16 %v3612
    %v4696 = vunpack.c.h.b16 %v3612
    %v4697 = vunpack.c.l.b16 %v3613
    %v4698 = vunpack.c.h.b16 %v3613
    %v4699 = vunpack.c.l.b16 %v3614
    %v4700 = vunpack.c.l.b16 %v3615
    %v4701 = vunpack.c.h.b16 %v3615
    %v4702 = vunpack.c.l.b16 %v3616
    %v4703 = vunpack.c.h.b16 %v3616
    %v4704 = vunpack.c.l.b16 %v3617
    %v4705 = vunpack.c.h.b16 %v3617
    %v4706 = vunpack.c.l.b16 %v3618
    %v4707 = vunpack.c.l.b16 %v3619
    %v4708 = vunpack.c.h.b16 %v3619
    %v4709 = vunpack.c.l.b16 %v3620
    %v4710 = vunpack.c.h.b16 %v3620
    %v4711 = vunpack.c.l.b16 %v3621
    %v4712 = vunpack.c.h.b16 %v3621
    %v4713 = vunpack.c.l.b16 %v3622
    %v4714 = vunpack.c.l.b16 %v3623
    %v4715 = vunpack.c.h.b16 %v3623
    %v4716 = vunpack.c.l.b16 %v3624
    %v4717 = vunpack.c.h.b16 %v3624
    %v4718 = vunpack.c.l.b16 %v3625
    %v4719 = vunpack.c.h.b16 %v3625
    %v4720 = vunpack.c.l.b16 %v3626
    %v4721 = vunpack.c.l.b16 %v3627
    %v4722 = vunpack.c.h.b16 %v3627
    %v4723 = vunpack.c.l.b16 %v3628
    %v4724 = vunpack.c.h.b16 %v3628
    %v4725 = vunpack.c.l.b16 %v3629
    %v4726 = vunpack.c.h.b16 %v3629
    %v4727 = vunpack.c.l.b16 %v3630
    %v4728 = vunpack.c.l.b16 %v3631
    %v4729 = vunpack.c.h.b16 %v3631
    %v4730 = vunpack.c.l.b16 %v3632
    %v4731 = vunpack.c.h.b16 %v3632
    %v4732 = vunpack.c.l.b16 %v3633
    %v4733 = vunpack.c.h.b16 %v3633
    %v4734 = vunpack.c.l.b16 %v3634
    %v4735 = vunpack.c.l.b16 %v3635
    %v4736 = vunpack.c.h.b16 %v3635
    %v4737 = vunpack.c.l.b16 %v3636
    %v4738 = vunpack.c.h.b16 %v3636
    %v4739 = vunpack.c.l.b16 %v3637
    %v4740 = vunpack.c.h.b16 %v3637
    %v4741 = vunpack.c.l.b16 %v3638
    %v4742 = vunpack.c.l.b16 %v3639
    %v4743 = vunpack.c.h.b16 %v3639
    %v4744 = vunpack.c.l.b16 %v3640
    %v4745 = vunpack.c.h.b16 %v3640
    %v4746 = vunpack.c.l.b16 %v3641
    %v4747 = vunpack.c.h.b16 %v3641
    %v4748 = vunpack.c.l.b16 %v3642
    %v4749 = vunpack.c.l.b16 %v3643
    %v4750 = vunpack.c.h.b16 %v3643
    %v4751 = vunpack.c.l.b16 %v3644
    %v4752 = vunpack.c.h.b16 %v3644
    %v4753 = vunpack.c.l.b16 %v3645
    %v4754 = vunpack.c.h.b16 %v3645
    %v4755 = vunpack.c.l.b16 %v3646
    %v4756 = vunpack.c.l.b16 %v3647
    %v4757 = vunpack.c.h.b16 %v3647
    %v4758 = vunpack.c.l.b16 %v3648
    %v4759 = vunpack.c.h.b16 %v3648
    %v4760 = vunpack.c.l.b16 %v3649
    %v4761 = vunpack.c.h.b16 %v3649
    %v4762 = vunpack.c.l.b16 %v3650
    %v4763 = vunpack.c.l.b16 %v3651
    %v4764 = vunpack.c.h.b16 %v3651
    %v4765 = vunpack.c.l.b16 %v3652
    %v4766 = vunpack.c.h.b16 %v3652
    %v4767 = vunpack.c.l.b16 %v3653
    %v4768 = vunpack.c.h.b16 %v3653
    %v4769 = vunpack.c.l.b16 %v3654
    %v4770 = vunpack.c.l.b16 %v3655
    %v4771 = vunpack.c.h.b16 %v3655
    %v4772 = vunpack.c.l.b16 %v3656
    %v4773 = vunpack.c.h.b16 %v3656
    %v4774 = vunpack.c.l.b16 %v3657
    %v4775 = vunpack.c.h.b16 %v3657
    %v4776 = vunpack.c.l.b16 %v3658
    %v4777 = vunpack.c.l.b16 %v3659
    %v4778 = vunpack.c.h.b16 %v3659
    %v4779 = vunpack.c.l.b16 %v3660
    %v4780 = vunpack.c.h.b16 %v3660
    %v4781 = vunpack.c.l.b16 %v3661
    %v4782 = vunpack.c.h.b16 %v3661
    %v4783 = vunpack.c.l.b16 %v3662
    %v4784 = vunpack.c.l.b16 %v3663
    %v4785 = vunpack.c.h.b16 %v3663
    %v4786 = vunpack.c.l.b16 %v3664
    %v4787 = vunpack.c.h.b16 %v3664
    %v4788 = vunpack.c.l.b16 %v3665
    %v4789 = vunpack.c.h.b16 %v3665
    %v4790 = vunpack.c.l.b16 %v3666
    %v4791 = vunpack.c.l.b16 %v3667
    %v4792 = vunpack.c.h.b16 %v3667
    %v4793 = vunpack.c.l.b16 %v3668
    %v4794 = vunpack.c.h.b16 %v3668
    %v4795 = vunpack.c.l.b16 %v3669
    %v4796 = vunpack.c.h.b16 %v3669
    %v4797 = vunpack.c.l.b16 %v3670
    %v4798 = vunpack.c.l.b16 %v3671
    %v4799 = vunpack.c.h.b16 %v3671
    %v4800 = vunpack.c.l.b16 %v3672
    %v4801 = vunpack.c.h.b16 %v3672
    %v4802 = vunpack.c.l.b16 %v3673
    %v4803 = vunpack.c.h.b16 %v3673
    %v4804 = vunpack.c.l.b16 %v3674
    %v4805 = vunpack.c.l.b16 %v3675
    %v4806 = vunpack.c.h.b16 %v3675
    %v4807 = vunpack.c.l.b16 %v3676
    %v4808 = vunpack.c.h.b16 %v3676
    %v4809 = vunpack.c.l.b16 %v3677
    %v4810 = vunpack.c.h.b16 %v3677
    %v4811 = vunpack.c.l.b16 %v3678
    %v4812 = vunpack.c.l.b16 %v3679
    %v4813 = vunpack.c.h.b16 %v3679
    %v4814 = vunpack.c.l.b16 %v3680
    %v4815 = vunpack.c.h.b16 %v3680
    %v4816 = vunpack.c.l.b16 %v3681
    %v4817 = vunpack.c.h.b16 %v3681
    %v4818 = vunpack.c.l.b16 %v3682
    %v4819 = vunpack.c.l.b16 %v3683
    %v4820 = vunpack.c.h.b16 %v3683
    %v4821 = vunpack.c.l.b16 %v3684
    %v4822 = vunpack.c.h.b16 %v3684
    %v4823 = vunpack.c.l.b16 %v3685
    %v4824 = vunpack.c.h.b16 %v3685
    %v4825 = vunpack.c.l.b16 %v3686
    %v4826 = vunpack.c.l.b16 %v3687
    %v4827 = vunpack.c.h.b16 %v3687
    %v4828 = vunpack.c.l.b16 %v3688
    %v4829 = vunpack.c.h.b16 %v3688
    %v4830 = vunpack.c.l.b16 %v3689
    %v4831 = vunpack.c.h.b16 %v3689
    %v4832 = vunpack.c.l.b16 %v3690
    %v4833 = vunpack.c.l.b16 %v3691
    %v4834 = vunpack.c.h.b16 %v3691
    %v4835 = vunpack.c.l.b16 %v3692
    %v4836 = vunpack.c.h.b16 %v3692
    %v4837 = vunpack.c.l.b16 %v3693
    %v4838 = vunpack.c.h.b16 %v3693
    %v4839 = vunpack.c.l.b16 %v3694
    %v4840 = vunpack.c.l.b16 %v3695
    %v4841 = vunpack.c.h.b16 %v3695
    %v4842 = vunpack.c.l.b16 %v3696
    %v4843 = vunpack.c.h.b16 %v3696
    %v4844 = vunpack.c.l.b16 %v3697
    %v4845 = vunpack.c.h.b16 %v3697
    %v4846 = vunpack.c.l.b16 %v3698
    %v4847 = vunpack.c.l.b16 %v3699
    %v4848 = vunpack.c.h.b16 %v3699
    %v4849 = vunpack.c.l.b16 %v3700
    %v4850 = vunpack.c.h.b16 %v3700
    %v4851 = vunpack.c.l.b16 %v3701
    %v4852 = vunpack.c.h.b16 %v3701
    %v4853 = vunpack.c.l.b16 %v3702
    %v4854 = vunpack.c.l.b16 %v3703
    %v4855 = vunpack.c.h.b16 %v3703
    %v4856 = vunpack.c.l.b16 %v3704
    %v4857 = vunpack.c.h.b16 %v3704
    %v4858 = vunpack.c.l.b16 %v3705
    %v4859 = vunpack.c.h.b16 %v3705
    %v4860 = vunpack.c.l.b16 %v3706
    %v4861 = vunpack.c.l.b16 %v3707
    %v4862 = vunpack.c.h.b16 %v3707
    %v4863 = vunpack.c.l.b16 %v3708
    %v4864 = vunpack.c.h.b16 %v3708
    %v4865 = vunpack.c.l.b16 %v3709
    %v4866 = vunpack.c.h.b16 %v3709
    %v4867 = vunpack.c.l.b16 %v3710
    %v4868 = vunpack.c.l.b16 %v3711
    %v4869 = vunpack.c.h.b16 %v3711
    %v4870 = vunpack.c.l.b16 %v3712
    %v4871 = vunpack.c.h.b16 %v3712
    %v4872 = vunpack.c.l.b16 %v3713
    %v4873 = vunpack.c.h.b16 %v3713
    %v4874 = vunpack.c.l.b16 %v3714
    %v4875 = vunpack.c.l.b16 %v3715
    %v4876 = vunpack.c.h.b16 %v3715
    %v4877 = vunpack.c.l.b16 %v3716
    %v4878 = vunpack.c.h.b16 %v3716
    %v4879 = vunpack.c.l.b16 %v3717
    %v4880 = vunpack.c.h.b16 %v3717
    %v4881 = vunpack.c.l.b16 %v3718
    %v4882 = vunpack.c.l.b16 %v3719
    %v4883 = vunpack.c.h.b16 %v3719
    %v4884 = vunpack.c.l.b16 %v3720
    %v4885 = vunpack.c.h.b16 %v3720
    %v4886 = vunpack.c.l.b16 %v3721
    %v4887 = vunpack.c.h.b16 %v3721
    %v4888 = vunpack.c.l.b16 %v3722
    %v4889 = vunpack.c.l.b16 %v3723
    %v4890 = vunpack.c.h.b16 %v3723
    %v4891 = vunpack.c.l.b16 %v3724
    %v4892 = vunpack.c.h.b16 %v3724
    %v4893 = vunpack.c.l.b16 %v3725
    %v4894 = vunpack.c.h.b16 %v3725
    %v4895 = vunpack.c.l.b16 %v3726
    %v4896 = vunpack.c.l.b16 %v3727
    %v4897 = vunpack.c.h.b16 %v3727
    %v4898 = vunpack.c.l.b16 %v3728
    %v4899 = vunpack.c.h.b16 %v3728
    %v4900 = vunpack.c.l.b16 %v3729
    %v4901 = vunpack.c.h.b16 %v3729
    %v4902 = vunpack.c.l.b16 %v3730
    %v4903 = vunpack.c.l.b16 %v3731
    %v4904 = vunpack.c.h.b16 %v3731
    %v4905 = vunpack.c.l.b16 %v3732
    %v4906 = vunpack.c.h.b16 %v3732
    %v4907 = vunpack.c.l.b16 %v3733
    %v4908 = vunpack.c.h.b16 %v3733
    %v4909 = vunpack.c.l.b16 %v3734
    %v4910 = vunpack.c.l.b16 %v3735
    %v4911 = vunpack.c.h.b16 %v3735
    %v4912 = vunpack.c.l.b16 %v3736
    %v4913 = vunpack.c.h.b16 %v3736
    %v4914 = vunpack.c.l.b16 %v3737
    %v4915 = vunpack.c.h.b16 %v3737
    %v4916 = vunpack.c.l.b16 %v3738
    %v4917 = vunpack.c.l.b16 %v3739
    %v4918 = vunpack.c.h.b16 %v3739
    %v4919 = vunpack.c.l.b16 %v3740
    %v4920 = vunpack.c.h.b16 %v3740
    %v4921 = vunpack.c.l.b16 %v3741
    %v4922 = vunpack.c.h.b16 %v3741
    %v4923 = vunpack.c.l.b16 %v3742
    %v4924 = vunpack.c.l.b16 %v3743
    %v4925 = vunpack.c.h.b16 %v3743
    %v4926 = vunpack.c.l.b16 %v3744
    %v4927 = vunpack.c.h.b16 %v3744
    %v4928 = vunpack.c.l.b16 %v3745
    %v4929 = vunpack.c.h.b16 %v3745
    %v4930 = vunpack.c.l.b16 %v3746
    %v4931 = vunpack.c.l.b16 %v3747
    %v4932 = vunpack.c.h.b16 %v3747
    %v4933 = vunpack.c.l.b16 %v3748
    %v4934 = vunpack.c.h.b16 %v3748
    %v4935 = vunpack.c.l.b16 %v3749
    %v4936 = vunpack.c.h.b16 %v3749
    %v4937 = vunpack.c.l.b16 %v3750
    %v4938 = vunpack.c.l.b16 %v3751
    %v4939 = vunpack.c.h.b16 %v3751
    %v4940 = vunpack.c.l.b16 %v3752
    %v4941 = vunpack.c.h.b16 %v3752
    %v4942 = vunpack.c.l.b16 %v3753
    %v4943 = vunpack.c.h.b16 %v3753
    %v4944 = vunpack.c.l.b16 %v3754
    %v4945 = vunpack.c.l.b16 %v3755
    %v4946 = vunpack.c.h.b16 %v3755
    %v4947 = vunpack.c.l.b16 %v3756
    %v4948 = vunpack.c.h.b16 %v3756
    %v4949 = vunpack.c.l.b16 %v3757
    %v4950 = vunpack.c.h.b16 %v3757
    %v4951 = vunpack.c.l.b16 %v3758
    %v4952 = vunpack.c.l.b16 %v3759
    %v4953 = vunpack.c.h.b16 %v3759
    %v4954 = vunpack.c.l.b16 %v3760
    %v4955 = vunpack.c.h.b16 %v3760
    %v4956 = vunpack.c.l.b16 %v3761
    %v4957 = vunpack.c.h.b16 %v3761
    %v4958 = vunpack.c.l.b16 %v3762
    %v4959 = vunpack.c.l.b16 %v3763
    %v4960 = vunpack.c.h.b16 %v3763
    %v4961 = vunpack.c.l.b16 %v3764
    %v4962 = vunpack.c.h.b16 %v3764
    %v4963 = vunpack.c.l.b16 %v3765
    %v4964 = vunpack.c.h.b16 %v3765
    %v4965 = vunpack.c.l.b16 %v3766
    %v4966 = vunpack.c.l.b16 %v3767
    %v4967 = vunpack.c.h.b16 %v3767
    %v4968 = vunpack.c.l.b16 %v3768
    %v4969 = vunpack.c.h.b16 %v3768
    %v4970 = vunpack.c.l.b16 %v3769
    %v4971 = vunpack.c.h.b16 %v3769
    %v4972 = vunpack.c.l.b16 %v3770
    %v4973 = vunpack.c.l.b16 %v3771
    %v4974 = vunpack.c.h.b16 %v3771
    %v4975 = vunpack.c.l.b16 %v3772
    %v4976 = vunpack.c.h.b16 %v3772
    %v4977 = vunpack.c.l.b16 %v3773
    %v4978 = vunpack.c.h.b16 %v3773
    %v4979 = vunpack.c.l.b16 %v3774
    %v4980 = vunpack.c.l.b16 %v3775
    %v4981 = vunpack.c.h.b16 %v3775
    %v4982 = vunpack.c.l.b16 %v3776
    %v4983 = vunpack.c.h.b16 %v3776
    %v4984 = vunpack.c.l.b16 %v3777
    %v4985 = vunpack.c.h.b16 %v3777
    %v4986 = vunpack.c.l.b16 %v3778
    %v4987 = vunpack.c.l.b16 %v3779
    %v4988 = vunpack.c.h.b16 %v3779
    %v4989 = vunpack.c.l.b16 %v3780
    %v4990 = vunpack.c.h.b16 %v3780
    %v4991 = vunpack.c.l.b16 %v3781
    %v4992 = vunpack.c.h.b16 %v3781
    %v4993 = vunpack.c.l.b16 %v3782
    %v4994 = vunpack.c.l.b16 %v3783
    %v4995 = vunpack.c.h.b16 %v3783
    %v4996 = vunpack.c.l.b16 %v3784
    %v4997 = vunpack.c.h.b16 %v3784
    %v4998 = vunpack.c.l.b16 %v3785
    %v4999 = vunpack.c.h.b16 %v3785
    %v5000 = vunpack.c.l.b16 %v3786
    %v5001 = vunpack.c.l.b16 %v3787
    %v5002 = vunpack.c.h.b16 %v3787
    %v5003 = vunpack.c.l.b16 %v3788
    %v5004 = vunpack.c.h.b16 %v3788
    %v5005 = vunpack.c.l.b16 %v3789
    %v5006 = vunpack.c.h.b16 %v3789
    %v5007 = vunpack.c.l.b16 %v3790
    %v5008 = vunpack.c.l.b16 %v3791
    %v5009 = vunpack.c.h.b16 %v3791
    %v5010 = vunpack.c.l.b16 %v3792
    %v5011 = vunpack.c.h.b16 %v3792
    %v5012 = vunpack.c.l.b16 %v3793
    %v5013 = vunpack.c.h.b16 %v3793
    %v5014 = vunpack.c.l.b16 %v3794
    %v5015 = vunpack.c.l.b16 %v3795
    %v5016 = vunpack.c.h.b16 %v3795
    %v5017 = vunpack.c.l.b16 %v3796
    %v5018 = vunpack.c.h.b16 %v3796
    %v5019 = vunpack.c.l.b16 %v3797
    %v5020 = vunpack.c.h.b16 %v3797
    %v5021 = vunpack.c.l.b16 %v3798
    %v5022 = vunpack.c.l.b16 %v3799
    %v5023 = vunpack.c.h.b16 %v3799
    %v5024 = vunpack.c.l.b16 %v3800
    %v5025 = vunpack.c.h.b16 %v3800
    %v5026 = vunpack.c.l.b16 %v3801
    %v5027 = vunpack.c.h.b16 %v3801
    %v5028 = vunpack.c.l.b16 %v3802
    %v5029 = vunpack.c.l.b16 %v3803
    %v5030 = vunpack.c.h.b16 %v3803
    %v5031 = vunpack.c.l.b16 %v3804
    %v5032 = vunpack.c.h.b16 %v3804
    %v5033 = vunpack.c.l.b16 %v3805
    %v5034 = vunpack.c.h.b16 %v3805
    %v5035 = vunpack.c.l.b16 %v3806
    %v5036 = vunpack.c.l.b16 %v3807
    %v5037 = vunpack.c.h.b16 %v3807
    %v5038 = vunpack.c.l.b16 %v3808
    %v5039 = vunpack.c.h.b16 %v3808
    %v5040 = vunpack.c.l.b16 %v3809
    %v5041 = vunpack.c.h.b16 %v3809
    %v5042 = vunpack.c.l.b16 %v3810
    %v5043 = vunpack.c.l.b16 %v3811
    %v5044 = vunpack.c.h.b16 %v3811
    %v5045 = vunpack.c.l.b16 %v3812
    %v5046 = vunpack.c.h.b16 %v3812
    %v5047 = vunpack.c.l.b16 %v3813
    %v5048 = vunpack.c.h.b16 %v3813
    %v5049 = vunpack.c.l.b16 %v3814
    %v5050 = vunpack.c.l.b16 %v3815
    %v5051 = vunpack.c.h.b16 %v3815
    %v5052 = vunpack.c.l.b16 %v3816
    %v5053 = vunpack.c.h.b16 %v3816
    %v5054 = vunpack.c.l.b16 %v3817
    %v5055 = vunpack.c.h.b16 %v3817
    %v5056 = vunpack.c.l.b16 %v3818
    %v5057 = vunpack.c.l.b16 %v3819
    %v5058 = vunpack.c.h.b16 %v3819
    %v5059 = vunpack.c.l.b16 %v3820
    %v5060 = vunpack.c.h.b16 %v3820
    %v5061 = vunpack.c.l.b16 %v3821
    %v5062 = vunpack.c.h.b16 %v3821
    %v5063 = vunpack.c.l.b16 %v3822
    %v5064 = vunpack.c.l.b16 %v3823
    %v5065 = vunpack.c.h.b16 %v3823
    %v5066 = vunpack.c.l.b16 %v3824
    %v5067 = vunpack.c.h.b16 %v3824
    %v5068 = vunpack.c.l.b16 %v3825
    %v5069 = vunpack.c.h.b16 %v3825
    %v5070 = vunpack.c.l.b16 %v3826
    %v5071 = vunpack.c.l.b16 %v3827
    %v5072 = vunpack.c.h.b16 %v3827
    %v5073 = vunpack.c.l.b16 %v3828
    %v5074 = vunpack.c.h.b16 %v3828
    %v5075 = vunpack.c.l.b16 %v3829
    %v5076 = vunpack.c.h.b16 %v3829
    %v5077 = vunpack.c.l.b16 %v3830
    %v5078 = vunpack.c.l.b16 %v3831
    %v5079 = vunpack.c.h.b16 %v3831
    %v5080 = vunpack.c.l.b16 %v3832
    %v5081 = vunpack.c.h.b16 %v3832
    %v5082 = vunpack.c.l.b16 %v3833
    %v5083 = vunpack.c.h.b16 %v3833
    %v5084 = vunpack.c.l.b16 %v3834
    %v5085 = vunpack.c.l.b16 %v3835
    %v5086 = vunpack.c.h.b16 %v3835
    %v5087 = vunpack.c.l.b16 %v3836
    %v5088 = vunpack.c.h.b16 %v3836
    %v5089 = vunpack.c.l.b16 %v3837
    %v5090 = vunpack.c.h.b16 %v3837
    %v5091 = vunpack.c.l.b16 %v3838
    %v5092 = vunpack.c.l.b16 %v3839
    %v5093 = vunpack.c.h.b16 %v3839
    %v5094 = vunpack.c.l.b16 %v3840
    %v5095 = vunpack.c.h.b16 %v3840
    %v5096 = vunpack.c.l.b16 %v3841
    %v5097 = vunpack.c.h.b16 %v3841
    %v5098 = vunpack.c.l.b16 %v3842
    %v5099 = vunpack.c.l.b16 %v3843
    %v5100 = vunpack.c.h.b16 %v3843
    %v5101 = vunpack.c.l.b16 %v3844
    %v5102 = vunpack.c.h.b16 %v3844
    %v5103 = vunpack.c.l.b16 %v3845
    %v5104 = vunpack.c.h.b16 %v3845
    %v5105 = vunpack.c.l.b16 %v3846
    %v5106 = vunpack.c.l.b16 %v3847
    %v5107 = vunpack.c.h.b16 %v3847
    %v5108 = vunpack.c.l.b16 %v3848
    %v5109 = vunpack.c.h.b16 %v3848
    %v5110 = vunpack.c.l.b16 %v3849
    %v5111 = vunpack.c.h.b16 %v3849
    %v5112 = vunpack.c.l.b16 %v3850
    %v5113 = vunpack.c.l.b16 %v3851
    %v5114 = vunpack.c.h.b16 %v3851
    %v5115 = vunpack.c.l.b16 %v3852
    %v5116 = vunpack.c.h.b16 %v3852
    %v5117 = vunpack.c.l.b16 %v3853
    %v5118 = vunpack.c.h.b16 %v3853
    %v5119 = vunpack.c.l.b16 %v3854
    %v5120 = vunpack.c.l.b16 %v3855
    %v5121 = vunpack.c.h.b16 %v3855
    %v5122 = vunpack.c.l.b16 %v3856
    %v5123 = vunpack.c.h.b16 %v3856
    %v5124 = vunpack.c.l.b16 %v3857
    %v5125 = vunpack.c.h.b16 %v3857
    %v5126 = vunpack.c.l.b16 %v3858
    %v5127 = vunpack.c.l.b16 %v3859
    %v5128 = vunpack.c.h.b16 %v3859
    %v5129 = vunpack.c.l.b16 %v3860
    %v5130 = vunpack.c.h.b16 %v3860
    %v5131 = vunpack.c.l.b16 %v3861
    %v5132 = vunpack.c.h.b16 %v3861
    %v5133 = vunpack.c.l.b16 %v3862
    %v5134 = vunpack.c.l.b16 %v3863
    %v5135 = vunpack.c.h.b16 %v3863
    %v5136 = vunpack.c.l.b16 %v3864
    %v5137 = vunpack.c.h.b16 %v3864
    %v5138 = vunpack.c.l.b16 %v3865
    %v5139 = vunpack.c.h.b16 %v3865
    %v5140 = vunpack.c.l.b16 %v3866
    %v5141 = vunpack.c.l.b16 %v3867
    %v5142 = vunpack.c.h.b16 %v3867
    %v5143 = vunpack.c.l.b16 %v3868
    %v5144 = vunpack.c.h.b16 %v3868
    %v5145 = vunpack.c.l.b16 %v3869
    %v5146 = vunpack.c.h.b16 %v3869
    %v5147 = vunpack.c.l.b16 %v3870
    %v5148 = vunpack.c.l.b16 %v3871
    %v5149 = vunpack.c.h.b16 %v3871
    %v5150 = vunpack.c.l.b16 %v3872
    %v5151 = vunpack.c.h.b16 %v3872
    %v5152 = vunpack.c.l.b16 %v3873
    %v5153 = vunpack.c.h.b16 %v3873
    %v5154 = vunpack.c.l.b16 %v3874
    %v5155 = vunpack.c.l.b16 %v3875
    %v5156 = vunpack.c.h.b16 %v3875
    %v5157 = vunpack.c.l.b16 %v3876
    %v5158 = vunpack.c.h.b16 %v3876
    %v5159 = vunpack.c.l.b16 %v3877
    %v5160 = vunpack.c.h.b16 %v3877
    %v5161 = vunpack.c.l.b16 %v3878
    %v5162 = vunpack.c.l.b16 %v3879
    %v5163 = vunpack.c.h.b16 %v3879
    %v5164 = vunpack.c.l.b16 %v3880
    %v5165 = vunpack.c.h.b16 %v3880
    %v5166 = vunpack.c.l.b16 %v3881
    %v5167 = vunpack.c.h.b16 %v3881
    %v5168 = vunpack.c.l.b16 %v3882
    %v5169 = vunpack.c.l.b16 %v3883
    %v5170 = vunpack.c.h.b16 %v3883
    %v5171 = vunpack.c.l.b16 %v3884
    %v5172 = vunpack.c.h.b16 %v3884
    %v5173 = vunpack.c.l.b16 %v3885
    %v5174 = vunpack.c.h.b16 %v3885
    %v5175 = vunpack.c.l.b16 %v3886
    %v5176 = vunpack.c.l.b16 %v3887
    %v5177 = vunpack.c.h.b16 %v3887
    %v5178 = vunpack.c.l.b16 %v3888
    %v5179 = vunpack.c.h.b16 %v3888
    %v5180 = vunpack.c.l.b16 %v3889
    %v5181 = vunpack.c.h.b16 %v3889
    %v5182 = vunpack.c.l.b16 %v3890
    %v5183 = vunpack.c.l.b16 %v3891
    %v5184 = vunpack.c.h.b16 %v3891
    %v5185 = vunpack.c.l.b16 %v3892
    %v5186 = vunpack.c.h.b16 %v3892
    %v5187 = vunpack.c.l.b16 %v3893
    %v5188 = vunpack.c.h.b16 %v3893
    %v5189 = vunpack.c.l.b16 %v3894
    %v5190 = vunpack.c.l.b16 %v3895
    %v5191 = vunpack.c.h.b16 %v3895
    %v5192 = vunpack.c.l.b16 %v3896
    %v5193 = vunpack.c.h.b16 %v3896
    %v5194 = vunpack.c.l.b16 %v3897
    %v5195 = vunpack.c.h.b16 %v3897
    %v5196 = vunpack.c.l.b16 %v3898
    %v5197 = vunpack.c.l.b16 %v3899
    %v5198 = vunpack.c.h.b16 %v3899
    %v5199 = vunpack.c.l.b16 %v3900
    %v5200 = vunpack.c.h.b16 %v3900
    %v5201 = vunpack.c.l.b16 %v3901
    %v5202 = vunpack.c.h.b16 %v3901
    %v5203 = vunpack.c.l.b16 %v3902
    %v5204 = vunpack.c.l.b16 %v3903
    %v5205 = vunpack.c.h.b16 %v3903
    %v5206 = vunpack.c.l.b16 %v3904
    %v5207 = vunpack.c.h.b16 %v3904
    %v5208 = vunpack.c.l.b16 %v3905
    %v5209 = vunpack.c.h.b16 %v3905
    %v5210 = vunpack.c.l.b16 %v3906
    %v5211 = vunpack.c.l.b16 %v3907
    %v5212 = vunpack.c.h.b16 %v3907
    %v5213 = vunpack.c.l.b16 %v3908
    %v5214 = vunpack.c.h.b16 %v3908
    %v5215 = vunpack.c.l.b16 %v3909
    %v5216 = vunpack.c.h.b16 %v3909
    %v5217 = vunpack.c.l.b16 %v3910
    %v5218 = vunpack.c.l.b16 %v3911
    %v5219 = vunpack.c.h.b16 %v3911
    %v5220 = vunpack.c.l.b16 %v3912
    %v5221 = vunpack.c.h.b16 %v3912
    %v5222 = vunpack.c.l.b16 %v3913
    %v5223 = vunpack.c.h.b16 %v3913
    %v5224 = vunpack.c.l.b16 %v3914
    %v5225 = vunpack.c.l.b16 %v3915
    %v5226 = vunpack.c.h.b16 %v3915
    %v5227 = vunpack.c.l.b16 %v3916
    %v5228 = vunpack.c.h.b16 %v3916
    %v5229 = vunpack.c.l.b16 %v3917
    %v5230 = vunpack.c.h.b16 %v3917
    %v5231 = vunpack.c.l.b16 %v3918
    %v5232 = vunpack.c.l.b16 %v3919
    %v5233 = vunpack.c.h.b16 %v3919
    %v5234 = vunpack.c.l.b16 %v3920
    %v5235 = vunpack.c.h.b16 %v3920
    %v5236 = vunpack.c.l.b16 %v3921
    %v5237 = vunpack.c.h.b16 %v3921
    %v5238 = vunpack.c.l.b16 %v3922
    %v5239 = vunpack.c.l.b16 %v3923
    %v5240 = vunpack.c.h.b16 %v3923
    %v5241 = vunpack.c.l.b16 %v3924
    %v5242 = vunpack.c.h.b16 %v3924
    %v5243 = vunpack.c.l.b16 %v3925
    %v5244 = vunpack.c.h.b16 %v3925
    %v5245 = vunpack.c.l.b16 %v3926
    %v5246 = vunpack.c.l.b16 %v3927
    %v5247 = vunpack.c.h.b16 %v3927
    %v5248 = vunpack.c.l.b16 %v3928
    %v5249 = vunpack.c.h.b16 %v3928
    %v5250 = vunpack.c.l.b16 %v3929
    %v5251 = vunpack.c.h.b16 %v3929
    %v5252 = vunpack.c.l.b16 %v3930
    %v5253 = vunpack.c.l.b16 %v3931
    %v5254 = vunpack.c.h.b16 %v3931
    %v5255 = vunpack.c.l.b16 %v3932
    %v5256 = vunpack.c.h.b16 %v3932
    %v5257 = vunpack.c.l.b16 %v3933
    %v5258 = vunpack.c.h.b16 %v3933
    %v5259 = vunpack.c.l.b16 %v3934
    %v5260 = vunpack.c.l.b16 %v3935
    %v5261 = vunpack.c.h.b16 %v3935
    %v5262 = vunpack.c.l.b16 %v3936
    %v5263 = vunpack.c.h.b16 %v3936
    %v5264 = vunpack.c.l.b16 %v3937
    %v5265 = vunpack.c.h.b16 %v3937
    %v5266 = vunpack.c.l.b16 %v3938
    %v5267 = vunpack.c.l.b16 %v3939
    %v5268 = vunpack.c.h.b16 %v3939
    %v5269 = vunpack.c.l.b16 %v3940
    %v5270 = vunpack.c.h.b16 %v3940
    %v5271 = vunpack.c.l.b16 %v3941
    %v5272 = vunpack.c.h.b16 %v3941
    %v5273 = vunpack.c.l.b16 %v3942
    %v5274 = vunpack.c.l.b16 %v3943
    %v5275 = vunpack.c.h.b16 %v3943
    %v5276 = vunpack.c.l.b16 %v3944
    %v5277 = vunpack.c.h.b16 %v3944
    %v5278 = vunpack.c.l.b16 %v3945
    %v5279 = vunpack.c.h.b16 %v3945
    %v5280 = vunpack.c.l.b16 %v3946
    %v5281 = vunpack.c.l.b16 %v3947
    %v5282 = vunpack.c.h.b16 %v3947
    %v5283 = vunpack.c.l.b16 %v3948
    %v5284 = vunpack.c.h.b16 %v3948
    %v5285 = vunpack.c.l.b16 %v3949
    %v5286 = vunpack.c.h.b16 %v3949
    %v5287 = vunpack.c.l.b16 %v3950
    %v5288 = vunpack.c.l.b16 %v3951
    %v5289 = vunpack.c.h.b16 %v3951
    %v5290 = vunpack.c.l.b16 %v3952
    %v5291 = vunpack.c.h.b16 %v3952
    %v5292 = vunpack.c.l.b16 %v3953
    %v5293 = vunpack.c.h.b16 %v3953
    %v5294 = vunpack.c.l.b16 %v3954
    %v5295 = vunpack.c.l.b16 %v3955
    %v5296 = vunpack.c.h.b16 %v3955
    %v5297 = vunpack.c.l.b16 %v3956
    %v5298 = vunpack.c.h.b16 %v3956
    %v5299 = vunpack.c.l.b16 %v3957
    %v5300 = vunpack.c.h.b16 %v3957
    %v5301 = vunpack.c.l.b16 %v3958
    %v5302 = vunpack.c.l.b16 %v3959
    %v5303 = vunpack.c.h.b16 %v3959
    %v5304 = vunpack.c.l.b16 %v3960
    %v5305 = vunpack.c.h.b16 %v3960
    %v5306 = vunpack.c.l.b16 %v3961
    %v5307 = vunpack.c.h.b16 %v3961
    %v5308 = vunpack.c.l.b16 %v3962
    %v5309 = vunpack.c.l.b16 %v3963
    %v5310 = vunpack.c.h.b16 %v3963
    %v5311 = vunpack.c.l.b16 %v3964
    %v5312 = vunpack.c.h.b16 %v3964
    %v5313 = vunpack.c.l.b16 %v3965
    %v5314 = vunpack.c.h.b16 %v3965
    %v5315 = vunpack.c.l.b16 %v3966
    %v5316 = vunpack.c.l.b16 %v3967
    %v5317 = vunpack.c.h.b16 %v3967
    %v5318 = vunpack.c.l.b16 %v3968
    %v5319 = vunpack.c.h.b16 %v3968
    %v5320 = vunpack.c.l.b16 %v3969
    %v5321 = vunpack.c.h.b16 %v3969
    %v5322 = vunpack.c.l.b16 %v3970
    %v5323 = vunpack.c.l.b16 %v3971
    %v5324 = vunpack.c.h.b16 %v3971
    %v5325 = vunpack.c.l.b16 %v3972
    %v5326 = vunpack.c.h.b16 %v3972
    %v5327 = vunpack.c.l.b16 %v3973
    %v5328 = vunpack.c.h.b16 %v3973
    %v5329 = vunpack.c.l.b16 %v3974
    %v5330 = vunpack.c.l.b16 %v3975
    %v5331 = vunpack.c.h.b16 %v3975
    %v5332 = vunpack.c.l.b16 %v3976
    %v5333 = vunpack.c.h.b16 %v3976
    %v5334 = vunpack.c.l.b16 %v3977
    %v5335 = vunpack.c.h.b16 %v3977
    %v5336 = vunpack.c.l.b16 %v3978
    %v5337 = vunpack.c.l.b16 %v3979
    %v5338 = vunpack.c.h.b16 %v3979
    %v5339 = vunpack.c.l.b16 %v3980
    %v5340 = vunpack.c.h.b16 %v3980
    %v5341 = vunpack.c.l.b16 %v3981
    %v5342 = vunpack.c.h.b16 %v3981
    %v5343 = vunpack.c.l.b16 %v3982
    %v5344 = vunpack.c.l.b16 %v3983
    %v5345 = vunpack.c.h.b16 %v3983
    %v5346 = vunpack.c.l.b16 %v3984
    %v5347 = vunpack.c.h.b16 %v3984
    %v5348 = vunpack.c.l.b16 %v3985
    %v5349 = vunpack.c.h.b16 %v3985
    %v5350 = vunpack.c.l.b16 %v3986
    %v5351 = vunpack.c.l.b16 %v3987
    %v5352 = vunpack.c.h.b16 %v3987
    %v5353 = vunpack.c.l.b16 %v3988
    %v5354 = vunpack.c.h.b16 %v3988
    %v5355 = vunpack.c.l.b16 %v3989
    %v5356 = vunpack.c.h.b16 %v3989
    %v5357 = vunpack.c.l.b16 %v3990
    %v5358 = vunpack.c.l.b16 %v3991
    %v5359 = vunpack.c.h.b16 %v3991
    %v5360 = vunpack.c.l.b16 %v3992
    %v5361 = vunpack.c.h.b16 %v3992
    %v5362 = vunpack.c.l.b16 %v3993
    %v5363 = vunpack.c.h.b16 %v3993
    %v5364 = vunpack.c.l.b16 %v3994
    %v5365 = vunpack.c.l.b16 %v3995
    %v5366 = vunpack.c.h.b16 %v3995
    %v5367 = vunpack.c.l.b16 %v3996
    %v5368 = vunpack.c.h.b16 %v3996
    %v5369 = vunpack.c.l.b16 %v3997
    %v5370 = vunpack.c.h.b16 %v3997
    %v5371 = vunpack.c.l.b16 %v3998
    %v5372 = vunpack.c.l.b16 %v3999
    %v5373 = vunpack.c.h.b16 %v3999
    %v5374 = vunpack.c.l.b16 %v4000
    %v5375 = vunpack.c.h.b16 %v4000
    %v5376 = vunpack.c.l.b16 %v4001
    %v5377 = vunpack.c.h.b16 %v4001
    %v5378 = vunpack.c.l.b16 %v4002
    %v5379 = vunpack.c.l.b16 %v4003
    %v5380 = vunpack.c.h.b16 %v4003
    %v5381 = vunpack.c.l.b16 %v4004
    %v5382 = vunpack.c.h.b16 %v4004
    %v5383 = vunpack.c.l.b16 %v4005
    %v5384 = vunpack.c.h.b16 %v4005
    %v5385 = vunpack.c.l.b16 %v4006
    %v5386 = vunpack.c.l.b16 %v4007
    %v5387 = vunpack.c.h.b16 %v4007
    %v5388 = vunpack.c.l.b16 %v4008
    %v5389 = vunpack.c.h.b16 %v4008
    %v5390 = vunpack.c.l.b16 %v4009
    %v5391 = vunpack.c.h.b16 %v4009
    %v5392 = vunpack.c.l.b16 %v4010
    %v5393 = vunpack.c.l.b16 %v4011
    %v5394 = vunpack.c.h.b16 %v4011
    %v5395 = vunpack.c.l.b16 %v4012
    %v5396 = vunpack.c.h.b16 %v4012
    %v5397 = vunpack.c.l.b16 %v4013
    %v5398 = vunpack.c.h.b16 %v4013
    %v5399 = vunpack.c.l.b16 %v4014
    %v5400 = vunpack.c.l.b16 %v4015
    %v5401 = vunpack.c.h.b16 %v4015
    %v5402 = vunpack.c.l.b16 %v4016
    %v5403 = vunpack.c.h.b16 %v4016
    %v5404 = vunpack.c.l.b16 %v4017
    %v5405 = vunpack.c.h.b16 %v4017
    %v5406 = vunpack.c.l.b16 %v4018
    %v5407 = vunpack.c.l.b16 %v4019
    %v5408 = vunpack.c.h.b16 %v4019
    %v5409 = vunpack.c.l.b16 %v4020
    %v5410 = vunpack.c.h.b16 %v4020
    %v5411 = vunpack.c.l.b16 %v4021
    %v5412 = vunpack.c.h.b16 %v4021
    %v5413 = vunpack.c.l.b16 %v4022
    %v5414 = vunpack.c.l.b16 %v4023
    %v5415 = vunpack.c.h.b16 %v4023
    %v5416 = vunpack.c.l.b16 %v4024
    %v5417 = vunpack.c.h.b16 %v4024
    %v5418 = vunpack.c.l.b16 %v4025
    %v5419 = vunpack.c.h.b16 %v4025
    %v5420 = vunpack.c.l.b16 %v4026
    %v5421 = vunpack.c.l.b16 %v4027
    %v5422 = vunpack.c.h.b16 %v4027
    %v5423 = vunpack.c.l.b16 %v4028
    %v5424 = vunpack.c.h.b16 %v4028
    %v5425 = vunpack.c.l.b16 %v4029
    %v5426 = vunpack.c.h.b16 %v4029
    %v5427 = vunpack.c.l.b16 %v4030
    %v5428 = vunpack.c.l.b16 %v4031
    %v5429 = vunpack.c.h.b16 %v4031
    %v5430 = vunpack.c.l.b16 %v4032
    %v5431 = vunpack.c.h.b16 %v4032
    %v5432 = vunpack.c.l.b16 %v4033
    %v5433 = vunpack.c.h.b16 %v4033
    %v5434 = vunpack.c.l.b16 %v4034
    %v5435 = vunpack.c.l.b16 %v4035
    %v5436 = vunpack.c.h.b16 %v4035
    %v5437 = vunpack.c.l.b16 %v4036
    %v5438 = vunpack.c.h.b16 %v4036
    %v5439 = vunpack.c.l.b16 %v4037
    %v5440 = vunpack.c.h.b16 %v4037
    %v5441 = vunpack.c.l.b16 %v4038
    %v5442 = vunpack.c.l.b16 %v4039
    %v5443 = vunpack.c.h.b16 %v4039
    %v5444 = vunpack.c.l.b16 %v4040
    %v5445 = vunpack.c.h.b16 %v4040
    %v5446 = vunpack.c.l.b16 %v4041
    %v5447 = vunpack.c.h.b16 %v4041
    %v5448 = vunpack.c.l.b16 %v4042
    %v5449 = vunpack.c.l.b16 %v4043
    %v5450 = vunpack.c.h.b16 %v4043
    %v5451 = vunpack.c.l.b16 %v4044
    %v5452 = vunpack.c.h.b16 %v4044
    %v5453 = vunpack.c.l.b16 %v4045
    %v5454 = vunpack.c.h.b16 %v4045
    %v5455 = vunpack.c.l.b16 %v4046
    %v5456 = vunpack.c.l.b16 %v4047
    %v5457 = vunpack.c.h.b16 %v4047
    %v5458 = vunpack.c.l.b16 %v4048
    %v5459 = vunpack.c.h.b16 %v4048
    %v5460 = vunpack.c.l.b16 %v4049
    %v5461 = vunpack.c.h.b16 %v4049
    %v5462 = vunpack.c.l.b16 %v4050
    %v5463 = vunpack.c.l.b16 %v4051
    %v5464 = vunpack.c.h.b16 %v4051
    %v5465 = vunpack.c.l.b16 %v4052
    %v5466 = vunpack.c.h.b16 %v4052
    %v5467 = vunpack.c.l.b16 %v4053
    %v5468 = vunpack.c.h.b16 %v4053
    %v5469 = vunpack.c.l.b16 %v4054
    %v5470 = vunpack.c.l.b16 %v4055
    %v5471 = vunpack.c.h.b16 %v4055
    %v5472 = vunpack.c.l.b16 %v4056
    %v5473 = vunpack.c.h.b16 %v4056
    %v5474 = vunpack.c.l.b16 %v4057
    %v5475 = vunpack.c.h.b16 %v4057
    %v5476 = vunpack.c.l.b16 %v4058
    %v5477 = vunpack.c.l.b16 %v4059
    %v5478 = vunpack.c.h.b16 %v4059
    %v5479 = vunpack.c.l.b16 %v4060
    %v5480 = vunpack.c.h.b16 %v4060
    %v5481 = vunpack.c.l.b16 %v4061
    %v5482 = vunpack.c.h.b16 %v4061
    %v5483 = vunpack.c.l.b16 %v4062
    %v5484 = vunpack.c.l.b16 %v4063
    %v5485 = vunpack.c.h.b16 %v4063
    %v5486 = vunpack.c.l.b16 %v4064
    %v5487 = vunpack.c.h.b16 %v4064
    %v5488 = vunpack.c.l.b16 %v4065
    %v5489 = vunpack.c.h.b16 %v4065
    %v5490 = vunpack.c.l.b16 %v4066
    %v5491 = vpack.c.b16 %v4602, %v4595
    %v5492 = vpack.c.b16 %v4603, %v4596
    %v5493 = vpack.c.b16 %v4604, %v4597
    %v5494 = vpack.c.b16 %v4605, %v4598
    %v5495 = vpack.c.b16 %v4606, %v4599
    %v5496 = vpack.c.b16 %v4607, %v4600
    %v5497 = vpack.c.b16 %v4608, %v4601
    %v5498 = vpack.c.b16 %v4616, %v4609
    %v5499 = vpack.c.b16 %v4617, %v4610
    %v5500 = vpack.c.b16 %v4618, %v4611
    %v5501 = vpack.c.b16 %v4619, %v4612
    %v5502 = vpack.c.b16 %v4620, %v4613
    %v5503 = vpack.c.b16 %v4621, %v4614
    %v5504 = vpack.c.b16 %v4622, %v4615
    %v5505 = vpack.c.b16 %v4630, %v4623
    %v5506 = vpack.c.b16 %v4631, %v4624
    %v5507 = vpack.c.b16 %v4632, %v4625
    %v5508 = vpack.c.b16 %v4633, %v4626
    %v5509 = vpack.c.b16 %v4634, %v4627
    %v5510 = vpack.c.b16 %v4635, %v4628
    %v5511 = vpack.c.b16 %v4636, %v4629
    %v5512 = vpack.c.b16 %v4644, %v4637
    %v5513 = vpack.c.b16 %v4645, %v4638
    %v5514 = vpack.c.b16 %v4646, %v4639
    %v5515 = vpack.c.b16 %v4647, %v4640
    %v5516 = vpack.c.b16 %v4648, %v4641
    %v5517 = vpack.c.b16 %v4649, %v4642
    %v5518 = vpack.c.b16 %v4650, %v4643
    %v5519 = vpack.c.b16 %v4658, %v4651
    %v5520 = vpack.c.b16 %v4659, %v4652
    %v5521 = vpack.c.b16 %v4660, %v4653
    %v5522 = vpack.c.b16 %v4661, %v4654
    %v5523 = vpack.c.b16 %v4662, %v4655
    %v5524 = vpack.c.b16 %v4663, %v4656
    %v5525 = vpack.c.b16 %v4664, %v4657
    %v5526 = vpack.c.b16 %v4672, %v4665
    %v5527 = vpack.c.b16 %v4673, %v4666
    %v5528 = vpack.c.b16 %v4674, %v4667
    %v5529 = vpack.c.b16 %v4675, %v4668
    %v5530 = vpack.c.b16 %v4676, %v4669
    %v5531 = vpack.c.b16 %v4677, %v4670
    %v5532 = vpack.c.b16 %v4678, %v4671
    %v5533 = vpack.c.b16 %v4686, %v4679
    %v5534 = vpack.c.b16 %v4687, %v4680
    %v5535 = vpack.c.b16 %v4688, %v4681
    %v5536 = vpack.c.b16 %v4689, %v4682
    %v5537 = vpack.c.b16 %v4690, %v4683
    %v5538 = vpack.c.b16 %v4691, %v4684
    %v5539 = vpack.c.b16 %v4692, %v4685
    %v5540 = vpack.c.b16 %v4700, %v4693
    %v5541 = vpack.c.b16 %v4701, %v4694
    %v5542 = vpack.c.b16 %v4702, %v4695
    %v5543 = vpack.c.b16 %v4703, %v4696
    %v5544 = vpack.c.b16 %v4704, %v4697
    %v5545 = vpack.c.b16 %v4705, %v4698
    %v5546 = vpack.c.b16 %v4706, %v4699
    %v5547 = vpack.c.b16 %v4714, %v4707
    %v5548 = vpack.c.b16 %v4715, %v4708
    %v5549 = vpack.c.b16 %v4716, %v4709
    %v5550 = vpack.c.b16 %v4717, %v4710
    %v5551 = vpack.c.b16 %v4718, %v4711
    %v5552 = vpack.c.b16 %v4719, %v4712
    %v5553 = vpack.c.b16 %v4720, %v4713
    %v5554 = vpack.c.b16 %v4728, %v4721
    %v5555 = vpack.c.b16 %v4729, %v4722
    %v5556 = vpack.c.b16 %v4730, %v4723
    %v5557 = vpack.c.b16 %v4731, %v4724
    %v5558 = vpack.c.b16 %v4732, %v4725
    %v5559 = vpack.c.b16 %v4733, %v4726
    %v5560 = vpack.c.b16 %v4734, %v4727
    %v5561 = vpack.c.b16 %v4742, %v4735
    %v5562 = vpack.c.b16 %v4743, %v4736
    %v5563 = vpack.c.b16 %v4744, %v4737
    %v5564 = vpack.c.b16 %v4745, %v4738
    %v5565 = vpack.c.b16 %v4746, %v4739
    %v5566 = vpack.c.b16 %v4747, %v4740
    %v5567 = vpack.c.b16 %v4748, %v4741
    %v5568 = vpack.c.b16 %v4756, %v4749
    %v5569 = vpack.c.b16 %v4757, %v4750
    %v5570 = vpack.c.b16 %v4758, %v4751
    %v5571 = vpack.c.b16 %v4759, %v4752
    %v5572 = vpack.c.b16 %v4760, %v4753
    %v5573 = vpack.c.b16 %v4761, %v4754
    %v5574 = vpack.c.b16 %v4762, %v4755
    %v5575 = vpack.c.b16 %v4770, %v4763
    %v5576 = vpack.c.b16 %v4771, %v4764
    %v5577 = vpack.c.b16 %v4772, %v4765
    %v5578 = vpack.c.b16 %v4773, %v4766
    %v5579 = vpack.c.b16 %v4774, %v4767
    %v5580 = vpack.c.b16 %v4775, %v4768
    %v5581 = vpack.c.b16 %v4776, %v4769
    %v5582 = vpack.c.b16 %v4784, %v4777
    %v5583 = vpack.c.b16 %v4785, %v4778
    %v5584 = vpack.c.b16 %v4786, %v4779
    %v5585 = vpack.c.b16 %v4787, %v4780
    %v5586 = vpack.c.b16 %v4788, %v4781
    %v5587 = vpack.c.b16 %v4789, %v4782
    %v5588 = vpack.c.b16 %v4790, %v4783
    %v5589 = vpack.c.b16 %v4798, %v4791
    %v5590 = vpack.c.b16 %v4799, %v4792
    %v5591 = vpack.c.b16 %v4800, %v4793
    %v5592 = vpack.c.b16 %v4801, %v4794
    %v5593 = vpack.c.b16 %v4802, %v4795
    %v5594 = vpack.c.b16 %v4803, %v4796
    %v5595 = vpack.c.b16 %v4804, %v4797
    %v5596 = vpack.c.b16 %v4812, %v4805
    %v5597 = vpack.c.b16 %v4813, %v4806
    %v5598 = vpack.c.b16 %v4814, %v4807
    %v5599 = vpack.c.b16 %v4815, %v4808
    %v5600 = vpack.c.b16 %v4816, %v4809
    %v5601 = vpack.c.b16 %v4817, %v4810
    %v5602 = vpack.c.b16 %v4818, %v4811
    %v5603 = vpack.c.b16 %v4826, %v4819
    %v5604 = vpack.c.b16 %v4827, %v4820
    %v5605 = vpack.c.b16 %v4828, %v4821
    %v5606 = vpack.c.b16 %v4829, %v4822
    %v5607 = vpack.c.b16 %v4830, %v4823
    %v5608 = vpack.c.b16 %v4831, %v4824
    %v5609 = vpack.c.b16 %v4832, %v4825
    %v5610 = vpack.c.b16 %v4840, %v4833
    %v5611 = vpack.c.b16 %v4841, %v4834
    %v5612 = vpack.c.b16 %v4842, %v4835
    %v5613 = vpack.c.b16 %v4843, %v4836
    %v5614 = vpack.c.b16 %v4844, %v4837
    %v5615 = vpack.c.b16 %v4845, %v4838
    %v5616 = vpack.c.b16 %v4846, %v4839
    %v5617 = vpack.c.b16 %v4854, %v4847
    %v5618 = vpack.c.b16 %v4855, %v4848
    %v5619 = vpack.c.b16 %v4856, %v4849
    %v5620 = vpack.c.b16 %v4857, %v4850
    %v5621 = vpack.c.b16 %v4858, %v4851
    %v5622 = vpack.c.b16 %v4859, %v4852
    %v5623 = vpack.c.b16 %v4860, %v4853
    %v5624 = vpack.c.b16 %v4868, %v4861
    %v5625 = vpack.c.b16 %v4869, %v4862
    %v5626 = vpack.c.b16 %v4870, %v4863
    %v5627 = vpack.c.b16 %v4871, %v4864
    %v5628 = vpack.c.b16 %v4872, %v4865
    %v5629 = vpack.c.b16 %v4873, %v4866
    %v5630 = vpack.c.b16 %v4874, %v4867
    %v5631 = vpack.c.b16 %v4882, %v4875
    %v5632 = vpack.c.b16 %v4883, %v4876
    %v5633 = vpack.c.b16 %v4884, %v4877
    %v5634 = vpack.c.b16 %v4885, %v4878
    %v5635 = vpack.c.b16 %v4886, %v4879
    %v5636 = vpack.c.b16 %v4887, %v4880
    %v5637 = vpack.c.b16 %v4888, %v4881
    %v5638 = vpack.c.b16 %v4896, %v4889
    %v5639 = vpack.c.b16 %v4897, %v4890
    %v5640 = vpack.c.b16 %v4898, %v4891
    %v5641 = vpack.c.b16 %v4899, %v4892
    %v5642 = vpack.c.b16 %v4900, %v4893
    %v5643 = vpack.c.b16 %v4901, %v4894
    %v5644 = vpack.c.b16 %v4902, %v4895
    %v5645 = vpack.c.b16 %v4910, %v4903
    %v5646 = vpack.c.b16 %v4911, %v4904
    %v5647 = vpack.c.b16 %v4912, %v4905
    %v5648 = vpack.c.b16 %v4913, %v4906
    %v5649 = vpack.c.b16 %v4914, %v4907
    %v5650 = vpack.c.b16 %v4915, %v4908
    %v5651 = vpack.c.b16 %v4916, %v4909
    %v5652 = vpack.c.b16 %v4924, %v4917
    %v5653 = vpack.c.b16 %v4925, %v4918
    %v5654 = vpack.c.b16 %v4926, %v4919
    %v5655 = vpack.c.b16 %v4927, %v4920
    %v5656 = vpack.c.b16 %v4928, %v4921
    %v5657 = vpack.c.b16 %v4929, %v4922
    %v5658 = vpack.c.b16 %v4930, %v4923
    %v5659 = vpack.c.b16 %v4938, %v4931
    %v5660 = vpack.c.b16 %v4939, %v4932
    %v5661 = vpack.c.b16 %v4940, %v4933
    %v5662 = vpack.c.b16 %v4941, %v4934
    %v5663 = vpack.c.b16 %v4942, %v4935
    %v5664 = vpack.c.b16 %v4943, %v4936
    %v5665 = vpack.c.b16 %v4944, %v4937
    %v5666 = vpack.c.b16 %v4952, %v4945
    %v5667 = vpack.c.b16 %v4953, %v4946
    %v5668 = vpack.c.b16 %v4954, %v4947
    %v5669 = vpack.c.b16 %v4955, %v4948
    %v5670 = vpack.c.b16 %v4956, %v4949
    %v5671 = vpack.c.b16 %v4957, %v4950
    %v5672 = vpack.c.b16 %v4958, %v4951
    %v5673 = vpack.c.b16 %v4966, %v4959
    %v5674 = vpack.c.b16 %v4967, %v4960
    %v5675 = vpack.c.b16 %v4968, %v4961
    %v5676 = vpack.c.b16 %v4969, %v4962
    %v5677 = vpack.c.b16 %v4970, %v4963
    %v5678 = vpack.c.b16 %v4971, %v4964
    %v5679 = vpack.c.b16 %v4972, %v4965
    %v5680 = vpack.c.b16 %v4980, %v4973
    %v5681 = vpack.c.b16 %v4981, %v4974
    %v5682 = vpack.c.b16 %v4982, %v4975
    %v5683 = vpack.c.b16 %v4983, %v4976
    %v5684 = vpack.c.b16 %v4984, %v4977
    %v5685 = vpack.c.b16 %v4985, %v4978
    %v5686 = vpack.c.b16 %v4986, %v4979
    %v5687 = vpack.c.b16 %v4994, %v4987
    %v5688 = vpack.c.b16 %v4995, %v4988
    %v5689 = vpack.c.b16 %v4996, %v4989
    %v5690 = vpack.c.b16 %v4997, %v4990
    %v5691 = vpack.c.b16 %v4998, %v4991
    %v5692 = vpack.c.b16 %v4999, %v4992
    %v5693 = vpack.c.b16 %v5000, %v4993
    %v5694 = vpack.c.b16 %v5008, %v5001
    %v5695 = vpack.c.b16 %v5009, %v5002
    %v5696 = vpack.c.b16 %v5010, %v5003
    %v5697 = vpack.c.b16 %v5011, %v5004
    %v5698 = vpack.c.b16 %v5012, %v5005
    %v5699 = vpack.c.b16 %v5013, %v5006
    %v5700 = vpack.c.b16 %v5014, %v5007
    %v5701 = vpack.c.b16 %v5022, %v5015
    %v5702 = vpack.c.b16 %v5023, %v5016
    %v5703 = vpack.c.b16 %v5024, %v5017
    %v5704 = vpack.c.b16 %v5025, %v5018
    %v5705 = vpack.c.b16 %v5026, %v5019
    %v5706 = vpack.c.b16 %v5027, %v5020
    %v5707 = vpack.c.b16 %v5028, %v5021
    %v5708 = vpack.c.b16 %v5036, %v5029
    %v5709 = vpack.c.b16 %v5037, %v5030
    %v5710 = vpack.c.b16 %v5038, %v5031
    %v5711 = vpack.c.b16 %v5039, %v5032
    %v5712 = vpack.c.b16 %v5040, %v5033
    %v5713 = vpack.c.b16 %v5041, %v5034
    %v5714 = vpack.c.b16 %v5042, %v5035
    %v5715 = vpack.c.b16 %v5050, %v5043
    %v5716 = vpack.c.b16 %v5051, %v5044
    %v5717 = vpack.c.b16 %v5052, %v5045
    %v5718 = vpack.c.b16 %v5053, %v5046
    %v5719 = vpack.c.b16 %v5054, %v5047
    %v5720 = vpack.c.b16 %v5055, %v5048
    %v5721 = vpack.c.b16 %v5056, %v5049
    %v5722 = vpack.c.b16 %v5064, %v5057
    %v5723 = vpack.c.b16 %v5065, %v5058
    %v5724 = vpack.c.b16 %v5066, %v5059
    %v5725 = vpack.c.b16 %v5067, %v5060
    %v5726 = vpack.c.b16 %v5068, %v5061
    %v5727 = vpack.c.b16 %v5069, %v5062
    %v5728 = vpack.c.b16 %v5070, %v5063
    %v5729 = vpack.c.b16 %v5078, %v5071
    %v5730 = vpack.c.b16 %v5079, %v5072
    %v5731 = vpack.c.b16 %v5080, %v5073
    %v5732 = vpack.c.b16 %v5081, %v5074
    %v5733 = vpack.c.b16 %v5082, %v5075
    %v5734 = vpack.c.b16 %v5083, %v5076
    %v5735 = vpack.c.b16 %v5084, %v5077
    %v5736 = vpack.c.b16 %v5092, %v5085
    %v5737 = vpack.c.b16 %v5093, %v5086
    %v5738 = vpack.c.b16 %v5094, %v5087
    %v5739 = vpack.c.b16 %v5095, %v5088
    %v5740 = vpack.c.b16 %v5096, %v5089
    %v5741 = vpack.c.b16 %v5097, %v5090
    %v5742 = vpack.c.b16 %v5098, %v5091
    %v5743 = vpack.c.b16 %v5106, %v5099
    %v5744 = vpack.c.b16 %v5107, %v5100
    %v5745 = vpack.c.b16 %v5108, %v5101
    %v5746 = vpack.c.b16 %v5109, %v5102
    %v5747 = vpack.c.b16 %v5110, %v5103
    %v5748 = vpack.c.b16 %v5111, %v5104
    %v5749 = vpack.c.b16 %v5112, %v5105
    %v5750 = vpack.c.b16 %v5120, %v5113
    %v5751 = vpack.c.b16 %v5121, %v5114
    %v5752 = vpack.c.b16 %v5122, %v5115
    %v5753 = vpack.c.b16 %v5123, %v5116
    %v5754 = vpack.c.b16 %v5124, %v5117
    %v5755 = vpack.c.b16 %v5125, %v5118
    %v5756 = vpack.c.b16 %v5126, %v5119
    %v5757 = vpack.c.b16 %v5134, %v5127
    %v5758 = vpack.c.b16 %v5135, %v5128
    %v5759 = vpack.c.b16 %v5136, %v5129
    %v5760 = vpack.c.b16 %v5137, %v5130
    %v5761 = vpack.c.b16 %v5138, %v5131
    %v5762 = vpack.c.b16 %v5139, %v5132
    %v5763 = vpack.c.b16 %v5140, %v5133
    %v5764 = vpack.c.b16 %v5148, %v5141
    %v5765 = vpack.c.b16 %v5149, %v5142
    %v5766 = vpack.c.b16 %v5150, %v5143
    %v5767 = vpack.c.b16 %v5151, %v5144
    %v5768 = vpack.c.b16 %v5152, %v5145
    %v5769 = vpack.c.b16 %v5153, %v5146
    %v5770 = vpack.c.b16 %v5154, %v5147
    %v5771 = vpack.c.b16 %v5162, %v5155
    %v5772 = vpack.c.b16 %v5163, %v5156
    %v5773 = vpack.c.b16 %v5164, %v5157
    %v5774 = vpack.c.b16 %v5165, %v5158
    %v5775 = vpack.c.b16 %v5166, %v5159
    %v5776 = vpack.c.b16 %v5167, %v5160
    %v5777 = vpack.c.b16 %v5168, %v5161
    %v5778 = vpack.c.b16 %v5176, %v5169
    %v5779 = vpack.c.b16 %v5177, %v5170
    %v5780 = vpack.c.b16 %v5178, %v5171
    %v5781 = vpack.c.b16 %v5179, %v5172
    %v5782 = vpack.c.b16 %v5180, %v5173
    %v5783 = vpack.c.b16 %v5181, %v5174
    %v5784 = vpack.c.b16 %v5182, %v5175
    %v5785 = vpack.c.b16 %v5190, %v5183
    %v5786 = vpack.c.b16 %v5191, %v5184
    %v5787 = vpack.c.b16 %v5192, %v5185
    %v5788 = vpack.c.b16 %v5193, %v5186
    %v5789 = vpack.c.b16 %v5194, %v5187
    %v5790 = vpack.c.b16 %v5195, %v5188
    %v5791 = vpack.c.b16 %v5196, %v5189
    %v5792 = vpack.c.b16 %v5204, %v5197
    %v5793 = vpack.c.b16 %v5205, %v5198
    %v5794 = vpack.c.b16 %v5206, %v5199
    %v5795 = vpack.c.b16 %v5207, %v5200
    %v5796 = vpack.c.b16 %v5208, %v5201
    %v5797 = vpack.c.b16 %v5209, %v5202
    %v5798 = vpack.c.b16 %v5210, %v5203
    %v5799 = vpack.c.b16 %v5218, %v5211
    %v5800 = vpack.c.b16 %v5219, %v5212
    %v5801 = vpack.c.b16 %v5220, %v5213
    %v5802 = vpack.c.b16 %v5221, %v5214
    %v5803 = vpack.c.b16 %v5222, %v5215
    %v5804 = vpack.c.b16 %v5223, %v5216
    %v5805 = vpack.c.b16 %v5224, %v5217
    %v5806 = vpack.c.b16 %v5232, %v5225
    %v5807 = vpack.c.b16 %v5233, %v5226
    %v5808 = vpack.c.b16 %v5234, %v5227
    %v5809 = vpack.c.b16 %v5235, %v5228
    %v5810 = vpack.c.b16 %v5236, %v5229
    %v5811 = vpack.c.b16 %v5237, %v5230
    %v5812 = vpack.c.b16 %v5238, %v5231
    %v5813 = vpack.c.b16 %v5246, %v5239
    %v5814 = vpack.c.b16 %v5247, %v5240
    %v5815 = vpack.c.b16 %v5248, %v5241
    %v5816 = vpack.c.b16 %v5249, %v5242
    %v5817 = vpack.c.b16 %v5250, %v5243
    %v5818 = vpack.c.b16 %v5251, %v5244
    %v5819 = vpack.c.b16 %v5252, %v5245
    %v5820 = vpack.c.b16 %v5260, %v5253
    %v5821 = vpack.c.b16 %v5261, %v5254
    %v5822 = vpack.c.b16 %v5262, %v5255
    %v5823 = vpack.c.b16 %v5263, %v5256
    %v5824 = vpack.c.b16 %v5264, %v5257
    %v5825 = vpack.c.b16 %v5265, %v5258
    %v5826 = vpack.c.b16 %v5266, %v5259
    %v5827 = vpack.c.b16 %v5274, %v5267
    %v5828 = vpack.c.b16 %v5275, %v5268
    %v5829 = vpack.c.b16 %v5276, %v5269
    %v5830 = vpack.c.b16 %v5277, %v5270
    %v5831 = vpack.c.b16 %v5278, %v5271
    %v5832 = vpack.c.b16 %v5279, %v5272
    %v5833 = vpack.c.b16 %v5280, %v5273
    %v5834 = vpack.c.b16 %v5288, %v5281
    %v5835 = vpack.c.b16 %v5289, %v5282
    %v5836 = vpack.c.b16 %v5290, %v5283
    %v5837 = vpack.c.b16 %v5291, %v5284
    %v5838 = vpack.c.b16 %v5292, %v5285
    %v5839 = vpack.c.b16 %v5293, %v5286
    %v5840 = vpack.c.b16 %v5294, %v5287
    %v5841 = vpack.c.b16 %v5302, %v5295
    %v5842 = vpack.c.b16 %v5303, %v5296
    %v5843 = vpack.c.b16 %v5304, %v5297
    %v5844 = vpack.c.b16 %v5305, %v5298
    %v5845 = vpack.c.b16 %v5306, %v5299
    %v5846 = vpack.c.b16 %v5307, %v5300
    %v5847 = vpack.c.b16 %v5308, %v5301
    %v5848 = vpack.c.b16 %v5316, %v5309
    %v5849 = vpack.c.b16 %v5317, %v5310
    %v5850 = vpack.c.b16 %v5318, %v5311
    %v5851 = vpack.c.b16 %v5319, %v5312
    %v5852 = vpack.c.b16 %v5320, %v5313
    %v5853 = vpack.c.b16 %v5321, %v5314
    %v5854 = vpack.c.b16 %v5322, %v5315
    %v5855 = vpack.c.b16 %v5330, %v5323
    %v5856 = vpack.c.b16 %v5331, %v5324
    %v5857 = vpack.c.b16 %v5332, %v5325
    %v5858 = vpack.c.b16 %v5333, %v5326
    %v5859 = vpack.c.b16 %v5334, %v5327
    %v5860 = vpack.c.b16 %v5335, %v5328
    %v5861 = vpack.c.b16 %v5336, %v5329
    %v5862 = vpack.c.b16 %v5344, %v5337
    %v5863 = vpack.c.b16 %v5345, %v5338
    %v5864 = vpack.c.b16 %v5346, %v5339
    %v5865 = vpack.c.b16 %v5347, %v5340
    %v5866 = vpack.c.b16 %v5348, %v5341
    %v5867 = vpack.c.b16 %v5349, %v5342
    %v5868 = vpack.c.b16 %v5350, %v5343
    %v5869 = vpack.c.b16 %v5358, %v5351
    %v5870 = vpack.c.b16 %v5359, %v5352
    %v5871 = vpack.c.b16 %v5360, %v5353
    %v5872 = vpack.c.b16 %v5361, %v5354
    %v5873 = vpack.c.b16 %v5362, %v5355
    %v5874 = vpack.c.b16 %v5363, %v5356
    %v5875 = vpack.c.b16 %v5364, %v5357
    %v5876 = vpack.c.b16 %v5372, %v5365
    %v5877 = vpack.c.b16 %v5373, %v5366
    %v5878 = vpack.c.b16 %v5374, %v5367
    %v5879 = vpack.c.b16 %v5375, %v5368
    %v5880 = vpack.c.b16 %v5376, %v5369
    %v5881 = vpack.c.b16 %v5377, %v5370
    %v5882 = vpack.c.b16 %v5378, %v5371
    %v5883 = vpack.c.b16 %v5386, %v5379
    %v5884 = vpack.c.b16 %v5387, %v5380
    %v5885 = vpack.c.b16 %v5388, %v5381
    %v5886 = vpack.c.b16 %v5389, %v5382
    %v5887 = vpack.c.b16 %v5390, %v5383
    %v5888 = vpack.c.b16 %v5391, %v5384
    %v5889 = vpack.c.b16 %v5392, %v5385
    %v5890 = vpack.c.b16 %v5400, %v5393
    %v5891 = vpack.c.b16 %v5401, %v5394
    %v5892 = vpack.c.b16 %v5402, %v5395
    %v5893 = vpack.c.b16 %v5403, %v5396
    %v5894 = vpack.c.b16 %v5404, %v5397
    %v5895 = vpack.c.b16 %v5405, %v5398
    %v5896 = vpack.c.b16 %v5406, %v5399
    %v5897 = vpack.c.b16 %v5414, %v5407
    %v5898 = vpack.c.b16 %v5415, %v5408
    %v5899 = vpack.c.b16 %v5416, %v5409
    %v5900 = vpack.c.b16 %v5417, %v5410
    %v5901 = vpack.c.b16 %v5418, %v5411
    %v5902 = vpack.c.b16 %v5419, %v5412
    %v5903 = vpack.c.b16 %v5420, %v5413
    %v5904 = vpack.c.b16 %v5428, %v5421
    %v5905 = vpack.c.b16 %v5429, %v5422
    %v5906 = vpack.c.b16 %v5430, %v5423
    %v5907 = vpack.c.b16 %v5431, %v5424
    %v5908 = vpack.c.b16 %v5432, %v5425
    %v5909 = vpack.c.b16 %v5433, %v5426
    %v5910 = vpack.c.b16 %v5434, %v5427
    %v5911 = vpack.c.b16 %v5442, %v5435
    %v5912 = vpack.c.b16 %v5443, %v5436
    %v5913 = vpack.c.b16 %v5444, %v5437
    %v5914 = vpack.c.b16 %v5445, %v5438
    %v5915 = vpack.c.b16 %v5446, %v5439
    %v5916 = vpack.c.b16 %v5447, %v5440
    %v5917 = vpack.c.b16 %v5448, %v5441
    %v5918 = vpack.c.b16 %v5456, %v5449
    %v5919 = vpack.c.b16 %v5457, %v5450
    %v5920 = vpack.c.b16 %v5458, %v5451
    %v5921 = vpack.c.b16 %v5459, %v5452
    %v5922 = vpack.c.b16 %v5460, %v5453
    %v5923 = vpack.c.b16 %v5461, %v5454
    %v5924 = vpack.c.b16 %v5462, %v5455
    %v5925 = vpack.c.b16 %v5470, %v5463
    %v5926 = vpack.c.b16 %v5471, %v5464
    %v5927 = vpack.c.b16 %v5472, %v5465
    %v5928 = vpack.c.b16 %v5473, %v5466
    %v5929 = vpack.c.b16 %v5474, %v5467
    %v5930 = vpack.c.b16 %v5475, %v5468
    %v5931 = vpack.c.b16 %v5476, %v5469
    %v5932 = vpack.c.b16 %v5484, %v5477
    %v5933 = vpack.c.b16 %v5485, %v5478
    %v5934 = vpack.c.b16 %v5486, %v5479
    %v5935 = vpack.c.b16 %v5487, %v5480
    %v5936 = vpack.c.b16 %v5488, %v5481
    %v5937 = vpack.c.b16 %v5489, %v5482
    %v5938 = vpack.c.b16 %v5490, %v5483
    %6387 = vmatpush.bf16.msra.mxu0 %v5540
    %6388 = vmatpush.bf16.msra.mxu0 %v5533
    %6389 = vmatpush.bf16.msra.mxu0 %v5526
    %6390 = vmatpush.bf16.msra.mxu0 %v5519
    %6391 = vmatpush.bf16.msra.mxu0 %v5512
    %6392 = vmatpush.bf16.msra.mxu0 %v5505
    %6393 = vmatpush.bf16.msra.mxu0 %v5498
    %6394 = vmatpush.bf16.msra.mxu0 %v5491
    %6395 = vmatmul.bf16.gmra.mxu0 %v3547
    %v6396 = vpop.f32.mrf.mxu0
    %v6397 = vadd.f32 %v4069, %v6396
    %v6398 = vpop.f32.mrf.mxu0
    %6399 = vdwg.mxu0
    %6400 = vmatpush.bf16.msra.mxu0 %v5596
    %6401 = vmatpush.bf16.msra.mxu0 %v5589
    %6402 = vmatpush.bf16.msra.mxu0 %v5582
    %6403 = vmatpush.bf16.msra.mxu0 %v5575
    %6404 = vmatpush.bf16.msra.mxu0 %v5568
    %6405 = vmatpush.bf16.msra.mxu0 %v5561
    %6406 = vmatpush.bf16.msra.mxu0 %v5554
    %6407 = vmatpush.bf16.msra.mxu0 %v5547
    %6408 = vmatmul.bf16.gmra.mxu0 %v3548
    %v6409 = vpop.f32.mrf.mxu0
    %v6410 = vadd.f32 %v6397, %v6409
    %v6411 = vpop.f32.mrf.mxu0
    %6412 = vdwg.mxu0
    %6413 = vmatpush.bf16.msra.mxu0 %v5652
    %6414 = vmatpush.bf16.msra.mxu0 %v5645
    %6415 = vmatpush.bf16.msra.mxu0 %v5638
    %6416 = vmatpush.bf16.msra.mxu0 %v5631
    %6417 = vmatpush.bf16.msra.mxu0 %v5624
    %6418 = vmatpush.bf16.msra.mxu0 %v5617
    %6419 = vmatpush.bf16.msra.mxu0 %v5610
    %6420 = vmatpush.bf16.msra.mxu0 %v5603
    %6421 = vmatmul.bf16.gmra.mxu0 %v3549
    %v6422 = vpop.f32.mrf.mxu0
    %v6423 = vadd.f32 %v6410, %v6422
    %v6424 = vpop.f32.mrf.mxu0
    %6425 = vdwg.mxu0
    %6426 = vmatpush.bf16.msra.mxu0 %v5708
    %6427 = vmatpush.bf16.msra.mxu0 %v5701
    %6428 = vmatpush.bf16.msra.mxu0 %v5694
    %6429 = vmatpush.bf16.msra.mxu0 %v5687
    %6430 = vmatpush.bf16.msra.mxu0 %v5680
    %6431 = vmatpush.bf16.msra.mxu0 %v5673
    %6432 = vmatpush.bf16.msra.mxu0 %v5666
    %6433 = vmatpush.bf16.msra.mxu0 %v5659
    %6434 = vmatmul.bf16.gmra.mxu0 %v3550
    %v6435 = vpop.f32.mrf.mxu0
    %v6436 = vadd.f32 %v6423, %v6435
    %v6437 = vpop.f32.mrf.mxu0
    %6438 = vdwg.mxu0
    %6439 = vmatpush.bf16.msra.mxu0 %v5764
    %6440 = vmatpush.bf16.msra.mxu0 %v5757
    %6441 = vmatpush.bf16.msra.mxu0 %v5750
    %6442 = vmatpush.bf16.msra.mxu0 %v5743
    %6443 = vmatpush.bf16.msra.mxu0 %v5736
    %6444 = vmatpush.bf16.msra.mxu0 %v5729
    %6445 = vmatpush.bf16.msra.mxu0 %v5722
    %6446 = vmatpush.bf16.msra.mxu0 %v5715
    %6447 = vmatmul.bf16.gmra.mxu0 %v3551
    %v6448 = vpop.f32.mrf.mxu0
    %v6449 = vadd.f32 %v6436, %v6448
    %v6450 = vpop.f32.mrf.mxu0
    %6451 = vdwg.mxu0
    %6452 = vmatpush.bf16.msra.mxu0 %v5820
    %6453 = vmatpush.bf16.msra.mxu0 %v5813
    %6454 = vmatpush.bf16.msra.mxu0 %v5806
    %6455 = vmatpush.bf16.msra.mxu0 %v5799
    %6456 = vmatpush.bf16.msra.mxu0 %v5792
    %6457 = vmatpush.bf16.msra.mxu0 %v5785
    %6458 = vmatpush.bf16.msra.mxu0 %v5778
    %6459 = vmatpush.bf16.msra.mxu0 %v5771
    %6460 = vmatmul.bf16.gmra.mxu0 %v3552
    %v6461 = vpop.f32.mrf.mxu0
    %v6462 = vadd.f32 %v6449, %v6461
    %v6463 = vpop.f32.mrf.mxu0
    %6464 = vdwg.mxu0
    %6465 = vmatpush.bf16.msra.mxu0 %v5876
    %6466 = vmatpush.bf16.msra.mxu0 %v5869
    %6467 = vmatpush.bf16.msra.mxu0 %v5862
    %6468 = vmatpush.bf16.msra.mxu0 %v5855
    %6469 = vmatpush.bf16.msra.mxu0 %v5848
    %6470 = vmatpush.bf16.msra.mxu0 %v5841
    %6471 = vmatpush.bf16.msra.mxu0 %v5834
    %6472 = vmatpush.bf16.msra.mxu0 %v5827
    %6473 = vmatmul.bf16.gmra.mxu0 %v3553
    %v6474 = vpop.f32.mrf.mxu0
    %v6475 = vadd.f32 %v6462, %v6474
    %v6476 = vpop.f32.mrf.mxu0
    %6477 = vdwg.mxu0
    %6478 = vmatpush.bf16.msra.mxu0 %v5932
    %6479 = vmatpush.bf16.msra.mxu0 %v5925
    %6480 = vmatpush.bf16.msra.mxu0 %v5918
    %6481 = vmatpush.bf16.msra.mxu0 %v5911
    %6482 = vmatpush.bf16.msra.mxu0 %v5904
    %6483 = vmatpush.bf16.msra.mxu0 %v5897
    %6484 = vmatpush.bf16.msra.mxu0 %v5890
    %6485 = vmatpush.bf16.msra.mxu0 %v5883
    %6486 = vmatmul.bf16.gmra.mxu0 %v3554
    %v6487 = vpop.f32.mrf.mxu0
    %v6488 = vadd.f32 %v6475, %v6487
    %v6489 = vpop.f32.mrf.mxu0
    %6490 = vdwg.mxu0
    %6491 = vmatpush.bf16.msra.mxu0 %v5541
    %6492 = vmatpush.bf16.msra.mxu0 %v5534
    %6493 = vmatpush.bf16.msra.mxu0 %v5527
    %6494 = vmatpush.bf16.msra.mxu0 %v5520
    %6495 = vmatpush.bf16.msra.mxu0 %v5513
    %6496 = vmatpush.bf16.msra.mxu0 %v5506
    %6497 = vmatpush.bf16.msra.mxu0 %v5499
    %6498 = vmatpush.bf16.msra.mxu0 %v5492
    %6499 = vmatmul.bf16.gmra.mxu0 %v3547
    %v6500 = vpop.f32.mrf.mxu0
    %v6501 = vadd.f32 %v4070, %v6500
    %v6502 = vpop.f32.mrf.mxu0
    %6503 = vdwg.mxu0
    %6504 = vmatpush.bf16.msra.mxu0 %v5597
    %6505 = vmatpush.bf16.msra.mxu0 %v5590
    %6506 = vmatpush.bf16.msra.mxu0 %v5583
    %6507 = vmatpush.bf16.msra.mxu0 %v5576
    %6508 = vmatpush.bf16.msra.mxu0 %v5569
    %6509 = vmatpush.bf16.msra.mxu0 %v5562
    %6510 = vmatpush.bf16.msra.mxu0 %v5555
    %6511 = vmatpush.bf16.msra.mxu0 %v5548
    %6512 = vmatmul.bf16.gmra.mxu0 %v3548
    %v6513 = vpop.f32.mrf.mxu0
    %v6514 = vadd.f32 %v6501, %v6513
    %v6515 = vpop.f32.mrf.mxu0
    %6516 = vdwg.mxu0
    %6517 = vmatpush.bf16.msra.mxu0 %v5653
    %6518 = vmatpush.bf16.msra.mxu0 %v5646
    %6519 = vmatpush.bf16.msra.mxu0 %v5639
    %6520 = vmatpush.bf16.msra.mxu0 %v5632
    %6521 = vmatpush.bf16.msra.mxu0 %v5625
    %6522 = vmatpush.bf16.msra.mxu0 %v5618
    %6523 = vmatpush.bf16.msra.mxu0 %v5611
    %6524 = vmatpush.bf16.msra.mxu0 %v5604
    %6525 = vmatmul.bf16.gmra.mxu0 %v3549
    %v6526 = vpop.f32.mrf.mxu0
    %v6527 = vadd.f32 %v6514, %v6526
    %v6528 = vpop.f32.mrf.mxu0
    %6529 = vdwg.mxu0
    %6530 = vmatpush.bf16.msra.mxu0 %v5709
    %6531 = vmatpush.bf16.msra.mxu0 %v5702
    %6532 = vmatpush.bf16.msra.mxu0 %v5695
    %6533 = vmatpush.bf16.msra.mxu0 %v5688
    %6534 = vmatpush.bf16.msra.mxu0 %v5681
    %6535 = vmatpush.bf16.msra.mxu0 %v5674
    %6536 = vmatpush.bf16.msra.mxu0 %v5667
    %6537 = vmatpush.bf16.msra.mxu0 %v5660
    %6538 = vmatmul.bf16.gmra.mxu0 %v3550
    %v6539 = vpop.f32.mrf.mxu0
    %v6540 = vadd.f32 %v6527, %v6539
    %v6541 = vpop.f32.mrf.mxu0
    %6542 = vdwg.mxu0
    %6543 = vmatpush.bf16.msra.mxu0 %v5765
    %6544 = vmatpush.bf16.msra.mxu0 %v5758
    %6545 = vmatpush.bf16.msra.mxu0 %v5751
    %6546 = vmatpush.bf16.msra.mxu0 %v5744
    %6547 = vmatpush.bf16.msra.mxu0 %v5737
    %6548 = vmatpush.bf16.msra.mxu0 %v5730
    %6549 = vmatpush.bf16.msra.mxu0 %v5723
    %6550 = vmatpush.bf16.msra.mxu0 %v5716
    %6551 = vmatmul.bf16.gmra.mxu0 %v3551
    %v6552 = vpop.f32.mrf.mxu0
    %v6553 = vadd.f32 %v6540, %v6552
    %v6554 = vpop.f32.mrf.mxu0
    %6555 = vdwg.mxu0
    %6556 = vmatpush.bf16.msra.mxu0 %v5821
    %6557 = vmatpush.bf16.msra.mxu0 %v5814
    %6558 = vmatpush.bf16.msra.mxu0 %v5807
    %6559 = vmatpush.bf16.msra.mxu0 %v5800
    %6560 = vmatpush.bf16.msra.mxu0 %v5793
    %6561 = vmatpush.bf16.msra.mxu0 %v5786
    %6562 = vmatpush.bf16.msra.mxu0 %v5779
    %6563 = vmatpush.bf16.msra.mxu0 %v5772
    %6564 = vmatmul.bf16.gmra.mxu0 %v3552
    %v6565 = vpop.f32.mrf.mxu0
    %v6566 = vadd.f32 %v6553, %v6565
    %v6567 = vpop.f32.mrf.mxu0
    %6568 = vdwg.mxu0
    %6569 = vmatpush.bf16.msra.mxu0 %v5877
    %6570 = vmatpush.bf16.msra.mxu0 %v5870
    %6571 = vmatpush.bf16.msra.mxu0 %v5863
    %6572 = vmatpush.bf16.msra.mxu0 %v5856
    %6573 = vmatpush.bf16.msra.mxu0 %v5849
    %6574 = vmatpush.bf16.msra.mxu0 %v5842
    %6575 = vmatpush.bf16.msra.mxu0 %v5835
    %6576 = vmatpush.bf16.msra.mxu0 %v5828
    %6577 = vmatmul.bf16.gmra.mxu0 %v3553
    %v6578 = vpop.f32.mrf.mxu0
    %v6579 = vadd.f32 %v6566, %v6578
    %v6580 = vpop.f32.mrf.mxu0
    %6581 = vdwg.mxu0
    %6582 = vmatpush.bf16.msra.mxu0 %v5933
    %6583 = vmatpush.bf16.msra.mxu0 %v5926
    %6584 = vmatpush.bf16.msra.mxu0 %v5919
    %6585 = vmatpush.bf16.msra.mxu0 %v5912
    %6586 = vmatpush.bf16.msra.mxu0 %v5905
    %6587 = vmatpush.bf16.msra.mxu0 %v5898
    %6588 = vmatpush.bf16.msra.mxu0 %v5891
    %6589 = vmatpush.bf16.msra.mxu0 %v5884
    %6590 = vmatmul.bf16.gmra.mxu0 %v3554
    %v6591 = vpop.f32.mrf.mxu0
    %v6592 = vadd.f32 %v6579, %v6591
    %v6593 = vpop.f32.mrf.mxu0
    %6594 = vdwg.mxu0
    %6595 = vmatpush.bf16.msra.mxu0 %v5542
    %6596 = vmatpush.bf16.msra.mxu0 %v5535
    %6597 = vmatpush.bf16.msra.mxu0 %v5528
    %6598 = vmatpush.bf16.msra.mxu0 %v5521
    %6599 = vmatpush.bf16.msra.mxu0 %v5514
    %6600 = vmatpush.bf16.msra.mxu0 %v5507
    %6601 = vmatpush.bf16.msra.mxu0 %v5500
    %6602 = vmatpush.bf16.msra.mxu0 %v5493
    %6603 = vmatmul.bf16.gmra.mxu0 %v3547
    %v6604 = vpop.f32.mrf.mxu0
    %v6605 = vadd.f32 %v4071, %v6604
    %v6606 = vpop.f32.mrf.mxu0
    %6607 = vdwg.mxu0
    %6608 = vmatpush.bf16.msra.mxu0 %v5598
    %6609 = vmatpush.bf16.msra.mxu0 %v5591
    %6610 = vmatpush.bf16.msra.mxu0 %v5584
    %6611 = vmatpush.bf16.msra.mxu0 %v5577
    %6612 = vmatpush.bf16.msra.mxu0 %v5570
    %6613 = vmatpush.bf16.msra.mxu0 %v5563
    %6614 = vmatpush.bf16.msra.mxu0 %v5556
    %6615 = vmatpush.bf16.msra.mxu0 %v5549
    %6616 = vmatmul.bf16.gmra.mxu0 %v3548
    %v6617 = vpop.f32.mrf.mxu0
    %v6618 = vadd.f32 %v6605, %v6617
    %v6619 = vpop.f32.mrf.mxu0
    %6620 = vdwg.mxu0
    %6621 = vmatpush.bf16.msra.mxu0 %v5654
    %6622 = vmatpush.bf16.msra.mxu0 %v5647
    %6623 = vmatpush.bf16.msra.mxu0 %v5640
    %6624 = vmatpush.bf16.msra.mxu0 %v5633
    %6625 = vmatpush.bf16.msra.mxu0 %v5626
    %6626 = vmatpush.bf16.msra.mxu0 %v5619
    %6627 = vmatpush.bf16.msra.mxu0 %v5612
    %6628 = vmatpush.bf16.msra.mxu0 %v5605
    %6629 = vmatmul.bf16.gmra.mxu0 %v3549
    %v6630 = vpop.f32.mrf.mxu0
    %v6631 = vadd.f32 %v6618, %v6630
    %v6632 = vpop.f32.mrf.mxu0
    %6633 = vdwg.mxu0
    %6634 = vmatpush.bf16.msra.mxu0 %v5710
    %6635 = vmatpush.bf16.msra.mxu0 %v5703
    %6636 = vmatpush.bf16.msra.mxu0 %v5696
    %6637 = vmatpush.bf16.msra.mxu0 %v5689
    %6638 = vmatpush.bf16.msra.mxu0 %v5682
    %6639 = vmatpush.bf16.msra.mxu0 %v5675
    %6640 = vmatpush.bf16.msra.mxu0 %v5668
    %6641 = vmatpush.bf16.msra.mxu0 %v5661
    %6642 = vmatmul.bf16.gmra.mxu0 %v3550
    %v6643 = vpop.f32.mrf.mxu0
    %v6644 = vadd.f32 %v6631, %v6643
    %v6645 = vpop.f32.mrf.mxu0
    %6646 = vdwg.mxu0
    %6647 = vmatpush.bf16.msra.mxu0 %v5766
    %6648 = vmatpush.bf16.msra.mxu0 %v5759
    %6649 = vmatpush.bf16.msra.mxu0 %v5752
    %6650 = vmatpush.bf16.msra.mxu0 %v5745
    %6651 = vmatpush.bf16.msra.mxu0 %v5738
    %6652 = vmatpush.bf16.msra.mxu0 %v5731
    %6653 = vmatpush.bf16.msra.mxu0 %v5724
    %6654 = vmatpush.bf16.msra.mxu0 %v5717
    %6655 = vmatmul.bf16.gmra.mxu0 %v3551
    %v6656 = vpop.f32.mrf.mxu0
    %v6657 = vadd.f32 %v6644, %v6656
    %v6658 = vpop.f32.mrf.mxu0
    %6659 = vdwg.mxu0
    %6660 = vmatpush.bf16.msra.mxu0 %v5822
    %6661 = vmatpush.bf16.msra.mxu0 %v5815
    %6662 = vmatpush.bf16.msra.mxu0 %v5808
    %6663 = vmatpush.bf16.msra.mxu0 %v5801
    %6664 = vmatpush.bf16.msra.mxu0 %v5794
    %6665 = vmatpush.bf16.msra.mxu0 %v5787
    %6666 = vmatpush.bf16.msra.mxu0 %v5780
    %6667 = vmatpush.bf16.msra.mxu0 %v5773
    %6668 = vmatmul.bf16.gmra.mxu0 %v3552
    %v6669 = vpop.f32.mrf.mxu0
    %v6670 = vadd.f32 %v6657, %v6669
    %v6671 = vpop.f32.mrf.mxu0
    %6672 = vdwg.mxu0
    %6673 = vmatpush.bf16.msra.mxu0 %v5878
    %6674 = vmatpush.bf16.msra.mxu0 %v5871
    %6675 = vmatpush.bf16.msra.mxu0 %v5864
    %6676 = vmatpush.bf16.msra.mxu0 %v5857
    %6677 = vmatpush.bf16.msra.mxu0 %v5850
    %6678 = vmatpush.bf16.msra.mxu0 %v5843
    %6679 = vmatpush.bf16.msra.mxu0 %v5836
    %6680 = vmatpush.bf16.msra.mxu0 %v5829
    %6681 = vmatmul.bf16.gmra.mxu0 %v3553
    %v6682 = vpop.f32.mrf.mxu0
    %v6683 = vadd.f32 %v6670, %v6682
    %v6684 = vpop.f32.mrf.mxu0
    %6685 = vdwg.mxu0
    %6686 = vmatpush.bf16.msra.mxu0 %v5934
    %6687 = vmatpush.bf16.msra.mxu0 %v5927
    %6688 = vmatpush.bf16.msra.mxu0 %v5920
    %6689 = vmatpush.bf16.msra.mxu0 %v5913
    %6690 = vmatpush.bf16.msra.mxu0 %v5906
    %6691 = vmatpush.bf16.msra.mxu0 %v5899
    %6692 = vmatpush.bf16.msra.mxu0 %v5892
    %6693 = vmatpush.bf16.msra.mxu0 %v5885
    %6694 = vmatmul.bf16.gmra.mxu0 %v3554
    %v6695 = vpop.f32.mrf.mxu0
    %v6696 = vadd.f32 %v6683, %v6695
    %v6697 = vpop.f32.mrf.mxu0
    %6698 = vdwg.mxu0
    %6699 = vmatpush.bf16.msra.mxu0 %v5543
    %6700 = vmatpush.bf16.msra.mxu0 %v5536
    %6701 = vmatpush.bf16.msra.mxu0 %v5529
    %6702 = vmatpush.bf16.msra.mxu0 %v5522
    %6703 = vmatpush.bf16.msra.mxu0 %v5515
    %6704 = vmatpush.bf16.msra.mxu0 %v5508
    %6705 = vmatpush.bf16.msra.mxu0 %v5501
    %6706 = vmatpush.bf16.msra.mxu0 %v5494
    %6707 = vmatmul.bf16.gmra.mxu0 %v3547
    %v6708 = vpop.f32.mrf.mxu0
    %v6709 = vadd.f32 %v4072, %v6708
    %v6710 = vpop.f32.mrf.mxu0
    %6711 = vdwg.mxu0
    %6712 = vmatpush.bf16.msra.mxu0 %v5599
    %6713 = vmatpush.bf16.msra.mxu0 %v5592
    %6714 = vmatpush.bf16.msra.mxu0 %v5585
    %6715 = vmatpush.bf16.msra.mxu0 %v5578
    %6716 = vmatpush.bf16.msra.mxu0 %v5571
    %6717 = vmatpush.bf16.msra.mxu0 %v5564
    %6718 = vmatpush.bf16.msra.mxu0 %v5557
    %6719 = vmatpush.bf16.msra.mxu0 %v5550
    %6720 = vmatmul.bf16.gmra.mxu0 %v3548
    %v6721 = vpop.f32.mrf.mxu0
    %v6722 = vadd.f32 %v6709, %v6721
    %v6723 = vpop.f32.mrf.mxu0
    %6724 = vdwg.mxu0
    %6725 = vmatpush.bf16.msra.mxu0 %v5655
    %6726 = vmatpush.bf16.msra.mxu0 %v5648
    %6727 = vmatpush.bf16.msra.mxu0 %v5641
    %6728 = vmatpush.bf16.msra.mxu0 %v5634
    %6729 = vmatpush.bf16.msra.mxu0 %v5627
    %6730 = vmatpush.bf16.msra.mxu0 %v5620
    %6731 = vmatpush.bf16.msra.mxu0 %v5613
    %6732 = vmatpush.bf16.msra.mxu0 %v5606
    %6733 = vmatmul.bf16.gmra.mxu0 %v3549
    %v6734 = vpop.f32.mrf.mxu0
    %v6735 = vadd.f32 %v6722, %v6734
    %v6736 = vpop.f32.mrf.mxu0
    %6737 = vdwg.mxu0
    %6738 = vmatpush.bf16.msra.mxu0 %v5711
    %6739 = vmatpush.bf16.msra.mxu0 %v5704
    %6740 = vmatpush.bf16.msra.mxu0 %v5697
    %6741 = vmatpush.bf16.msra.mxu0 %v5690
    %6742 = vmatpush.bf16.msra.mxu0 %v5683
    %6743 = vmatpush.bf16.msra.mxu0 %v5676
    %6744 = vmatpush.bf16.msra.mxu0 %v5669
    %6745 = vmatpush.bf16.msra.mxu0 %v5662
    %6746 = vmatmul.bf16.gmra.mxu0 %v3550
    %v6747 = vpop.f32.mrf.mxu0
    %v6748 = vadd.f32 %v6735, %v6747
    %v6749 = vpop.f32.mrf.mxu0
    %6750 = vdwg.mxu0
    %6751 = vmatpush.bf16.msra.mxu0 %v5767
    %6752 = vmatpush.bf16.msra.mxu0 %v5760
    %6753 = vmatpush.bf16.msra.mxu0 %v5753
    %6754 = vmatpush.bf16.msra.mxu0 %v5746
    %6755 = vmatpush.bf16.msra.mxu0 %v5739
    %6756 = vmatpush.bf16.msra.mxu0 %v5732
    %6757 = vmatpush.bf16.msra.mxu0 %v5725
    %6758 = vmatpush.bf16.msra.mxu0 %v5718
    %6759 = vmatmul.bf16.gmra.mxu0 %v3551
    %v6760 = vpop.f32.mrf.mxu0
    %v6761 = vadd.f32 %v6748, %v6760
    %v6762 = vpop.f32.mrf.mxu0
    %6763 = vdwg.mxu0
    %6764 = vmatpush.bf16.msra.mxu0 %v5823
    %6765 = vmatpush.bf16.msra.mxu0 %v5816
    %6766 = vmatpush.bf16.msra.mxu0 %v5809
    %6767 = vmatpush.bf16.msra.mxu0 %v5802
    %6768 = vmatpush.bf16.msra.mxu0 %v5795
    %6769 = vmatpush.bf16.msra.mxu0 %v5788
    %6770 = vmatpush.bf16.msra.mxu0 %v5781
    %6771 = vmatpush.bf16.msra.mxu0 %v5774
    %6772 = vmatmul.bf16.gmra.mxu0 %v3552
    %v6773 = vpop.f32.mrf.mxu0
    %v6774 = vadd.f32 %v6761, %v6773
    %v6775 = vpop.f32.mrf.mxu0
    %6776 = vdwg.mxu0
    %6777 = vmatpush.bf16.msra.mxu0 %v5879
    %6778 = vmatpush.bf16.msra.mxu0 %v5872
    %6779 = vmatpush.bf16.msra.mxu0 %v5865
    %6780 = vmatpush.bf16.msra.mxu0 %v5858
    %6781 = vmatpush.bf16.msra.mxu0 %v5851
    %6782 = vmatpush.bf16.msra.mxu0 %v5844
    %6783 = vmatpush.bf16.msra.mxu0 %v5837
    %6784 = vmatpush.bf16.msra.mxu0 %v5830
    %6785 = vmatmul.bf16.gmra.mxu0 %v3553
    %v6786 = vpop.f32.mrf.mxu0
    %v6787 = vadd.f32 %v6774, %v6786
    %v6788 = vpop.f32.mrf.mxu0
    %6789 = vdwg.mxu0
    %6790 = vmatpush.bf16.msra.mxu0 %v5935
    %6791 = vmatpush.bf16.msra.mxu0 %v5928
    %6792 = vmatpush.bf16.msra.mxu0 %v5921
    %6793 = vmatpush.bf16.msra.mxu0 %v5914
    %6794 = vmatpush.bf16.msra.mxu0 %v5907
    %6795 = vmatpush.bf16.msra.mxu0 %v5900
    %6796 = vmatpush.bf16.msra.mxu0 %v5893
    %6797 = vmatpush.bf16.msra.mxu0 %v5886
    %6798 = vmatmul.bf16.gmra.mxu0 %v3554
    %v6799 = vpop.f32.mrf.mxu0
    %v6800 = vadd.f32 %v6787, %v6799
    %v6801 = vpop.f32.mrf.mxu0
    %6802 = vdwg.mxu0
    %6803 = vmatpush.bf16.msra.mxu0 %v5544
    %6804 = vmatpush.bf16.msra.mxu0 %v5537
    %6805 = vmatpush.bf16.msra.mxu0 %v5530
    %6806 = vmatpush.bf16.msra.mxu0 %v5523
    %6807 = vmatpush.bf16.msra.mxu0 %v5516
    %6808 = vmatpush.bf16.msra.mxu0 %v5509
    %6809 = vmatpush.bf16.msra.mxu0 %v5502
    %6810 = vmatpush.bf16.msra.mxu0 %v5495
    %6811 = vmatmul.bf16.gmra.mxu0 %v3547
    %v6812 = vpop.f32.mrf.mxu0
    %v6813 = vadd.f32 %v4073, %v6812
    %v6814 = vpop.f32.mrf.mxu0
    %6815 = vdwg.mxu0
    %6816 = vmatpush.bf16.msra.mxu0 %v5600
    %6817 = vmatpush.bf16.msra.mxu0 %v5593
    %6818 = vmatpush.bf16.msra.mxu0 %v5586
    %6819 = vmatpush.bf16.msra.mxu0 %v5579
    %6820 = vmatpush.bf16.msra.mxu0 %v5572
    %6821 = vmatpush.bf16.msra.mxu0 %v5565
    %6822 = vmatpush.bf16.msra.mxu0 %v5558
    %6823 = vmatpush.bf16.msra.mxu0 %v5551
    %6824 = vmatmul.bf16.gmra.mxu0 %v3548
    %v6825 = vpop.f32.mrf.mxu0
    %v6826 = vadd.f32 %v6813, %v6825
    %v6827 = vpop.f32.mrf.mxu0
    %6828 = vdwg.mxu0
    %6829 = vmatpush.bf16.msra.mxu0 %v5656
    %6830 = vmatpush.bf16.msra.mxu0 %v5649
    %6831 = vmatpush.bf16.msra.mxu0 %v5642
    %6832 = vmatpush.bf16.msra.mxu0 %v5635
    %6833 = vmatpush.bf16.msra.mxu0 %v5628
    %6834 = vmatpush.bf16.msra.mxu0 %v5621
    %6835 = vmatpush.bf16.msra.mxu0 %v5614
    %6836 = vmatpush.bf16.msra.mxu0 %v5607
    %6837 = vmatmul.bf16.gmra.mxu0 %v3549
    %v6838 = vpop.f32.mrf.mxu0
    %v6839 = vadd.f32 %v6826, %v6838
    %v6840 = vpop.f32.mrf.mxu0
    %6841 = vdwg.mxu0
    %6842 = vmatpush.bf16.msra.mxu0 %v5712
    %6843 = vmatpush.bf16.msra.mxu0 %v5705
    %6844 = vmatpush.bf16.msra.mxu0 %v5698
    %6845 = vmatpush.bf16.msra.mxu0 %v5691
    %6846 = vmatpush.bf16.msra.mxu0 %v5684
    %6847 = vmatpush.bf16.msra.mxu0 %v5677
    %6848 = vmatpush.bf16.msra.mxu0 %v5670
    %6849 = vmatpush.bf16.msra.mxu0 %v5663
    %6850 = vmatmul.bf16.gmra.mxu0 %v3550
    %v6851 = vpop.f32.mrf.mxu0
    %v6852 = vadd.f32 %v6839, %v6851
    %v6853 = vpop.f32.mrf.mxu0
    %6854 = vdwg.mxu0
    %6855 = vmatpush.bf16.msra.mxu0 %v5768
    %6856 = vmatpush.bf16.msra.mxu0 %v5761
    %6857 = vmatpush.bf16.msra.mxu0 %v5754
    %6858 = vmatpush.bf16.msra.mxu0 %v5747
    %6859 = vmatpush.bf16.msra.mxu0 %v5740
    %6860 = vmatpush.bf16.msra.mxu0 %v5733
    %6861 = vmatpush.bf16.msra.mxu0 %v5726
    %6862 = vmatpush.bf16.msra.mxu0 %v5719
    %6863 = vmatmul.bf16.gmra.mxu0 %v3551
    %v6864 = vpop.f32.mrf.mxu0
    %v6865 = vadd.f32 %v6852, %v6864
    %v6866 = vpop.f32.mrf.mxu0
    %6867 = vdwg.mxu0
    %6868 = vmatpush.bf16.msra.mxu0 %v5824
    %6869 = vmatpush.bf16.msra.mxu0 %v5817
    %6870 = vmatpush.bf16.msra.mxu0 %v5810
    %6871 = vmatpush.bf16.msra.mxu0 %v5803
    %6872 = vmatpush.bf16.msra.mxu0 %v5796
    %6873 = vmatpush.bf16.msra.mxu0 %v5789
    %6874 = vmatpush.bf16.msra.mxu0 %v5782
    %6875 = vmatpush.bf16.msra.mxu0 %v5775
    %6876 = vmatmul.bf16.gmra.mxu0 %v3552
    %v6877 = vpop.f32.mrf.mxu0
    %v6878 = vadd.f32 %v6865, %v6877
    %v6879 = vpop.f32.mrf.mxu0
    %6880 = vdwg.mxu0
    %6881 = vmatpush.bf16.msra.mxu0 %v5880
    %6882 = vmatpush.bf16.msra.mxu0 %v5873
    %6883 = vmatpush.bf16.msra.mxu0 %v5866
    %6884 = vmatpush.bf16.msra.mxu0 %v5859
    %6885 = vmatpush.bf16.msra.mxu0 %v5852
    %6886 = vmatpush.bf16.msra.mxu0 %v5845
    %6887 = vmatpush.bf16.msra.mxu0 %v5838
    %6888 = vmatpush.bf16.msra.mxu0 %v5831
    %6889 = vmatmul.bf16.gmra.mxu0 %v3553
    %v6890 = vpop.f32.mrf.mxu0
    %v6891 = vadd.f32 %v6878, %v6890
    %v6892 = vpop.f32.mrf.mxu0
    %6893 = vdwg.mxu0
    %6894 = vmatpush.bf16.msra.mxu0 %v5936
    %6895 = vmatpush.bf16.msra.mxu0 %v5929
    %6896 = vmatpush.bf16.msra.mxu0 %v5922
    %6897 = vmatpush.bf16.msra.mxu0 %v5915
    %6898 = vmatpush.bf16.msra.mxu0 %v5908
    %6899 = vmatpush.bf16.msra.mxu0 %v5901
    %6900 = vmatpush.bf16.msra.mxu0 %v5894
    %6901 = vmatpush.bf16.msra.mxu0 %v5887
    %6902 = vmatmul.bf16.gmra.mxu0 %v3554
    %v6903 = vpop.f32.mrf.mxu0
    %v6904 = vadd.f32 %v6891, %v6903
    %v6905 = vpop.f32.mrf.mxu0
    %6906 = vdwg.mxu0
    %6907 = vmatpush.bf16.msra.mxu0 %v5545
    %6908 = vmatpush.bf16.msra.mxu0 %v5538
    %6909 = vmatpush.bf16.msra.mxu0 %v5531
    %6910 = vmatpush.bf16.msra.mxu0 %v5524
    %6911 = vmatpush.bf16.msra.mxu0 %v5517
    %6912 = vmatpush.bf16.msra.mxu0 %v5510
    %6913 = vmatpush.bf16.msra.mxu0 %v5503
    %6914 = vmatpush.bf16.msra.mxu0 %v5496
    %6915 = vmatmul.bf16.gmra.mxu0 %v3547
    %v6916 = vpop.f32.mrf.mxu0
    %v6917 = vadd.f32 %v4074, %v6916
    %v6918 = vpop.f32.mrf.mxu0
    %6919 = vdwg.mxu0
    %6920 = vmatpush.bf16.msra.mxu0 %v5601
    %6921 = vmatpush.bf16.msra.mxu0 %v5594
    %6922 = vmatpush.bf16.msra.mxu0 %v5587
    %6923 = vmatpush.bf16.msra.mxu0 %v5580
    %6924 = vmatpush.bf16.msra.mxu0 %v5573
    %6925 = vmatpush.bf16.msra.mxu0 %v5566
    %6926 = vmatpush.bf16.msra.mxu0 %v5559
    %6927 = vmatpush.bf16.msra.mxu0 %v5552
    %6928 = vmatmul.bf16.gmra.mxu0 %v3548
    %v6929 = vpop.f32.mrf.mxu0
    %v6930 = vadd.f32 %v6917, %v6929
    %v6931 = vpop.f32.mrf.mxu0
    %6932 = vdwg.mxu0
    %6933 = vmatpush.bf16.msra.mxu0 %v5657
    %6934 = vmatpush.bf16.msra.mxu0 %v5650
    %6935 = vmatpush.bf16.msra.mxu0 %v5643
    %6936 = vmatpush.bf16.msra.mxu0 %v5636
    %6937 = vmatpush.bf16.msra.mxu0 %v5629
    %6938 = vmatpush.bf16.msra.mxu0 %v5622
    %6939 = vmatpush.bf16.msra.mxu0 %v5615
    %6940 = vmatpush.bf16.msra.mxu0 %v5608
    %6941 = vmatmul.bf16.gmra.mxu0 %v3549
    %v6942 = vpop.f32.mrf.mxu0
    %v6943 = vadd.f32 %v6930, %v6942
    %v6944 = vpop.f32.mrf.mxu0
    %6945 = vdwg.mxu0
    %6946 = vmatpush.bf16.msra.mxu0 %v5713
    %6947 = vmatpush.bf16.msra.mxu0 %v5706
    %6948 = vmatpush.bf16.msra.mxu0 %v5699
    %6949 = vmatpush.bf16.msra.mxu0 %v5692
    %6950 = vmatpush.bf16.msra.mxu0 %v5685
    %6951 = vmatpush.bf16.msra.mxu0 %v5678
    %6952 = vmatpush.bf16.msra.mxu0 %v5671
    %6953 = vmatpush.bf16.msra.mxu0 %v5664
    %6954 = vmatmul.bf16.gmra.mxu0 %v3550
    %v6955 = vpop.f32.mrf.mxu0
    %v6956 = vadd.f32 %v6943, %v6955
    %v6957 = vpop.f32.mrf.mxu0
    %6958 = vdwg.mxu0
    %6959 = vmatpush.bf16.msra.mxu0 %v5769
    %6960 = vmatpush.bf16.msra.mxu0 %v5762
    %6961 = vmatpush.bf16.msra.mxu0 %v5755
    %6962 = vmatpush.bf16.msra.mxu0 %v5748
    %6963 = vmatpush.bf16.msra.mxu0 %v5741
    %6964 = vmatpush.bf16.msra.mxu0 %v5734
    %6965 = vmatpush.bf16.msra.mxu0 %v5727
    %6966 = vmatpush.bf16.msra.mxu0 %v5720
    %6967 = vmatmul.bf16.gmra.mxu0 %v3551
    %v6968 = vpop.f32.mrf.mxu0
    %v6969 = vadd.f32 %v6956, %v6968
    %v6970 = vpop.f32.mrf.mxu0
    %6971 = vdwg.mxu0
    %6972 = vmatpush.bf16.msra.mxu0 %v5825
    %6973 = vmatpush.bf16.msra.mxu0 %v5818
    %6974 = vmatpush.bf16.msra.mxu0 %v5811
    %6975 = vmatpush.bf16.msra.mxu0 %v5804
    %6976 = vmatpush.bf16.msra.mxu0 %v5797
    %6977 = vmatpush.bf16.msra.mxu0 %v5790
    %6978 = vmatpush.bf16.msra.mxu0 %v5783
    %6979 = vmatpush.bf16.msra.mxu0 %v5776
    %6980 = vmatmul.bf16.gmra.mxu0 %v3552
    %v6981 = vpop.f32.mrf.mxu0
    %v6982 = vadd.f32 %v6969, %v6981
    %v6983 = vpop.f32.mrf.mxu0
    %6984 = vdwg.mxu0
    %6985 = vmatpush.bf16.msra.mxu0 %v5881
    %6986 = vmatpush.bf16.msra.mxu0 %v5874
    %6987 = vmatpush.bf16.msra.mxu0 %v5867
    %6988 = vmatpush.bf16.msra.mxu0 %v5860
    %6989 = vmatpush.bf16.msra.mxu0 %v5853
    %6990 = vmatpush.bf16.msra.mxu0 %v5846
    %6991 = vmatpush.bf16.msra.mxu0 %v5839
    %6992 = vmatpush.bf16.msra.mxu0 %v5832
    %6993 = vmatmul.bf16.gmra.mxu0 %v3553
    %v6994 = vpop.f32.mrf.mxu0
    %v6995 = vadd.f32 %v6982, %v6994
    %v6996 = vpop.f32.mrf.mxu0
    %6997 = vdwg.mxu0
    %6998 = vmatpush.bf16.msra.mxu0 %v5937
    %6999 = vmatpush.bf16.msra.mxu0 %v5930
    %7000 = vmatpush.bf16.msra.mxu0 %v5923
    %7001 = vmatpush.bf16.msra.mxu0 %v5916
    %7002 = vmatpush.bf16.msra.mxu0 %v5909
    %7003 = vmatpush.bf16.msra.mxu0 %v5902
    %7004 = vmatpush.bf16.msra.mxu0 %v5895
    %7005 = vmatpush.bf16.msra.mxu0 %v5888
    %7006 = vmatmul.bf16.gmra.mxu0 %v3554
    %v7007 = vpop.f32.mrf.mxu0
    %v7008 = vadd.f32 %v6995, %v7007
    %v7009 = vpop.f32.mrf.mxu0
    %7010 = vdwg.mxu0
    %7011 = vmatpush.bf16.msra.mxu0 %v5546
    %7012 = vmatpush.bf16.msra.mxu0 %v5539
    %7013 = vmatpush.bf16.msra.mxu0 %v5532
    %7014 = vmatpush.bf16.msra.mxu0 %v5525
    %7015 = vmatpush.bf16.msra.mxu0 %v5518
    %7016 = vmatpush.bf16.msra.mxu0 %v5511
    %7017 = vmatpush.bf16.msra.mxu0 %v5504
    %7018 = vmatpush.bf16.msra.mxu0 %v5497
    %7019 = vmatmul.bf16.gmra.mxu0 %v3547
    %v7020 = vpop.f32.mrf.mxu0
    %v7021 = vadd.f32 %v4075, %v7020
    %v7022 = vpop.f32.mrf.mxu0
    %7023 = vdwg.mxu0
    %7024 = vmatpush.bf16.msra.mxu0 %v5602
    %7025 = vmatpush.bf16.msra.mxu0 %v5595
    %7026 = vmatpush.bf16.msra.mxu0 %v5588
    %7027 = vmatpush.bf16.msra.mxu0 %v5581
    %7028 = vmatpush.bf16.msra.mxu0 %v5574
    %7029 = vmatpush.bf16.msra.mxu0 %v5567
    %7030 = vmatpush.bf16.msra.mxu0 %v5560
    %7031 = vmatpush.bf16.msra.mxu0 %v5553
    %7032 = vmatmul.bf16.gmra.mxu0 %v3548
    %v7033 = vpop.f32.mrf.mxu0
    %v7034 = vadd.f32 %v7021, %v7033
    %v7035 = vpop.f32.mrf.mxu0
    %7036 = vdwg.mxu0
    %7037 = vmatpush.bf16.msra.mxu0 %v5658
    %7038 = vmatpush.bf16.msra.mxu0 %v5651
    %7039 = vmatpush.bf16.msra.mxu0 %v5644
    %7040 = vmatpush.bf16.msra.mxu0 %v5637
    %7041 = vmatpush.bf16.msra.mxu0 %v5630
    %7042 = vmatpush.bf16.msra.mxu0 %v5623
    %7043 = vmatpush.bf16.msra.mxu0 %v5616
    %7044 = vmatpush.bf16.msra.mxu0 %v5609
    %7045 = vmatmul.bf16.gmra.mxu0 %v3549
    %v7046 = vpop.f32.mrf.mxu0
    %v7047 = vadd.f32 %v7034, %v7046
    %v7048 = vpop.f32.mrf.mxu0
    %7049 = vdwg.mxu0
    %7050 = vmatpush.bf16.msra.mxu0 %v5714
    %7051 = vmatpush.bf16.msra.mxu0 %v5707
    %7052 = vmatpush.bf16.msra.mxu0 %v5700
    %7053 = vmatpush.bf16.msra.mxu0 %v5693
    %7054 = vmatpush.bf16.msra.mxu0 %v5686
    %7055 = vmatpush.bf16.msra.mxu0 %v5679
    %7056 = vmatpush.bf16.msra.mxu0 %v5672
    %7057 = vmatpush.bf16.msra.mxu0 %v5665
    %7058 = vmatmul.bf16.gmra.mxu0 %v3550
    %v7059 = vpop.f32.mrf.mxu0
    %v7060 = vadd.f32 %v7047, %v7059
    %v7061 = vpop.f32.mrf.mxu0
    %7062 = vdwg.mxu0
    %7063 = vmatpush.bf16.msra.mxu0 %v5770
    %7064 = vmatpush.bf16.msra.mxu0 %v5763
    %7065 = vmatpush.bf16.msra.mxu0 %v5756
    %7066 = vmatpush.bf16.msra.mxu0 %v5749
    %7067 = vmatpush.bf16.msra.mxu0 %v5742
    %7068 = vmatpush.bf16.msra.mxu0 %v5735
    %7069 = vmatpush.bf16.msra.mxu0 %v5728
    %7070 = vmatpush.bf16.msra.mxu0 %v5721
    %7071 = vmatmul.bf16.gmra.mxu0 %v3551
    %v7072 = vpop.f32.mrf.mxu0
    %v7073 = vadd.f32 %v7060, %v7072
    %v7074 = vpop.f32.mrf.mxu0
    %7075 = vdwg.mxu0
    %7076 = vmatpush.bf16.msra.mxu0 %v5826
    %7077 = vmatpush.bf16.msra.mxu0 %v5819
    %7078 = vmatpush.bf16.msra.mxu0 %v5812
    %7079 = vmatpush.bf16.msra.mxu0 %v5805
    %7080 = vmatpush.bf16.msra.mxu0 %v5798
    %7081 = vmatpush.bf16.msra.mxu0 %v5791
    %7082 = vmatpush.bf16.msra.mxu0 %v5784
    %7083 = vmatpush.bf16.msra.mxu0 %v5777
    %7084 = vmatmul.bf16.gmra.mxu0 %v3552
    %v7085 = vpop.f32.mrf.mxu0
    %v7086 = vadd.f32 %v7073, %v7085
    %v7087 = vpop.f32.mrf.mxu0
    %7088 = vdwg.mxu0
    %7089 = vmatpush.bf16.msra.mxu0 %v5882
    %7090 = vmatpush.bf16.msra.mxu0 %v5875
    %7091 = vmatpush.bf16.msra.mxu0 %v5868
    %7092 = vmatpush.bf16.msra.mxu0 %v5861
    %7093 = vmatpush.bf16.msra.mxu0 %v5854
    %7094 = vmatpush.bf16.msra.mxu0 %v5847
    %7095 = vmatpush.bf16.msra.mxu0 %v5840
    %7096 = vmatpush.bf16.msra.mxu0 %v5833
    %7097 = vmatmul.bf16.gmra.mxu0 %v3553
    %v7098 = vpop.f32.mrf.mxu0
    %v7099 = vadd.f32 %v7086, %v7098
    %v7100 = vpop.f32.mrf.mxu0
    %7101 = vdwg.mxu0
    %7102 = vmatpush.bf16.msra.mxu0 %v5938
    %7103 = vmatpush.bf16.msra.mxu0 %v5931
    %7104 = vmatpush.bf16.msra.mxu0 %v5924
    %7105 = vmatpush.bf16.msra.mxu0 %v5917
    %7106 = vmatpush.bf16.msra.mxu0 %v5910
    %7107 = vmatpush.bf16.msra.mxu0 %v5903
    %7108 = vmatpush.bf16.msra.mxu0 %v5896
    %7109 = vmatpush.bf16.msra.mxu0 %v5889
    %7110 = vmatmul.bf16.gmra.mxu0 %v3554
    %v7111 = vpop.f32.mrf.mxu0
    %v7112 = vadd.f32 %v7099, %v7111
    %v7113 = vpop.f32.mrf.mxu0
    %7114 = vdwg.mxu0
    %v7115 = vtanh.pop %v6488
    %v7116 = vtanh.pop %v6592
    %v7117 = vtanh.pop %v6696
    %v7118 = vtanh.pop %v6800
    %v7119 = vtanh.pop %v6904
    %v7120 = vtanh.pop %v7008
    %v7121 = vtanh.pop %v7112
    %v7129 = vrot.slane %v7116, 6
    %v7130 = vrot.slane %v7117, 4
    %v7131 = vrot.slane %v7118, 2
    %v7132 = vrot.slane %v7120, 6
    %v7133 = vrot.slane %v7121, 4
    %v7134 = vsel %vm359, %v7115, %v7129
    %vm7135 = vcmask 1045508
    %v7136 = vsel %vm7135, %v7130, %v7131
    %vm7137 = vcmask 1043456
    %v7138 = vsel %vm7137, %v7134, %v7136
    %v7139 = vsel %vm359, %v7119, %v7132
    %v7140 = vsel %vm7137, %v7139, %v7133
    %7143 = vst [vmem:[#allocation29] sm:$0xff] %v7138
    %7144 = vst [vmem:[#allocation29 + $0x8] sm:$0x3f] %v7140
    // Predicated region
    $region138: #{tpu_custom_call.1} parent=1 // pred_check
      _
    $region139: #{tpu_custom_call.1} parent=1 // pred_check_branch
      %7146 = sbr.rel (0) target = $region141
    $region140: #{tpu_custom_call.1} parent=1 // pred_region
      %7148 = vsyncadd [#allocation4], 0
      %s7150 = sshll.u32 [#allocation29], 4
      %s7151 = int_to_ptr.vmem [resolvable:$true] %s7150
      %s7152 = sshll.u32 %s17, 4
      %s7153 = int_to_ptr.hbm [resolvable:$true] %s7152
      %7155 = dma.vmem_to_hbm [thread:$0]  %s7151, 224, %s7153, [#allocation4]
    $region141: #{tpu_custom_call.1} parent=1 // pred_fallthru
      _
    // Predicated region
    $region142: #{tpu_custom_call.1} parent=1 // pred_check
      _
    $region143: #{tpu_custom_call.1} parent=1 // pred_check_branch
      %7157 = sbr.rel (0) target = $region145
    $region144: #{tpu_custom_call.1} parent=1 // pred_region
      %7159 = dma.done [#allocation4], 224
    $region145: #{tpu_custom_call.1} parent=1 // pred_fallthru
      _
    %7160 = vsyncpa [#allocation3], 1
    %7161 = vsyncpa [#allocation6], 1
    %7162 = vsyncpa [#allocation9], 1
    %7163 = vsyncpa [#allocation12], 1
    %7164 = vsyncpa [#allocation15], 1
    %7165 = vsyncpa [#allocation18], 1
    %7166 = vsyncpa [#allocation21], 1
    %7167 = vsyncpa [#allocation24], 1
    %7168 = vsyncpa [#allocation27], 1
    %7169 = vsyncpa [#allocation4], 1

</llo_original>
